<compile_context>
chip_gen: v6e
topology: v6e:2x2x1
jax: 0.10.0
libtpu: 0.0.40
codegen_flags: <defaults>
</compile_context>

<pallas_src>
import numpy as np
import jax
import jax.numpy as jnp
from jax.experimental import pallas as pl
from jax.experimental.pallas import tpu as pltpu

# ----------------------------- synthetic config -----------------------------
X_BOUND = (-8.0, 8.0, 1.0)
Y_BOUND = (-8.0, 8.0, 1.0)
Z_BOUND = (-10.0, 10.0, 20.0)
D_BOUND = (2.0, 6.0, 1.0)
IMG_H = IMG_W = 16
DOWNSAMPLE = 4
ENC_OUT_CH = 8
RECEPTIVE_FIELD = 3
N_FUTURE = 0
DISCOUNT = 0.9
N_CAMS = 4
N_CLASSES = 2      # vehicle segmentation classes
N_HDMAP = 2        # hd-map elements


def calculate_birds_eye_view_parameters(xb, yb, zb):
    res = jnp.array([xb[2], yb[2], zb[2]], jnp.float32)
    start = jnp.array([xb[0] + xb[2] / 2.0, yb[0] + yb[2] / 2.0, zb[0] + zb[2] / 2.0],
                      jnp.float32)
    dim = tuple(int(round((b[1] - b[0]) / b[2])) for b in (xb, yb, zb))
    return res, start, dim


# ============================= Pallas kernels ================================

# ---- kernel 1: fused 1x1 linear -> depth softmax -> lift -> BEV scatter -----
def _make_encode_scatter_kernel(C, D, Npix, n_cells):
    def kernel(xT_ref, wT_ref, b_ref, idx_ref, bev_ref, lift_ref, dlog_ref):
        # channel-major per-pixel linear: (C+D, Cin) @ (Cin, Npix) -> (C+D, Npix)
        yT = jnp.dot(wT_ref[...], xT_ref[0],
                     preferred_element_type=jnp.float32) + b_ref[...]
        featT = yT[:C, :]                          # (C, Npix)
        dlogT = yT[C:C + D, :]                     # (D, Npix) depth logits
        dlog_ref[0] = dlogT
        # depth softmax along the (small) sublane axis; divide on the EUP slot
        m = jnp.max(dlogT, axis=0, keepdims=True)
        e = jnp.exp(dlogT - m)
        prob = e * pl.reciprocal(jnp.sum(e, axis=0, keepdims=True), approx=True)
        # lift + scatter-add, chunked per depth slice (Npix-point slabs) so the
        # one-hot / iota live set stays well inside the 64-vreg file.
        cell_ids = jax.lax.broadcasted_iota(jnp.int32, (Npix, n_cells), 1)  # hoisted
        acc = jnp.zeros((C, n_cells), jnp.float32)
        for d in range(D):
            lifted_d = prob[d:d + 1, :] * featT                       # (C, Npix)
            lift_ref[0, d * C:(d + 1) * C, :] = lifted_d              # aligned store
            # TODO(synk): bf16 one-hot (+features) would feed the v6e/v7x MXU at
            # full rate; kept f32 so the scatter sum is exact.
            onehot = (cell_ids == idx_ref[0, d]).astype(jnp.float32)  # (Npix, cells)
            acc = acc + jnp.dot(lifted_d, onehot,
                                preferred_element_type=jnp.float32)
        bev_ref[...] = acc
    return kernel


def pallas_encode_lift_scatter(xT, wT, bvec, cell_idx, C, D, n_cells):
    """xT: (BS, Cin, Npix) channel-major pixels; wT: (C+D, Cin); bvec: (C+D, 1);
    cell_idx: (BS, D, Npix, 1) int32, -1 == masked.
    Returns bev (C, BS*n_cells) lane-dense, lift (BS, D*C, Npix), dlog (BS, D, Npix)."""
    BS, Cin, Npix = xT.shape
    bev, lift, dlog = pl.pallas_call(
        _make_encode_scatter_kernel(C, D, Npix, n_cells),
        grid=(BS,),
        in_specs=[pl.BlockSpec((1, Cin, Npix), lambda i: (i, 0, 0)),
                  pl.BlockSpec((C + D, Cin), lambda i: (0, 0)),
                  pl.BlockSpec((C + D, 1), lambda i: (0, 0)),
                  pl.BlockSpec((1, D, Npix, 1), lambda i: (i, 0, 0, 0))],
        out_specs=[pl.BlockSpec((C, n_cells), lambda i: (0, i)),
                   pl.BlockSpec((1, D * C, Npix), lambda i: (i, 0, 0)),
                   pl.BlockSpec((1, D, Npix), lambda i: (i, 0, 0))],
        out_shape=(jax.ShapeDtypeStruct((C, BS * n_cells), jnp.float32),
                   jax.ShapeDtypeStruct((BS, D * C, Npix), jnp.float32),
                   jax.ShapeDtypeStruct((BS, D, Npix), jnp.float32)),
        compiler_params=pltpu.CompilerParams(dimension_semantics=("parallel",)),
    )(xT.astype(jnp.float32), wT.astype(jnp.float32),
      bvec.astype(jnp.float32), cell_idx.astype(jnp.int32))
    return bev, lift, dlog


# ---- kernel 2: fused (warp+temporal) matmul + both decoder heads ------------
def _decode_kernel(bev_ref, g_ref, segw_ref, segb_ref, hdx_ref, hdw_ref, hdb_ref,
                   seg_ref, hd_ref):
    # bilinear warp + temporal fusion, pre-composed into one operator G
    fused = jnp.dot(bev_ref[...], g_ref[...], preferred_element_type=jnp.float32)
    seg_ref[...] = jnp.dot(segw_ref[...], fused,
                           preferred_element_type=jnp.float32) + segb_ref[...]
    hd_ref[...] = jnp.dot(hdw_ref[...], hdx_ref[...],
                          preferred_element_type=jnp.float32) + hdb_ref[...]


def pallas_warp_fuse_decode(bev_flat, G_bd, seg_wT, seg_b, hd_xt, hd_wT, hd_b):
    """bev_flat: (C, b*s*XY); G_bd: (b*s*XY, b*s*XY); seg_wT: (ncls, C);
    hd_xt: (K_hd, M_hd_padded).  Single block, no grid (tiny problem)."""
    C, M = bev_flat.shape
    n_cls = seg_wT.shape[0]
    n_hd = hd_wT.shape[0]
    M_hd = hd_xt.shape[1]
    return pl.pallas_call(
        _decode_kernel,
        out_shape=(jax.ShapeDtypeStruct((n_cls, M), jnp.float32),
                   jax.ShapeDtypeStruct((n_hd, M_hd), jnp.float32)),
    )(bev_flat.astype(jnp.float32), G_bd.astype(jnp.float32),
      seg_wT.astype(jnp.float32), seg_b.astype(jnp.float32),
      hd_xt.astype(jnp.float32), hd_wT.astype(jnp.float32),
      hd_b.astype(jnp.float32))


# =============================== XLA glue ====================================

def affine_grid(theta, H, W):
    # matches F.affine_grid(theta, (N, C, H, W), align_corners=False)
    xs = (jnp.arange(W, dtype=jnp.float32) * 2.0 + 1.0) / W - 1.0
    ys = (jnp.arange(H, dtype=jnp.float32) * 2.0 + 1.0) / H - 1.0
    gx, gy = jnp.meshgrid(xs, ys, indexing="xy")          # (H, W)
    base = jnp.stack([gx, gy, jnp.ones_like(gx)], -1)     # (H, W, 3)
    return jnp.einsum("hwk,nik->nhwi", base, theta)       # (N, H, W, 2)


def build_warp_matrix(affine_mats, H, W):
    """(Nt, 2, 3) -> dense (Nt, H*W, H*W) bilinear sampling matrix Wm with
    warped[t, :, o] = sum_i Wm[t, o, i] * x[t, :, i]; matches
    F.grid_sample(x, F.affine_grid(theta), 'bilinear', 'zeros', align_corners=False).
    TODO(synk): at a 200x200 BEV a banded/chunked form is needed instead of dense."""
    grid = affine_grid(affine_mats, H, W)                  # (Nt, H, W, 2)
    ix = ((grid[..., 0] + 1.0) * W - 1.0) / 2.0
    iy = ((grid[..., 1] + 1.0) * H - 1.0) / 2.0
    x0 = jnp.floor(ix); x1 = x0 + 1.0
    y0 = jnp.floor(iy); y1 = y0 + 1.0
    wx1 = ix - x0; wx0 = 1.0 - wx1
    wy1 = iy - y0; wy0 = 1.0 - wy1
    in_ids = jnp.arange(H * W, dtype=jnp.int32)

    def corner(xi, yi, wgt):
        valid = (xi >= 0) & (xi <= W - 1) & (yi >= 0) & (yi <= H - 1)
        xi_c = jnp.clip(xi, 0, W - 1).astype(jnp.int32)
        yi_c = jnp.clip(yi, 0, H - 1).astype(jnp.int32)
        idx = yi_c * W + xi_c                              # (Nt, H, W)
        oh = (idx[..., None] == in_ids).astype(jnp.float32)
        return oh * (wgt * valid.astype(jnp.float32))[..., None]

    Wm = (corner(x0, y0, wx0 * wy0) + corner(x1, y0, wx1 * wy0)
          + corner(x0, y1, wx0 * wy1) + corner(x1, y1, wx1 * wy1))
    return Wm.reshape(affine_mats.shape[0], H * W, H * W)


# ================================ STP3 =======================================

class STP3:
    def __init__(self, key):
        self.receptive_field = RECEPTIVE_FIELD
        self.n_future = N_FUTURE
        self.discount = DISCOUNT
        self.encoder_downsample = DOWNSAMPLE
        self.encoder_out_channels = ENC_OUT_CH

        res, start, dim = calculate_birds_eye_view_parameters(X_BOUND, Y_BOUND, Z_BOUND)
        self.bev_resolution = res
        self.bev_start_position = start
        self.bev_dimension = dim          # python ints (X, Y, Z)

        self.frustum = self.create_frustum()          # (D, dh, dw, 3)
        self.depth_channels = self.frustum.shape[0]

        # temporal coefficient matrix (matches the reference construction; the
        # double flip is a no-op for a symmetric matrix)
        rf = self.receptive_field
        idx = np.arange(rf)
        coef = (DISCOUNT ** np.abs(idx[:, None] - idx[None, :])).astype(np.float32)
        coef = np.flip(coef, (0, 1)).copy()
        self.temporal_coef = jnp.asarray(coef)

        # The reference temporal-fusion loop (including its broadcast of the add to
        # all time steps and the read-before-update of fused[:, t-i]) is linear in
        # `warped`; run it on the identity to obtain the (s, s) fusion matrix.
        T = np.eye(rf, dtype=np.float32)
        for t in range(1, rf):
            for i in range(1, t):
                c = coef[t, i] ** i
                T = T + c * T[t - i][None, :]     # add to ALL rows, read old value
            T[t, t] += 1.0                        # fused[:, t] += warped[:, t]
        # numerical verification against a direct emulation of the reference loop
        rng = np.random.RandomState(0)
        test = rng.randn(2, rf, 5).astype(np.float32)
        fused_ref = test.copy()
        for t in range(1, rf):
            for i in range(1, t):
                fused_ref = fused_ref + (coef[t, i] ** i) * fused_ref[:, t - i][:, None, :]
            fused_ref[:, t] = fused_ref[:, t] + test[:, t]
        fused_lin = np.einsum("ts,bsf->btf", T, test)
        assert np.allclose(fused_ref, fused_lin, atol=1e-5), \
            "temporal fusion linearization mismatch"
        self.temporal_fusion_matrix = jnp.asarray(T)

        D = self.depth_channels
        k = jax.random.split(key, 6)
        # TODO(synk): original Encoder is an EfficientNet and Decoder a multi-head CNN;
        # replaced here by deterministic per-pixel linear (1x1-conv) heads.
        self.enc_w = 0.5 * jax.random.normal(k[0], (3, ENC_OUT_CH + D), jnp.float32)
        self.enc_b = 0.1 * jax.random.normal(k[1], (ENC_OUT_CH + D,), jnp.float32)
        self.seg_w = 0.5 * jax.random.normal(k[2], (ENC_OUT_CH, N_CLASSES), jnp.float32)
        self.seg_b = 0.1 * jax.random.normal(k[3], (N_CLASSES,), jnp.float32)
        self.hd_w = 0.2 * jax.random.normal(k[4], (D * ENC_OUT_CH, N_HDMAP), jnp.float32)
        self.hd_b = 0.1 * jax.random.normal(k[5], (N_HDMAP,), jnp.float32)
        # channel-major (transposed) copies used by the kernels
        self.enc_wT = self.enc_w.T                              # (C+D, Cin)
        self.enc_bT = self.enc_b.reshape(ENC_OUT_CH + D, 1)
        self.seg_wT = self.seg_w.T                              # (N_CLASSES, C)
        self.seg_bT = self.seg_b.reshape(N_CLASSES, 1)
        self.hd_wT = self.hd_w.T                                # (N_HDMAP, D*C)
        self.hd_bT = self.hd_b.reshape(N_HDMAP, 1)

    # ----------------------------------------------------------------------
    def create_frustum(self):
        h, w = IMG_H, IMG_W
        dh, dw = h // self.encoder_downsample, w // self.encoder_downsample
        depth_grid = jnp.arange(D_BOUND[0], D_BOUND[1], D_BOUND[2], dtype=jnp.float32)
        D = depth_grid.shape[0]
        x_grid = jnp.linspace(0.0, w - 1, dw, dtype=jnp.float32)
        y_grid = jnp.linspace(0.0, h - 1, dh, dtype=jnp.float32)
        xg = jnp.broadcast_to(x_grid[None, None, :], (D, dh, dw))
        yg = jnp.broadcast_to(y_grid[None, :, None], (D, dh, dw))
        dg = jnp.broadcast_to(depth_grid[:, None, None], (D, dh, dw))
        return jnp.stack([xg, yg, dg], axis=-1)

    def get_cell_indices(self, intrinsics, extrinsics):
        """Camera geometry + BEV quantization -> int32 cell index per point.
        Kept in XLA: the geometry tensor is ~KB-sized and only its quantized index
        is consumed (by kernel 1), so a dedicated launch would be pure overhead."""
        rotation = extrinsics[..., :3, :3]
        translation = extrinsics[..., :3, 3]                      # (BS, n, 3)
        combined = rotation @ jnp.linalg.inv(intrinsics)          # (BS, n, 3, 3)
        fr = self.frustum                                         # (D, dh, dw, 3)
        pts = jnp.concatenate([fr[..., :2] * fr[..., 2:3], fr[..., 2:3]], axis=-1)
        geom = (jnp.einsum("bnij,dhwj->bndhwi", combined, pts)
                + translation[:, :, None, None, None, :])         # (BS, n, D, dh, dw, 3)
        g = ((geom - (self.bev_start_position - self.bev_resolution / 2.0))
             / self.bev_resolution).astype(jnp.int32)             # trunc == torch .long()
        X, Y, Z = self.bev_dimension
        gx, gy, gz = g[..., 0], g[..., 1], g[..., 2]
        valid = (gx >= 0) & (gx < X) & (gy >= 0) & (gy < Y) & (gz >= 0) & (gz < Z)
        cell = jnp.where(valid, gx * Y + gy, -1).astype(jnp.int32)  # (BS, n, D, dh, dw)
        BS, n, D, dh, dw = cell.shape
        # reorder to (BS, D, n*dh*dw, 1): per depth-chunk, pixels ordered (cam, h, w)
        return cell.transpose(0, 2, 1, 3, 4).reshape(BS, D, n * dh * dw, 1)

    def build_warp_fusion_operator(self, affine_mats, b, s, X, Y):
        """Pre-compose bilinear warp matrices with the temporal fusion matrix into a
        single (block-diagonal over b) operator applied as one matmul in kernel 2."""
        XY = X * Y
        Wm = build_warp_matrix(affine_mats.reshape(b * s, 2, 3), X, Y)
        Wm = Wm.reshape(b, s, XY, XY)
        # G[b, (t', i), (t, o)] = T[t, t'] * W[b, t', o, i]
        G = jnp.einsum("tp,bpoi->bpito", self.temporal_fusion_matrix, Wm)
        G = G.reshape(b, s * XY, s * XY)
        if b == 1:
            return G[0]
        return jax.scipy.linalg.block_diag(*[G[i] for i in range(b)])

    def calculate_birds_eye_view_features(self, x, intrinsics, extrinsics, affine_mats,
                                          depths):
        b, s, n, c, h, w = x.shape
        BS = b * s
        intr = intrinsics.reshape(BS, n, 3, 3)
        extr = extrinsics.reshape(BS, n, 4, 4)
        down = self.encoder_downsample
        dh, dw = h // down, w // down
        D, C = self.depth_channels, self.encoder_out_channels
        X, Y, _ = self.bev_dimension

        cell_idx = self.get_cell_indices(intr, extr)               # (BS, D, n*dh*dw, 1)

        # TODO(synk): mean-pool downsample stands in for the EfficientNet backbone.
        xd = x.reshape(BS, n, c, dh, down, dw, down).mean(axis=(4, 6))  # (BS, n, c, dh, dw)
        xT = xd.transpose(0, 2, 1, 3, 4).reshape(BS, c, n * dh * dw)    # channel-major

        # one launch: linear + depth softmax + lift + BEV scatter, lane-dense outputs
        bev_flat, lift, dlog = pallas_encode_lift_scatter(
            xT, self.enc_wT, self.enc_bT, cell_idx, C, D, X * Y)

        encoded_features = (lift.reshape(BS, D, C, n, dh, dw)
                            .transpose(0, 3, 1, 4, 5, 2))          # (BS, n, D, dh, dw, C)
        depth = (dlog.reshape(BS, D, n, dh, dw).transpose(0, 2, 1, 3, 4)
                 .reshape(b, s, n, D, dh, dw))                     # raw logits (as ref)

        # warp + temporal fusion are precomposed into one operator and executed
        # fused with the decoder heads (kernel 2).
        G_bd = self.build_warp_fusion_operator(affine_mats, b, s, X, Y)
        cam_front = None   # PLANNING disabled
        return bev_flat, G_bd, depth, encoded_features, cam_front

    def decoder(self, bev_flat, G_bd, hidden, target_point, command, b, s):
        X, Y, _ = self.bev_dimension
        # hd-map head input: mean over the 3 selected cameras at the last timestep
        hd_in = hidden[:, -1].mean(axis=1)                         # (b, D*C, dh, dw)
        bb, K, dh, dw = hd_in.shape
        hd_xt = hd_in.transpose(1, 0, 2, 3).reshape(K, bb * dh * dw)
        m_hd = hd_xt.shape[1]
        m_pad = ((m_hd + 127) // 128) * 128                        # lane-dense stores
        hd_xt = jnp.pad(hd_xt, ((0, 0), (0, m_pad - m_hd)))

        seg_flat, hd_flat = pallas_warp_fuse_decode(
            bev_flat, G_bd, self.seg_wT, self.seg_bT, hd_xt, self.hd_wT, self.hd_bT)

        seg = seg_flat.reshape(N_CLASSES, b, s, X, Y).transpose(1, 2, 0, 3, 4)
        hdmap = hd_flat[:, :m_hd].reshape(N_HDMAP, bb, dh, dw).transpose(1, 0, 2, 3)
        return {"segmentation": seg, "hdmap": hdmap}

    def forward(self, image, intrinsics, extrinsics, future_egomotion, affine_mats,
                future_inputs, lidar, is_train, depths, target_point=None, command=None):
        output = {}
        rf = self.receptive_field
        image = image[:, :rf]
        intrinsics = intrinsics[:, :rf]
        extrinsics = extrinsics[:, :rf]
        affine_mats = affine_mats[:, :rf]
        future_egomotion = future_egomotion[:, :rf]
        lidar = lidar[:, :rf]

        bev_flat, G_bd, depth, hidden, cam_front = self.calculate_birds_eye_view_features(
            image, intrinsics, extrinsics, affine_mats, depths)
        output.update({"depth_prediction": depth, "cam_front": cam_front})

        # INPUT_EGOPOSE / INPUT_LIDAR disabled; temporal model = identity.
        b, s = image.shape[0], image.shape[1]
        hidden = hidden.reshape(b, s, *hidden.shape[1:])          # (b, s, n, D, dh, dw, C)
        hidden = hidden.transpose(0, 1, 2, 4, 5, 3, 6)            # (b, s, n, dh, dw, D, C)
        bb, ss, nn, hh, ww, dd_, cc_ = hidden.shape
        hidden = hidden.reshape(bb, ss, nn, hh, ww, dd_ * cc_)
        hidden = hidden[:, :, jnp.array([0, 1, 3])].transpose(0, 1, 2, 5, 3, 4)

        # n_future == 0 -> decode directly; the warp + temporal fusion executes inside
        # the fused decode kernel via the precomposed operator G_bd.
        bev_output = self.decoder(bev_flat, G_bd, hidden, target_point, command, b, s)
        output.update(bev_output)
        return output


# ================================= main ======================================

if __name__ == "__main__":
    b, s, n = 1, RECEPTIVE_FIELD, N_CAMS
    key = jax.random.PRNGKey(0)
    kimg, _ = jax.random.split(key)

    image = jax.random.normal(kimg, (b, s, n, 3, IMG_H, IMG_W), jnp.float32)

    fx = fy = 8.0
    cx = cy = 8.0
    intr = jnp.array([[fx, 0.0, cx], [0.0, fy, cy], [0.0, 0.0, 1.0]], jnp.float32)
    intrinsics = jnp.broadcast_to(intr, (b, s, n, 3, 3))

    cam_trans = jnp.stack(
        [jnp.array([0.5 * i - 1.0, 0.25 * i, 0.0], jnp.float32) for i in range(n)])
    extrinsics = jnp.broadcast_to(jnp.eye(4, dtype=jnp.float32), (b, s, n, 4, 4))
    extrinsics = extrinsics.at[..., :3, 3].set(jnp.broadcast_to(cam_trans, (b, s, n, 3)))

    thetas = jnp.array([0.0, 0.05, -0.05], jnp.float32)
    txs = jnp.array([0.0, 0.1, -0.1], jnp.float32)
    aff = jnp.stack([jnp.stack([jnp.cos(thetas), -jnp.sin(thetas), txs], axis=-1),
                     jnp.stack([jnp.sin(thetas), jnp.cos(thetas), txs], axis=-1)], axis=1)
    affine_mats = jnp.broadcast_to(aff, (b, s, 2, 3))

    future_egomotion = jnp.zeros((b, s, 6), jnp.float32)
    lidar = jnp.zeros((b, s, 2, 16, 16), jnp.float32)

    model = STP3(jax.random.PRNGKey(42))

    @jax.jit
    def run(img, K, E, fe, am, li):
        return model.forward(img, K, E, fe, am, None, li, True, None)

    out = run(image, intrinsics, extrinsics, future_egomotion, affine_mats, lidar)

    for v in out.values():
        if v is not None:
            jax.block_until_ready(v)

    print("KERNEL_OK")
</pallas_src>

<mosaic_0001>
module attributes {stable_mosaic.version = 11 : i64} {
  func.func @kernel(%arg0: i32, %arg1: memref<1x3x64xf32, #tpu.memory_space<vmem>>, %arg2: memref<12x3xf32, #tpu.memory_space<vmem>>, %arg3: memref<12x1xf32, #tpu.memory_space<vmem>>, %arg4: memref<1x4x64x1xi32, #tpu.memory_space<vmem>>, %arg5: memref<8x256xf32, #tpu.memory_space<vmem>>, %arg6: memref<1x32x64xf32, #tpu.memory_space<vmem>>, %arg7: memref<1x4x64xf32, #tpu.memory_space<vmem>>) attributes {dimension_semantics = [#tpu.dimension_semantics<parallel>], iteration_bounds = array<i64: 3>, scalar_prefetch = 0 : i64, scratch_operands = 0 : i64, tpu.core_type = #tpu.core_type<tc>, window_params = [{transform_indices = @transform_0, window_bounds = array<i64: 1, 3, 64>}, {pipeline_mode = #tpu.pipeline_mode<synchronous>, transform_indices = @transform_1, window_bounds = array<i64: 12, 3>}, {pipeline_mode = #tpu.pipeline_mode<synchronous>, transform_indices = @transform_2, window_bounds = array<i64: 12, 1>}, {transform_indices = @transform_3, window_bounds = array<i64: 1, 4, 64, 1>}, {transform_indices = @transform_4, window_bounds = array<i64: 8, 256>}, {transform_indices = @transform_5, window_bounds = array<i64: 1, 32, 64>}, {transform_indices = @transform_6, window_bounds = array<i64: 1, 4, 64>}]} {
    %c0 = arith.constant 0 : index
    %c0_0 = arith.constant 0 : index
    %0 = vector.load %arg2[%c0, %c0_0] : memref<12x3xf32, #tpu.memory_space<vmem>>, vector<12x3xf32>
    %c0_1 = arith.constant 0 : index
    %c0_2 = arith.constant 0 : index
    %c0_3 = arith.constant 0 : index
    %1 = vector.load %arg1[%c0_1, %c0_2, %c0_3] : memref<1x3x64xf32, #tpu.memory_space<vmem>>, vector<1x3x64xf32>
    %2 = vector.shape_cast %1 : vector<1x3x64xf32> to vector<3x64xf32>
    %cst = arith.constant dense<0.000000e+00> : vector<12x64xf32>
    %3 = tpu.matmul %0, %2, %cst {dimension_numbers = #tpu.dot_dimension_numbers<[1], [0], [0], [1], [0, 0, 1, 1], [], []>} : vector<12x3xf32>, vector<3x64xf32>, vector<12x64xf32> -> vector<12x64xf32>
    %c0_4 = arith.constant 0 : index
    %c0_5 = arith.constant 0 : index
    %4 = vector.load %arg3[%c0_4, %c0_5] : memref<12x1xf32, #tpu.memory_space<vmem>>, vector<12x1xf32>
    %5 = vector.broadcast %4 : vector<12x1xf32> to vector<12x64xf32>
    %6 = arith.addf %3, %5 : vector<12x64xf32>
    %7 = vector.extract_strided_slice %6 {offsets = [0, 0], sizes = [8, 64], strides = [1, 1]} : vector<12x64xf32> to vector<8x64xf32>
    %8 = vector.extract_strided_slice %6 {offsets = [8, 0], sizes = [4, 64], strides = [1, 1]} : vector<12x64xf32> to vector<4x64xf32>
    %c0_6 = arith.constant 0 : index
    %c0_7 = arith.constant 0 : index
    %c0_8 = arith.constant 0 : index
    %9 = vector.load %arg7[%c0_6, %c0_7, %c0_8] : memref<1x4x64xf32, #tpu.memory_space<vmem>>, vector<1x4x64xf32>
    %10 = vector.shape_cast %9 : vector<1x4x64xf32> to vector<4x64xf32>
    %11 = vector.shape_cast %8 : vector<4x64xf32> to vector<1x4x64xf32>
    tpu.vector_store %arg7[%c0_6, %c0_7, %c0_8], %11 {strides = array<i32>} : memref<1x4x64xf32, #tpu.memory_space<vmem>>, vector<1x4x64xf32>,
    %cst_9 = arith.constant dense<0xFF800000> : vector<64xf32>
    %12 = vector.multi_reduction <maximumf>, %8, %cst_9 [0] : vector<4x64xf32> to vector<64xf32>
    %13 = vector.shape_cast %12 : vector<64xf32> to vector<1x64xf32>
    %14 = vector.broadcast %13 : vector<1x64xf32> to vector<4x64xf32>
    %15 = arith.subf %8, %14 : vector<4x64xf32>
    %16 = math.exp %15 : vector<4x64xf32>
    %cst_10 = arith.constant dense<0.000000e+00> : vector<64xf32>
    %17 = vector.multi_reduction <add>, %16, %cst_10 [0] : vector<4x64xf32> to vector<64xf32>
    %18 = vector.shape_cast %17 : vector<64xf32> to vector<1x64xf32>
    %19 = tpu.reciprocal %18 {approx = true} : vector<1x64xf32> -> vector<1x64xf32>
    %20 = vector.broadcast %19 : vector<1x64xf32> to vector<4x64xf32>
    %21 = arith.mulf %16, %20 : vector<4x64xf32>
    %22 = tpu.iota {dimensions = array<i32: 1>} : vector<64x256xi32>
    %cst_11 = arith.constant 0.000000e+00 : f32
    %23 = vector.broadcast %cst_11 : f32 to vector<8x256xf32>
    %24 = vector.extract_strided_slice %21 {offsets = [0, 0], sizes = [1, 64], strides = [1, 1]} : vector<4x64xf32> to vector<1x64xf32>
    %25 = vector.broadcast %24 : vector<1x64xf32> to vector<8x64xf32>
    %26 = arith.mulf %25, %7 : vector<8x64xf32>
    %c0_12 = arith.constant 0 : index
    %c0_13 = arith.constant 0 : index
    %c0_14 = arith.constant 0 : index
    %27 = vector.load %arg6[%c0_12, %c0_13, %c0_14] : memref<1x32x64xf32, #tpu.memory_space<vmem>>, vector<1x8x64xf32>
    %28 = vector.shape_cast %27 : vector<1x8x64xf32> to vector<8x64xf32>
    %29 = vector.shape_cast %26 : vector<8x64xf32> to vector<1x8x64xf32>
    tpu.vector_store %arg6[%c0_12, %c0_13, %c0_14], %29 {strides = array<i32>} : memref<1x32x64xf32, #tpu.memory_space<vmem>>, vector<1x8x64xf32>,
    %c0_15 = arith.constant 0 : index
    %c0_16 = arith.constant 0 : index
    %c0_17 = arith.constant 0 : index
    %c0_18 = arith.constant 0 : index
    %30 = vector.load %arg4[%c0_15, %c0_16, %c0_17, %c0_18] : memref<1x4x64x1xi32, #tpu.memory_space<vmem>>, vector<1x1x64x1xi32>
    %31 = vector.shape_cast %30 : vector<1x1x64x1xi32> to vector<64x1xi32>
    %32 = vector.broadcast %31 : vector<64x1xi32> to vector<64x256xi32>
    %33 = arith.cmpi eq, %22, %32 : vector<64x256xi32>
    %34 = arith.extui %33 : vector<64x256xi1> to vector<64x256xi32>
    %35 = arith.sitofp %34 : vector<64x256xi32> to vector<64x256xf32>
    %cst_19 = arith.constant dense<0.000000e+00> : vector<8x256xf32>
    %36 = tpu.matmul %26, %35, %cst_19 {dimension_numbers = #tpu.dot_dimension_numbers<[1], [0], [0], [1], [0, 0, 1, 1], [], []>} : vector<8x64xf32>, vector<64x256xf32>, vector<8x256xf32> -> vector<8x256xf32>
    %37 = arith.addf %23, %36 : vector<8x256xf32>
    %38 = vector.extract_strided_slice %21 {offsets = [1, 0], sizes = [1, 64], strides = [1, 1]} : vector<4x64xf32> to vector<1x64xf32>
    %39 = vector.broadcast %38 : vector<1x64xf32> to vector<8x64xf32>
    %40 = arith.mulf %39, %7 : vector<8x64xf32>
    %c0_20 = arith.constant 0 : index
    %c8 = arith.constant 8 : index
    %c0_21 = arith.constant 0 : index
    %41 = vector.load %arg6[%c0_20, %c8, %c0_21] : memref<1x32x64xf32, #tpu.memory_space<vmem>>, vector<1x8x64xf32>
    %42 = vector.shape_cast %41 : vector<1x8x64xf32> to vector<8x64xf32>
    %43 = vector.shape_cast %40 : vector<8x64xf32> to vector<1x8x64xf32>
    tpu.vector_store %arg6[%c0_20, %c8, %c0_21], %43 {strides = array<i32>} : memref<1x32x64xf32, #tpu.memory_space<vmem>>, vector<1x8x64xf32>,
    %c0_22 = arith.constant 0 : index
    %c1 = arith.constant 1 : index
    %c0_23 = arith.constant 0 : index
    %c0_24 = arith.constant 0 : index
    %44 = vector.load %arg4[%c0_22, %c1, %c0_23, %c0_24] : memref<1x4x64x1xi32, #tpu.memory_space<vmem>>, vector<1x1x64x1xi32>
    %45 = vector.shape_cast %44 : vector<1x1x64x1xi32> to vector<64x1xi32>
    %46 = vector.broadcast %45 : vector<64x1xi32> to vector<64x256xi32>
    %47 = arith.cmpi eq, %22, %46 : vector<64x256xi32>
    %48 = arith.extui %47 : vector<64x256xi1> to vector<64x256xi32>
    %49 = arith.sitofp %48 : vector<64x256xi32> to vector<64x256xf32>
    %cst_25 = arith.constant dense<0.000000e+00> : vector<8x256xf32>
    %50 = tpu.matmul %40, %49, %cst_25 {dimension_numbers = #tpu.dot_dimension_numbers<[1], [0], [0], [1], [0, 0, 1, 1], [], []>} : vector<8x64xf32>, vector<64x256xf32>, vector<8x256xf32> -> vector<8x256xf32>
    %51 = arith.addf %37, %50 : vector<8x256xf32>
    %52 = vector.extract_strided_slice %21 {offsets = [2, 0], sizes = [1, 64], strides = [1, 1]} : vector<4x64xf32> to vector<1x64xf32>
    %53 = vector.broadcast %52 : vector<1x64xf32> to vector<8x64xf32>
    %54 = arith.mulf %53, %7 : vector<8x64xf32>
    %c0_26 = arith.constant 0 : index
    %c16 = arith.constant 16 : index
    %c0_27 = arith.constant 0 : index
    %55 = vector.load %arg6[%c0_26, %c16, %c0_27] : memref<1x32x64xf32, #tpu.memory_space<vmem>>, vector<1x8x64xf32>
    %56 = vector.shape_cast %55 : vector<1x8x64xf32> to vector<8x64xf32>
    %57 = vector.shape_cast %54 : vector<8x64xf32> to vector<1x8x64xf32>
    tpu.vector_store %arg6[%c0_26, %c16, %c0_27], %57 {strides = array<i32>} : memref<1x32x64xf32, #tpu.memory_space<vmem>>, vector<1x8x64xf32>,
    %c0_28 = arith.constant 0 : index
    %c2 = arith.constant 2 : index
    %c0_29 = arith.constant 0 : index
    %c0_30 = arith.constant 0 : index
    %58 = vector.load %arg4[%c0_28, %c2, %c0_29, %c0_30] : memref<1x4x64x1xi32, #tpu.memory_space<vmem>>, vector<1x1x64x1xi32>
    %59 = vector.shape_cast %58 : vector<1x1x64x1xi32> to vector<64x1xi32>
    %60 = vector.broadcast %59 : vector<64x1xi32> to vector<64x256xi32>
    %61 = arith.cmpi eq, %22, %60 : vector<64x256xi32>
    %62 = arith.extui %61 : vector<64x256xi1> to vector<64x256xi32>
    %63 = arith.sitofp %62 : vector<64x256xi32> to vector<64x256xf32>
    %cst_31 = arith.constant dense<0.000000e+00> : vector<8x256xf32>
    %64 = tpu.matmul %54, %63, %cst_31 {dimension_numbers = #tpu.dot_dimension_numbers<[1], [0], [0], [1], [0, 0, 1, 1], [], []>} : vector<8x64xf32>, vector<64x256xf32>, vector<8x256xf32> -> vector<8x256xf32>
    %65 = arith.addf %51, %64 : vector<8x256xf32>
    %66 = vector.extract_strided_slice %21 {offsets = [3, 0], sizes = [1, 64], strides = [1, 1]} : vector<4x64xf32> to vector<1x64xf32>
    %67 = vector.broadcast %66 : vector<1x64xf32> to vector<8x64xf32>
    %68 = arith.mulf %67, %7 : vector<8x64xf32>
    %c0_32 = arith.constant 0 : index
    %c24 = arith.constant 24 : index
    %c0_33 = arith.constant 0 : index
    %69 = vector.load %arg6[%c0_32, %c24, %c0_33] : memref<1x32x64xf32, #tpu.memory_space<vmem>>, vector<1x8x64xf32>
    %70 = vector.shape_cast %69 : vector<1x8x64xf32> to vector<8x64xf32>
    %71 = vector.shape_cast %68 : vector<8x64xf32> to vector<1x8x64xf32>
    tpu.vector_store %arg6[%c0_32, %c24, %c0_33], %71 {strides = array<i32>} : memref<1x32x64xf32, #tpu.memory_space<vmem>>, vector<1x8x64xf32>,
    %c0_34 = arith.constant 0 : index
    %c3 = arith.constant 3 : index
    %c0_35 = arith.constant 0 : index
    %c0_36 = arith.constant 0 : index
    %72 = vector.load %arg4[%c0_34, %c3, %c0_35, %c0_36] : memref<1x4x64x1xi32, #tpu.memory_space<vmem>>, vector<1x1x64x1xi32>
    %73 = vector.shape_cast %72 : vector<1x1x64x1xi32> to vector<64x1xi32>
    %74 = vector.broadcast %73 : vector<64x1xi32> to vector<64x256xi32>
    %75 = arith.cmpi eq, %22, %74 : vector<64x256xi32>
    %76 = arith.extui %75 : vector<64x256xi1> to vector<64x256xi32>
    %77 = arith.sitofp %76 : vector<64x256xi32> to vector<64x256xf32>
    %cst_37 = arith.constant dense<0.000000e+00> : vector<8x256xf32>
    %78 = tpu.matmul %68, %77, %cst_37 {dimension_numbers = #tpu.dot_dimension_numbers<[1], [0], [0], [1], [0, 0, 1, 1], [], []>} : vector<8x64xf32>, vector<64x256xf32>, vector<8x256xf32> -> vector<8x256xf32>
    %79 = arith.addf %65, %78 : vector<8x256xf32>
    %c0_38 = arith.constant 0 : index
    %c0_39 = arith.constant 0 : index
    %80 = vector.load %arg5[%c0_38, %c0_39] : memref<8x256xf32, #tpu.memory_space<vmem>>, vector<8x256xf32>
    tpu.vector_store %arg5[%c0_38, %c0_39], %79 {strides = array<i32>} : memref<8x256xf32, #tpu.memory_space<vmem>>, vector<8x256xf32>,
    return
  }
  func.func @transform_0(%arg0: i32) -> (i32, i32, i32) {
    %c0_i32 = arith.constant 0 : i32
    %c0_i32_0 = arith.constant 0 : i32
    %c0_i32_1 = arith.constant 0 : i32
    return %arg0, %c0_i32, %c0_i32_0 : i32, i32, i32
  }
  func.func @transform_1(%arg0: i32) -> (i32, i32) {
    %c0_i32 = arith.constant 0 : i32
    %c0_i32_0 = arith.constant 0 : i32
    %c0_i32_1 = arith.constant 0 : i32
    return %c0_i32, %c0_i32_0 : i32, i32
  }
  func.func @transform_2(%arg0: i32) -> (i32, i32) {
    %c0_i32 = arith.constant 0 : i32
    %c0_i32_0 = arith.constant 0 : i32
    %c0_i32_1 = arith.constant 0 : i32
    return %c0_i32, %c0_i32_0 : i32, i32
  }
  func.func @transform_3(%arg0: i32) -> (i32, i32, i32, i32) {
    %c0_i32 = arith.constant 0 : i32
    %c0_i32_0 = arith.constant 0 : i32
    %c0_i32_1 = arith.constant 0 : i32
    %c0_i32_2 = arith.constant 0 : i32
    return %arg0, %c0_i32, %c0_i32_0, %c0_i32_1 : i32, i32, i32, i32
  }
  func.func @transform_4(%arg0: i32) -> (i32, i32) {
    %c0_i32 = arith.constant 0 : i32
    %c0_i32_0 = arith.constant 0 : i32
    return %c0_i32, %arg0 : i32, i32
  }
  func.func @transform_5(%arg0: i32) -> (i32, i32, i32) {
    %c0_i32 = arith.constant 0 : i32
    %c0_i32_0 = arith.constant 0 : i32
    %c0_i32_1 = arith.constant 0 : i32
    return %arg0, %c0_i32, %c0_i32_0 : i32, i32, i32
  }
  func.func @transform_6(%arg0: i32) -> (i32, i32, i32) {
    %c0_i32 = arith.constant 0 : i32
    %c0_i32_0 = arith.constant 0 : i32
    %c0_i32_1 = arith.constant 0 : i32
    return %arg0, %c0_i32, %c0_i32_0 : i32, i32, i32
  }
}

module attributes {stable_mosaic.version = 11 : i64} {
  func.func @_decode_kernel(%arg0: memref<8x768xf32, #tpu.memory_space<vmem>>, %arg1: memref<768x768xf32, #tpu.memory_space<vmem>>, %arg2: memref<2x8xf32, #tpu.memory_space<vmem>>, %arg3: memref<2x1xf32, #tpu.memory_space<vmem>>, %arg4: memref<32x128xf32, #tpu.memory_space<vmem>>, %arg5: memref<2x32xf32, #tpu.memory_space<vmem>>, %arg6: memref<2x1xf32, #tpu.memory_space<vmem>>, %arg7: memref<2x768xf32, #tpu.memory_space<vmem>>, %arg8: memref<2x128xf32, #tpu.memory_space<vmem>>) attributes {dimension_semantics = [], scalar_prefetch = 0 : i64, scratch_operands = 0 : i64, tpu.core_type = #tpu.core_type<tc>} {
    %c0 = arith.constant 0 : index
    %c0_0 = arith.constant 0 : index
    %0 = vector.load %arg0[%c0, %c0_0] : memref<8x768xf32, #tpu.memory_space<vmem>>, vector<8x768xf32>
    %c0_1 = arith.constant 0 : index
    %c0_2 = arith.constant 0 : index
    %1 = vector.load %arg1[%c0_1, %c0_2] : memref<768x768xf32, #tpu.memory_space<vmem>>, vector<768x768xf32>
    %cst = arith.constant dense<0.000000e+00> : vector<8x768xf32>
    %2 = tpu.matmul %0, %1, %cst {dimension_numbers = #tpu.dot_dimension_numbers<[1], [0], [0], [1], [0, 0, 1, 1], [], []>} : vector<8x768xf32>, vector<768x768xf32>, vector<8x768xf32> -> vector<8x768xf32>
    %c0_3 = arith.constant 0 : index
    %c0_4 = arith.constant 0 : index
    %3 = vector.load %arg2[%c0_3, %c0_4] : memref<2x8xf32, #tpu.memory_space<vmem>>, vector<2x8xf32>
    %cst_5 = arith.constant dense<0.000000e+00> : vector<2x768xf32>
    %4 = tpu.matmul %3, %2, %cst_5 {dimension_numbers = #tpu.dot_dimension_numbers<[1], [0], [0], [1], [0, 0, 1, 1], [], []>} : vector<2x8xf32>, vector<8x768xf32>, vector<2x768xf32> -> vector<2x768xf32>
    %c0_6 = arith.constant 0 : index
    %c0_7 = arith.constant 0 : index
    %5 = vector.load %arg3[%c0_6, %c0_7] : memref<2x1xf32, #tpu.memory_space<vmem>>, vector<2x1xf32>
    %6 = vector.broadcast %5 : vector<2x1xf32> to vector<2x768xf32>
    %7 = arith.addf %4, %6 : vector<2x768xf32>
    %c0_8 = arith.constant 0 : index
    %c0_9 = arith.constant 0 : index
    %8 = vector.load %arg7[%c0_8, %c0_9] : memref<2x768xf32, #tpu.memory_space<vmem>>, vector<2x768xf32>
    tpu.vector_store %arg7[%c0_8, %c0_9], %7 {strides = array<i32>} : memref<2x768xf32, #tpu.memory_space<vmem>>, vector<2x768xf32>,
    %c0_10 = arith.constant 0 : index
    %c0_11 = arith.constant 0 : index
    %9 = vector.load %arg5[%c0_10, %c0_11] : memref<2x32xf32, #tpu.memory_space<vmem>>, vector<2x32xf32>
    %c0_12 = arith.constant 0 : index
    %c0_13 = arith.constant 0 : index
    %10 = vector.load %arg4[%c0_12, %c0_13] : memref<32x128xf32, #tpu.memory_space<vmem>>, vector<32x128xf32>
    %cst_14 = arith.constant dense<0.000000e+00> : vector<2x128xf32>
    %11 = tpu.matmul %9, %10, %cst_14 {dimension_numbers = #tpu.dot_dimension_numbers<[1], [0], [0], [1], [0, 0, 1, 1], [], []>} : vector<2x32xf32>, vector<32x128xf32>, vector<2x128xf32> -> vector<2x128xf32>
    %c0_15 = arith.constant 0 : index
    %c0_16 = arith.constant 0 : index
    %12 = vector.load %arg6[%c0_15, %c0_16] : memref<2x1xf32, #tpu.memory_space<vmem>>, vector<2x1xf32>
    %13 = vector.broadcast %12 : vector<2x1xf32> to vector<2x128xf32>
    %14 = arith.addf %11, %13 : vector<2x128xf32>
    %c0_17 = arith.constant 0 : index
    %c0_18 = arith.constant 0 : index
    %15 = vector.load %arg8[%c0_17, %c0_18] : memref<2x128xf32, #tpu.memory_space<vmem>>, vector<2x128xf32>
    tpu.vector_store %arg8[%c0_17, %c0_18], %14 {strides = array<i32>} : memref<2x128xf32, #tpu.memory_space<vmem>>, vector<2x128xf32>,
    return
  }
}

</mosaic_0001>

<llo_original>
// kernel: custom-call.11
$region0: #{custom-call.11}
  %s0 = inlined_call_operand.vmem [shape: f32[3,4,3,3], index: 0, kind: input, shape index: {}]
  %s1 = inlined_call_operand.vmem [shape: f32[3,4,3,3], index: 1, kind: output, shape index: {0}]
  %s2 = inlined_call_operand.hbm [shape: s32[3,4,3], index: 2, kind: output, shape index: {1}]
  %s3 = inlined_call_operand.vmem [shape: s32[3,4,3], index: 3, kind: output, shape index: {2}]
  %4 = xla_tuple %s1, %s2, %s3
  $region1: #{custom-call.11} parent=0
    #allocation0 [shape = 'u8[4096]{0}', space=vmem, size = 0x1000, scoped, tag = 'operand span for operand 0']
    #allocation1 [shape = 'u8[4096]{0}', space=vmem, size = 0x1000, scoped, tag = 'packed  for operand 0']
    #allocation2 [shape = 'u8[4096]{0}', space=vmem, size = 0x1000, scoped, tag = 'operand span for operand 1']
    #allocation3 [shape = 'u8[4096]{0}', space=vmem, size = 0x1000, scoped, tag = 'packed  for operand 1']
    #allocation4 [shape = 'u8[4096]{0}', space=vmem, size = 0x1000, scoped, tag = 'operand span for operand 2']
    #allocation5 [shape = 'u8[4096]{0}', space=vmem, size = 0x1000, scoped, tag = 'packed  for operand 2']
    #allocation6 [shape = 's32[2]{0}', space=sflag, size = 0x8, scoped, tag = 'scoped memory for custom-call.11']
    #allocation7 [shape = 'u8[4096]{0}', space=vmem, size = 0x1000, scoped, tag = 'operand span for operand 3']
    #allocation8 [shape = 'u8[4096]{0}', space=vmem, size = 0x1000, scoped, tag = 'packed  for operand 3']
    %5 = vsyncpa [#allocation6], 0
    %s6 = scalar_lea.sflag [#allocation6], 1
    %7 = vsyncpa %s6, 0
    loop: start=0, step=1, limit=14
    $region2: #{custom-call.11} parent=1 // loop_pre_header
      _
    $region3: #{custom-call.11} parent=1 // loop_header
      %s9 = sphi 0, %s13
      %p10 = scmp.ge.s32.totalorder %s9, 14
      %s16 = sphi 0, %s28
      %s17 = sphi 0, %s24
      %s18 = sphi 0, %s16
      %s19 = sphi 0, %s17
      %s20 = sphi 0, %s18
      %s21 = sphi 0, %s19
      %s35 = sphi 0, %s37
      %s38 = sphi 0, %s35
      %s39 = sphi 0, %s38
      %s55 = sphi 0, %s39
      %s65 = sphi 0, %s67
      %s68 = sphi 0, %s65
      %s69 = sphi 0, %s68
      %s85 = sphi 0, %s69
    $region4: #{custom-call.11} parent=1 // loop_header_branch
      %12 = sbr.rel (%p10) target = $region8
    $region5: #{custom-call.11} parent=1 // loop_body
      %s14 = ssub.s32 %s9, 1
      %s15 = ssub.s32 %s9, 2
      %s22 = sadd.s32 1, %s17
      %p23 = scmp.ge.s32.totalorder %s22, 4
      %s24 = scalar_select %p23, 0, %s22
      %s25 = sadd.s32 1, %s16
      %s26 = scalar_select %p23, %s25, %s16
      %p27 = scmp.ge.s32.totalorder %s26, 3
      %s28 = scalar_select %p27, 0, %s26
      %s29 = sshrl.u32 %s17, 3
      %s30 = sshrl.u32 %s24, 3
      %s31 = ssub.s32 %s16, %s28
      %s32 = ssub.s32 %s29, %s30
      %s33 = sor.u32 %s31, %s32
      %p34 = scmp.eq.s32.totalorder %s33, 0
      %s36 = sadd.s32 %s35, 1
      %s37 = scalar_select %p34, %s35, %s36
      %p40 = pneg %p34
      %p41 = scmp.eq.s32.totalorder %s9, 11
      %p42 = por %p40, %p41
      %p43 = scmp.ne.s32.totalorder %s35, %s38
      %p44 = scmp.eq.s32.totalorder %s9, 0
      %p45 = por %p43, %p44
      %p46 = scmp.ne.s32.totalorder %s35, %s38
      %p47 = scmp.eq.s32.totalorder %s14, 11
      %p48 = por %p46, %p47
      %p49 = scmp.ne.s32.totalorder %s38, %s39
      %p50 = scmp.eq.s32.totalorder %s14, 0
      %p51 = por %p49, %p50
      %p52 = scmp.ne.s32.totalorder %s38, %s39
      %p53 = scmp.eq.s32.totalorder %s15, 11
      %p54 = por %p52, %p53
      %p56 = scmp.ne.s32.totalorder %s39, %s55
      %p57 = scmp.eq.s32.totalorder %s15, 0
      %p58 = por %p56, %p57
      %s59 = sshrl.u32 %s17, 3
      %s60 = sshrl.u32 %s24, 3
      %s61 = ssub.s32 %s16, %s28
      %s62 = ssub.s32 %s59, %s60
      %s63 = sor.u32 %s61, %s62
      %p64 = scmp.eq.s32.totalorder %s63, 0
      %s66 = sadd.s32 %s65, 1
      %s67 = scalar_select %p64, %s65, %s66
      %p70 = pneg %p64
      %p71 = scmp.eq.s32.totalorder %s9, 11
      %p72 = por %p70, %p71
      %p73 = scmp.ne.s32.totalorder %s65, %s68
      %p74 = scmp.eq.s32.totalorder %s9, 0
      %p75 = por %p73, %p74
      %p76 = scmp.ne.s32.totalorder %s65, %s68
      %p77 = scmp.eq.s32.totalorder %s14, 11
      %p78 = por %p76, %p77
      %p79 = scmp.ne.s32.totalorder %s68, %s69
      %p80 = scmp.eq.s32.totalorder %s14, 0
      %p81 = por %p79, %p80
      %p82 = scmp.ne.s32.totalorder %s68, %s69
      %p83 = scmp.eq.s32.totalorder %s15, 11
      %p84 = por %p82, %p83
      %p86 = scmp.ne.s32.totalorder %s69, %s85
      %p87 = scmp.eq.s32.totalorder %s15, 0
      %p88 = por %p86, %p87
      %p89 = scmp.le.s32.totalorder 1, %s9
      %p90 = scmp.lt.s32.totalorder %s9, 13
      %p91 = pnand %p89, %p90
      %p92 = pneg %p91
      // Predicated region
      $region9: #{custom-call.11} parent=5 // pred_check
        _
      $region10: #{custom-call.11} parent=5 // pred_check_branch
        %94 = sbr.rel (%p91) target = $region12
      $region11: #{custom-call.11} parent=5 // pred_region
        %s95 = ssub.s32 %s9, 1
      $region12: #{custom-call.11} parent=5 // pred_fallthru
        _
      %p96 = scmp.lt.s32.totalorder %s9, 12
      // Predicated region
      $region13: #{custom-call.11} parent=5 // pred_check
        %p97 = pneg %p96
      $region14: #{custom-call.11} parent=5 // pred_check_branch
        %99 = sbr.rel (%p97) target = $region16
      $region15: #{custom-call.11} parent=5 // pred_region
        %s100 = sand.u32 %s9, 1
        %s101 = sand.u32 %s9, 1
        %s102 = smul.addr %s101, 4
        %s103 = scalar_lea.vmem [#allocation1], %s102
        %s104 = smul.addr %s16, 4
        %s105 = sadd.s32 %s17, %s104
        %s106 = smul.addr %s105, 4
        %s107 = scalar_lea.vmem %s0, %s106
        // Predicated region
        $region17: #{custom-call.11} parent=15 // pred_check
          _
        $region18: #{custom-call.11} parent=15 // pred_check_branch
          %109 = sbr.rel (0) target = $region20
        $region19: #{custom-call.11} parent=15 // pred_region
          // Predicated region
          $region21: #{custom-call.11} parent=19 // pred_check
            _
          $region22: #{custom-call.11} parent=19 // pred_check_branch
            %111 = sbr.rel target = $region24
          $region23: #{custom-call.11} parent=19 // pred_region
            // Predicated region
            $region36: #{custom-call.11} parent=23 // pred_check
              _
            $region37: #{custom-call.11} parent=23 // pred_check_branch
              %127 = sbr.rel (0) target = $region39
            $region38: #{custom-call.11} parent=23 // pred_region
              %s129 = ssub.s32 16, 1
              loop: start=0, step=1, limit=1
              $region40: #{custom-call.11} parent=38 // loop_pre_header
                _
              $region41: #{custom-call.11} parent=38 // loop_header
                %s131 = sphi 0, %s135
                %p132 = scmp.ge.s32.totalorder %s131, 1
                %s136 = sphi %s107, %s107
                %s137 = sphi %s103, %s103
              $region42: #{custom-call.11} parent=38 // loop_header_branch
                %134 = sbr.rel (%p132) target = $region46
              $region43: #{custom-call.11} parent=38 // loop_body
                %v138 = vld [vmem:[%s136] sm:%s129]
                %139 = vst [vmem:[%s137] sm:%s129] %v138
              $region44: #{custom-call.11} parent=38 // loop_footer
                %s135 = sadd.s32 1, %s131
              $region45: #{custom-call.11} parent=38 // loop_footer_branch
                %130 = sbr.rel target = $region41
              $region46: #{custom-call.11} parent=38 // loop_exit
                _
            $region39: #{custom-call.11} parent=23 // pred_fallthru
              _
          $region24: #{custom-call.11} parent=19 // pred_fallthru
            _
          // Predicated region
          $region25: #{custom-call.11} parent=19 // pred_check
            _
          $region26: #{custom-call.11} parent=19 // pred_check_branch
            %113 = sbr.rel (0) target = $region28
          $region27: #{custom-call.11} parent=19 // pred_region
            %s115 = ssub.s32 16, 1
            loop: start=0, step=1, limit=1
            $region29: #{custom-call.11} parent=27 // loop_pre_header
              _
            $region30: #{custom-call.11} parent=27 // loop_header
              %s117 = sphi 0, %s121
              %p118 = scmp.ge.s32.totalorder %s117, 1
              %s122 = sphi %s107, %s107
              %s123 = sphi %s103, %s103
            $region31: #{custom-call.11} parent=27 // loop_header_branch
              %120 = sbr.rel (%p118) target = $region35
            $region32: #{custom-call.11} parent=27 // loop_body
              %v124 = vld [vmem:[%s122] sm:%s115]
              %125 = vst [vmem:[%s123] sm:%s115] %v124
            $region33: #{custom-call.11} parent=27 // loop_footer
              %s121 = sadd.s32 1, %s117
            $region34: #{custom-call.11} parent=27 // loop_footer_branch
              %116 = sbr.rel target = $region30
            $region35: #{custom-call.11} parent=27 // loop_exit
              _
          $region28: #{custom-call.11} parent=19 // pred_fallthru
            _
        $region20: #{custom-call.11} parent=15 // pred_fallthru
          _
        %140 = vnop
      $region16: #{custom-call.11} parent=5 // pred_fallthru
        _
      %p141 = scmp.le.s32.totalorder 1, %s9
      %p142 = scmp.lt.s32.totalorder %s9, 13
      %p143 = pnand %p141, %p142
      %p144 = pneg %p143
      // Predicated region
      $region47: #{custom-call.11} parent=5 // pred_check
        _
      $region48: #{custom-call.11} parent=5 // pred_check_branch
        %146 = sbr.rel (%p143) target = $region50
      $region49: #{custom-call.11} parent=5 // pred_region
        #allocation9 [shape = 's32[3,128]{1,0}', space=vmem, size = 0x1000, scoped, tag = 'scratch for permutations']
        %s147 = ssub.s32 %s9, 1
        %s148 = sand.u32 %s14, 1
        %s149 = sand.u32 %s14, 1
        %s150 = smul.addr %s149, 4
        %s151 = scalar_lea.vmem [#allocation1], %s150
        %s152 = sand.u32 %s14, 1
        %s153 = sand.u32 %s14, 1
        %s154 = smul.addr %s153, 4
        %s155 = scalar_lea.vmem [#allocation1], %s154
        %s156 = sand.u32 %s14, 1
        %s157 = sand.u32 %s14, 1
        %s158 = smul.addr %s157, 4
        %s159 = scalar_lea.vmem [#allocation3], %s158
        %p160 = pneg %p51
        %p161 = pneg %p48
        %s162 = sand.u32 %s38, 1
        %s163 = scalar_lea.sflag [#allocation6], %s162
        %s164 = sand.u32 %s38, 1
        %s165 = smul.addr %s164, 4
        %s166 = scalar_lea.vmem [#allocation5], %s165
        %p167 = pneg %p81
        %p168 = pneg %p78
        %s169 = sand.u32 %s68, 1
        %s170 = sand.u32 %s68, 1
        %s171 = smul.addr %s170, 4
        %s172 = scalar_lea.vmem [#allocation8], %s171
        %s174 = sshll.u32 1, 4
        %s175 = ssub.s32 %s174, 1
        %v176 = vld [vmem:[%s155] sm:%s175]
        %177 = vst [vmem:[#allocation0] sm:%s175] %v176
        %s178 = sshrl.u32 %s19, 3
        %s179 = sshrl.u32 %s19, 3
        %v180 = vld [vmem:[#allocation0] sm:$0xff]
        %181 = vst [vmem:[#allocation2] sm:$0xff] %v180
        %s182 = sand.u32 %s19, 7
        %s183 = scalar_lea.vmem [#allocation4], %s182
        %s184 = sand.u32 %s19, 7
        %s185 = scalar_lea.vmem [#allocation7], %s184
        %186 = vst [vmem:[%s183] sm:$0x1] 0
        %v187 = vlaneseq
        %v188 = vshrl.u32 %v187, 7
        %v189 = vmov %v188
        %191 = vst [vmem:[#allocation9] sm:$0xff] %v189
        loop: start=0, step=1, limit=3
        $region52: #{custom-call.11} parent=49 // loop_pre_header
          _
        $region53: #{custom-call.11} parent=49 // loop_header
          %s193 = sphi 0, %s197
          %p194 = scmp.ge.s32.totalorder %s193, 3
        $region54: #{custom-call.11} parent=49 // loop_header_branch
          %196 = sbr.rel (%p194) target = $region58
        $region55: #{custom-call.11} parent=49 // loop_body
          %v198 = vstv %s193
          %v199 = vlaneseq
          %v200 = vshrl.u32 %v199, 7
          %v201 = vmov %v200
          %v202 = vld [vmem:[#allocation2] sm:$0xff]
          %v203 = vand.u32 2147483647, %v202
          %v205 = vstv %s193
          %vm206 = vcmp.ge.s32.totalorder %v201, %v205
          %vm207 = vcmp.lt.s32.totalorder %v201, 3
          %vm208 = vmand %vm206, %vm207
          %vm209 = vcmp.lt.f32.partialorder -inf, %v203
          %vm210 = vmand %vm208, %vm209
          %v211 = vsel %vm210, %v201, %v198
          %v212 = vsel %vm210, %v203, -inf
          %v213 = vrot.slane %v212, 1
          %v214 = vrot.slane %v211, 1
          %vm215 = vcmp.ge.f32.partialorder %v213, %v212
          %v216 = vsel %vm215, %v213, %v212
          %v217 = vsel %vm215, %v214, %v211
          %v218 = vrot.slane %v213, 1
          %v219 = vrot.slane %v214, 1
          %vm220 = vcmp.ge.f32.partialorder %v218, %v216
          %v221 = vsel %vm220, %v218, %v216
          %v222 = vsel %vm220, %v219, %v217
          %v223 = vrot.slane %v218, 1
          %v224 = vrot.slane %v219, 1
          %vm225 = vcmp.ge.f32.partialorder %v223, %v221
          %v226 = vsel %vm225, %v223, %v221
          %v227 = vsel %vm225, %v224, %v222
          %v228 = vrot.slane %v223, 1
          %v229 = vrot.slane %v224, 1
          %vm230 = vcmp.ge.f32.partialorder %v228, %v226
          %v231 = vsel %vm230, %v228, %v226
          %v232 = vsel %vm230, %v229, %v227
          %v233 = vrot.slane %v228, 1
          %v234 = vrot.slane %v229, 1
          %vm235 = vcmp.ge.f32.partialorder %v233, %v231
          %v236 = vsel %vm235, %v233, %v231
          %v237 = vsel %vm235, %v234, %v232
          %v238 = vrot.slane %v233, 1
          %v239 = vrot.slane %v234, 1
          %vm240 = vcmp.ge.f32.partialorder %v238, %v236
          %v241 = vsel %vm240, %v238, %v236
          %v242 = vsel %vm240, %v239, %v237
          %v243 = vrot.slane %v238, 1
          %v244 = vrot.slane %v239, 1
          %vm245 = vcmp.ge.f32.partialorder %v243, %v241
          %v246 = vsel %vm245, %v243, %v241
          %v247 = vsel %vm245, %v244, %v242
          %s248 = ssub.s32 128, %s193
          %249 = vrot.lane.b32.xlu0 %v247, %s248
          %v250 = vpop.permute.xlu0 %249
          %s251 = vtos %v250
          %v252 = vstv %s193
          %v253 = vlaneseq
          %v254 = vand.u32 %v253, 127
          %vm255 = vcmp.eq.s32.totalorder %v254, %v252
          %v256 = vstv %s251
          %v257 = vld [vmem:[%s183] ss:$0 sm:$0xff]
          %v258 = vsel %vm255, %v256, %v257
          %259 = vst [vmem:[%s183] sm:$0x1] %v258
          %s260 = scalar_lea.vmem [#allocation2], %s193
          %s261 = scalar_lea.vmem [#allocation2], %s251
          %v262 = vld [vmem:[%s260] ss:$0 sm:$0xff]
          %v263 = vld [vmem:[%s261] ss:$0 sm:$0xff]
          %264 = vst [vmem:[%s261] sm:$0x1] %v262
          %265 = vst [vmem:[%s260] sm:$0x1] %v263
          %s266 = scalar_lea.vmem [#allocation9], %s193
          %s267 = scalar_lea.vmem [#allocation9], %s251
          %v268 = vld [vmem:[%s266] ss:$0 sm:$0xff]
          %v269 = vld [vmem:[%s267] ss:$0 sm:$0xff]
          %270 = vst [vmem:[%s267] sm:$0x1] %v268
          %271 = vst [vmem:[%s266] sm:$0x1] %v269
          %vm272 = vcmp.ne.f32.partialorder %v263, 0.0
          %vm273 = vmand %vm255, %vm272
          %v274 = vsel %vm273, %v263, 1.0
          %v275 = vlaneseq
          %v276 = vand.u32 %v275, 127
          %v277 = vstv %s193
          %vm278 = vcmp.gt.s32.totalorder %v276, %v277
          %v279 = vsel %vm278, %v263, 0.0
          %v280 = vlaneseq
          %v281 = vshrl.u32 %v280, 7
          %v282 = vmov %v281
          %v283 = vld [vmem:[#allocation2] sm:$0xff]
          %v285 = vstv %s193
          %vm286 = vcmp.gt.s32.totalorder %v282, %v285
          %v287 = vsel %vm286, %v274, 1.0
          %v288 = vrcp.pop %v287
          %v289 = vmul.f32 %v283, %v288
          %vm290 = vmand %vm286, %vm255
          %v291 = vsel %vm290, %v289, 0.0
          %292 = vadd.xlane.f32.xlu0 %v291
          %v293 = vpop.xlane.xlu0 %292
          %v294 = vmul.f32 %v293, %v279
          %v295 = vsub.f32 %v289, %v294
          %296 = vst [vmem:[#allocation2] sm:$0xff] %v295
        $region56: #{custom-call.11} parent=49 // loop_footer
          %s197 = sadd.s32 1, %s193
        $region57: #{custom-call.11} parent=49 // loop_footer_branch
          %192 = sbr.rel target = $region53
        $region58: #{custom-call.11} parent=49 // loop_exit
          _
        %v297 = vld [vmem:[#allocation9] sm:$0xff]
        %s298 = scalar_lea.vmem [#allocation9], 8
        %s299 = scalar_lea.vmem [#allocation9], 16
        %s300 = scalar_lea.vmem [#allocation9], 24
        %s301 = scalar_lea.vmem [#allocation9], 32
        %s302 = scalar_lea.vmem [#allocation9], 40
        %s303 = scalar_lea.vmem [#allocation9], 48
        %s304 = scalar_lea.vmem [#allocation9], 56
        %s305 = scalar_lea.vmem [#allocation9], 64
        %s306 = scalar_lea.vmem [#allocation9], 72
        %s307 = scalar_lea.vmem [#allocation9], 80
        %s308 = scalar_lea.vmem [#allocation9], 88
        %s309 = scalar_lea.vmem [#allocation9], 96
        %s310 = scalar_lea.vmem [#allocation9], 104
        %s311 = scalar_lea.vmem [#allocation9], 112
        %s312 = scalar_lea.vmem [#allocation9], 120
        %313 = vxpose.xlu0.b32.start [1/16] %v297, 128
        %314 = vxpose.xlu0.b32.cont [2/16] 0, 128
        %315 = vxpose.xlu0.b32.cont [3/16] 0, 128
        %316 = vxpose.xlu0.b32.cont [4/16] 0, 128
        %317 = vxpose.xlu0.b32.cont [5/16] 0, 128
        %318 = vxpose.xlu0.b32.cont [6/16] 0, 128
        %319 = vxpose.xlu0.b32.cont [7/16] 0, 128
        %320 = vxpose.xlu0.b32.cont [8/16] 0, 128
        %321 = vxpose.xlu0.b32.cont [9/16] 0, 128
        %322 = vxpose.xlu0.b32.cont [10/16] 0, 128
        %323 = vxpose.xlu0.b32.cont [11/16] 0, 128
        %324 = vxpose.xlu0.b32.cont [12/16] 0, 128
        %325 = vxpose.xlu0.b32.cont [13/16] 0, 128
        %326 = vxpose.xlu0.b32.cont [14/16] 0, 128
        %327 = vxpose.xlu0.b32.cont [15/16] 0, 128
        %328 = vxpose.xlu0.b32.end [16/16] 0, 128
        %v329 = vpop.trf.xlu0
        %v330 = vpop.trf.xlu0
        %v331 = vpop.trf.xlu0
        %v332 = vpop.trf.xlu0
        %v333 = vpop.trf.xlu0
        %v334 = vpop.trf.xlu0
        %v335 = vpop.trf.xlu0
        %v336 = vpop.trf.xlu0
        %v337 = vpop.trf.xlu0
        %v338 = vpop.trf.xlu0
        %v339 = vpop.trf.xlu0
        %v340 = vpop.trf.xlu0
        %v341 = vpop.trf.xlu0
        %v342 = vpop.trf.xlu0
        %v343 = vpop.trf.xlu0
        %v344 = vpop.trf.xlu0
        %345 = vst [vmem:[%s185] sm:$0x1] %v329
        %s347 = sshll.u32 1, 4
        %s348 = ssub.s32 %s347, 1
        %v350 = vld [vmem:[#allocation2] sm:%s348]
        %s351 = sshll.u32 1, 4
        %s352 = ssub.s32 %s351, 1
        %353 = vst [vmem:[%s159] sm:%s352] %v350
        %s355 = sshll.u32 1, 4
        %s356 = ssub.s32 %s355, 1
        %v358 = vld [vmem:[#allocation4] sm:%s356]
        %s359 = sshll.u32 1, 4
        %s360 = ssub.s32 %s359, 1
        %361 = vst [vmem:[%s166] sm:%s360] %v358
        %s363 = sshll.u32 1, 4
        %s364 = ssub.s32 %s363, 1
        %v366 = vld [vmem:[#allocation7] sm:%s364]
        %s367 = sshll.u32 1, 4
        %s368 = ssub.s32 %s367, 1
        %369 = vst [vmem:[%s172] sm:%s368] %v366
        %s370 = sand.u32 %s14, 1
        %s371 = sand.u32 %s14, 1
        %s372 = smul.addr %s371, 4
        %s373 = scalar_lea.vmem [#allocation3], %s372
        %s374 = sand.u32 %s38, 1
        %s375 = scalar_lea.sflag [#allocation6], %s374
        %s376 = sand.u32 %s38, 1
        %s377 = smul.addr %s376, 4
        %s378 = scalar_lea.vmem [#allocation5], %s377
        %s379 = sand.u32 %s68, 1
        %s380 = sand.u32 %s68, 1
        %s381 = smul.addr %s380, 4
        %s382 = scalar_lea.vmem [#allocation8], %s381
        %s383 = smul.addr %s18, 4
        %s384 = sadd.s32 %s19, %s383
        %s385 = smul.addr %s384, 4
        %s386 = scalar_lea.vmem %s1, %s385
        // Predicated region
        $region59: #{custom-call.11} parent=49 // pred_check
          _
        $region60: #{custom-call.11} parent=49 // pred_check_branch
          %388 = sbr.rel (0) target = $region62
        $region61: #{custom-call.11} parent=49 // pred_region
          // Predicated region
          $region63: #{custom-call.11} parent=61 // pred_check
            _
          $region64: #{custom-call.11} parent=61 // pred_check_branch
            %390 = sbr.rel target = $region66
          $region65: #{custom-call.11} parent=61 // pred_region
            // Predicated region
            $region78: #{custom-call.11} parent=65 // pred_check
              _
            $region79: #{custom-call.11} parent=65 // pred_check_branch
              %406 = sbr.rel (0) target = $region81
            $region80: #{custom-call.11} parent=65 // pred_region
              %s408 = ssub.s32 16, 1
              loop: start=0, step=1, limit=1
              $region82: #{custom-call.11} parent=80 // loop_pre_header
                _
              $region83: #{custom-call.11} parent=80 // loop_header
                %s410 = sphi 0, %s414
                %p411 = scmp.ge.s32.totalorder %s410, 1
                %s415 = sphi %s373, %s373
                %s416 = sphi %s386, %s386
              $region84: #{custom-call.11} parent=80 // loop_header_branch
                %413 = sbr.rel (%p411) target = $region88
              $region85: #{custom-call.11} parent=80 // loop_body
                %v417 = vld [vmem:[%s415] sm:%s408]
                %418 = vst [vmem:[%s416] sm:%s408] %v417
              $region86: #{custom-call.11} parent=80 // loop_footer
                %s414 = sadd.s32 1, %s410
              $region87: #{custom-call.11} parent=80 // loop_footer_branch
                %409 = sbr.rel target = $region83
              $region88: #{custom-call.11} parent=80 // loop_exit
                _
            $region81: #{custom-call.11} parent=65 // pred_fallthru
              _
          $region66: #{custom-call.11} parent=61 // pred_fallthru
            _
          // Predicated region
          $region67: #{custom-call.11} parent=61 // pred_check
            _
          $region68: #{custom-call.11} parent=61 // pred_check_branch
            %392 = sbr.rel (0) target = $region70
          $region69: #{custom-call.11} parent=61 // pred_region
            %s394 = ssub.s32 16, 1
            loop: start=0, step=1, limit=1
            $region71: #{custom-call.11} parent=69 // loop_pre_header
              _
            $region72: #{custom-call.11} parent=69 // loop_header
              %s396 = sphi 0, %s400
              %p397 = scmp.ge.s32.totalorder %s396, 1
              %s401 = sphi %s373, %s373
              %s402 = sphi %s386, %s386
            $region73: #{custom-call.11} parent=69 // loop_header_branch
              %399 = sbr.rel (%p397) target = $region77
            $region74: #{custom-call.11} parent=69 // loop_body
              %v403 = vld [vmem:[%s401] sm:%s394]
              %404 = vst [vmem:[%s402] sm:%s394] %v403
            $region75: #{custom-call.11} parent=69 // loop_footer
              %s400 = sadd.s32 1, %s396
            $region76: #{custom-call.11} parent=69 // loop_footer_branch
              %395 = sbr.rel target = $region72
            $region77: #{custom-call.11} parent=69 // loop_exit
              _
          $region70: #{custom-call.11} parent=61 // pred_fallthru
            _
        $region62: #{custom-call.11} parent=49 // pred_fallthru
          _
        %419 = vnop
        // Predicated region
        $region89: #{custom-call.11} parent=49 // pred_check
          %p420 = pneg %p48
        $region90: #{custom-call.11} parent=49 // pred_check_branch
          %422 = sbr.rel (%p420) target = $region92
        $region91: #{custom-call.11} parent=49 // pred_region
          %s423 = sshrl.u32 %s19, 3
          %s425 = ssub.s32 64, 64
          %426 = vsyncadd %s375, %s425
          %s427 = sadd.s32 %s423, %s18
          %s428 = smul.addr %s427, 64
          %s429 = scalar_lea.hbm %s2, %s428
          %s431 = sshll.u32 %s378, 4
          %s432 = int_to_ptr.vmem [resolvable:$true] %s431
          %434 = dma.vmem_to_hbm [thread:$0]  %s432, 64, %s429, %s375
        $region92: #{custom-call.11} parent=49 // pred_fallthru
          _
        // Predicated region
        $region93: #{custom-call.11} parent=49 // pred_check
          %p435 = pneg %p78
        $region94: #{custom-call.11} parent=49 // pred_check_branch
          %437 = sbr.rel (%p435) target = $region96
        $region95: #{custom-call.11} parent=49 // pred_region
          %s438 = sshrl.u32 %s19, 3
          %s439 = sadd.s32 %s438, %s18
          %s440 = smul.addr %s439, 4
          %s441 = scalar_lea.vmem %s3, %s440
          // Predicated region
          $region97: #{custom-call.11} parent=95 // pred_check
            _
          $region98: #{custom-call.11} parent=95 // pred_check_branch
            %443 = sbr.rel (0) target = $region100
          $region99: #{custom-call.11} parent=95 // pred_region
            // Predicated region
            $region101: #{custom-call.11} parent=99 // pred_check
              _
            $region102: #{custom-call.11} parent=99 // pred_check_branch
              %445 = sbr.rel target = $region104
            $region103: #{custom-call.11} parent=99 // pred_region
              // Predicated region
              $region116: #{custom-call.11} parent=103 // pred_check
                _
              $region117: #{custom-call.11} parent=103 // pred_check_branch
                %461 = sbr.rel (0) target = $region119
              $region118: #{custom-call.11} parent=103 // pred_region
                %s463 = ssub.s32 16, 1
                loop: start=0, step=1, limit=1
                $region120: #{custom-call.11} parent=118 // loop_pre_header
                  _
                $region121: #{custom-call.11} parent=118 // loop_header
                  %s465 = sphi 0, %s469
                  %p466 = scmp.ge.s32.totalorder %s465, 1
                  %s470 = sphi %s382, %s382
                  %s471 = sphi %s441, %s441
                $region122: #{custom-call.11} parent=118 // loop_header_branch
                  %468 = sbr.rel (%p466) target = $region126
                $region123: #{custom-call.11} parent=118 // loop_body
                  %v472 = vld [vmem:[%s470] sm:%s463]
                  %473 = vst [vmem:[%s471] sm:%s463] %v472
                $region124: #{custom-call.11} parent=118 // loop_footer
                  %s469 = sadd.s32 1, %s465
                $region125: #{custom-call.11} parent=118 // loop_footer_branch
                  %464 = sbr.rel target = $region121
                $region126: #{custom-call.11} parent=118 // loop_exit
                  _
              $region119: #{custom-call.11} parent=103 // pred_fallthru
                _
            $region104: #{custom-call.11} parent=99 // pred_fallthru
              _
            // Predicated region
            $region105: #{custom-call.11} parent=99 // pred_check
              _
            $region106: #{custom-call.11} parent=99 // pred_check_branch
              %447 = sbr.rel (0) target = $region108
            $region107: #{custom-call.11} parent=99 // pred_region
              %s449 = ssub.s32 16, 1
              loop: start=0, step=1, limit=1
              $region109: #{custom-call.11} parent=107 // loop_pre_header
                _
              $region110: #{custom-call.11} parent=107 // loop_header
                %s451 = sphi 0, %s455
                %p452 = scmp.ge.s32.totalorder %s451, 1
                %s456 = sphi %s382, %s382
                %s457 = sphi %s441, %s441
              $region111: #{custom-call.11} parent=107 // loop_header_branch
                %454 = sbr.rel (%p452) target = $region115
              $region112: #{custom-call.11} parent=107 // loop_body
                %v458 = vld [vmem:[%s456] sm:%s449]
                %459 = vst [vmem:[%s457] sm:%s449] %v458
              $region113: #{custom-call.11} parent=107 // loop_footer
                %s455 = sadd.s32 1, %s451
              $region114: #{custom-call.11} parent=107 // loop_footer_branch
                %450 = sbr.rel target = $region110
              $region115: #{custom-call.11} parent=107 // loop_exit
                _
            $region108: #{custom-call.11} parent=99 // pred_fallthru
              _
          $region100: #{custom-call.11} parent=95 // pred_fallthru
            _
          %474 = vnop
        $region96: #{custom-call.11} parent=49 // pred_fallthru
          _
      $region50: #{custom-call.11} parent=5 // pred_fallthru
        _
      %p475 = scmp.le.s32.totalorder 2, %s9
      // Predicated region
      $region127: #{custom-call.11} parent=5 // pred_check
        %p476 = pneg %p475
      $region128: #{custom-call.11} parent=5 // pred_check_branch
        %478 = sbr.rel (%p476) target = $region130
      $region129: #{custom-call.11} parent=5 // pred_region
        %s479 = ssub.s32 %s9, 2
        %s480 = sand.u32 %s15, 1
        %s481 = sand.u32 %s15, 1
        %s482 = smul.addr %s481, 4
        %s483 = scalar_lea.vmem [#allocation3], %s482
        // Predicated region
        $region131: #{custom-call.11} parent=129 // pred_check
          %p484 = pneg %p54
        $region132: #{custom-call.11} parent=129 // pred_check_branch
          %486 = sbr.rel (%p484) target = $region134
        $region133: #{custom-call.11} parent=129 // pred_region
          %s487 = sand.u32 %s39, 1
          %s488 = scalar_lea.sflag [#allocation6], %s487
          %s489 = sand.u32 %s39, 1
          %s490 = smul.addr %s489, 4
          %s491 = scalar_lea.vmem [#allocation5], %s490
          %492 = dma.done %s488, 64
        $region134: #{custom-call.11} parent=129 // pred_fallthru
          _
        // Predicated region
        $region135: #{custom-call.11} parent=129 // pred_check
          %p493 = pneg %p84
        $region136: #{custom-call.11} parent=129 // pred_check_branch
          %495 = sbr.rel (%p493) target = $region138
        $region137: #{custom-call.11} parent=129 // pred_region
          %s496 = sand.u32 %s69, 1
          %s497 = sand.u32 %s69, 1
          %s498 = smul.addr %s497, 4
          %s499 = scalar_lea.vmem [#allocation8], %s498
        $region138: #{custom-call.11} parent=129 // pred_fallthru
          _
      $region130: #{custom-call.11} parent=5 // pred_fallthru
        _
    $region6: #{custom-call.11} parent=1 // loop_footer
      %s13 = sadd.s32 1, %s9
    $region7: #{custom-call.11} parent=1 // loop_footer_branch
      %8 = sbr.rel target = $region3
    $region8: #{custom-call.11} parent=1 // loop_exit
      _
    %500 = vsyncpa [#allocation6], 1
    %s501 = scalar_lea.sflag [#allocation6], 1
    %502 = vsyncpa %s501, 1

// kernel: custom-call.13
$region0: #{custom-call.13}
  %s0 = inlined_call_operand.vmem [shape: f32[3,4,1,3,3], index: 0, kind: input, shape index: {}]
  %s1 = inlined_call_operand.vmem [shape: f32[3,4,1,3,3], index: 1, kind: output, shape index: {}]
  $region1: #{custom-call.13} parent=0
    #allocation0 [shape = 'u8[4096]{0}', space=vmem, size = 0x1000, scoped, tag = 'operand span for operand 0']
    #allocation1 [shape = 'u8[4096]{0}', space=vmem, size = 0x1000, scoped, tag = 'packed  for operand 0']
    #allocation2 [shape = 'u8[4096]{0}', space=vmem, size = 0x1000, scoped, tag = 'operand span for operand 1']
    #allocation3 [shape = 'u8[4096]{0}', space=vmem, size = 0x1000, scoped, tag = 'packed  for operand 1']
    loop: start=0, step=1, limit=14
    $region2: #{custom-call.13} parent=1 // loop_pre_header
      _
    $region3: #{custom-call.13} parent=1 // loop_header
      %s3 = sphi 0, %s7
      %p4 = scmp.ge.s32.totalorder %s3, 14
      %s10 = sphi 0, %s43
      %s11 = sphi 0, %s39
      %s12 = sphi 0, %s35
      %s13 = sphi 0, %s31
      %s14 = sphi 0, %s27
      %s15 = sphi 0, %s10
      %s16 = sphi 0, %s11
      %s17 = sphi 0, %s12
      %s18 = sphi 0, %s13
      %s19 = sphi 0, %s14
      %s20 = sphi 0, %s15
      %s21 = sphi 0, %s16
      %s22 = sphi 0, %s17
      %s23 = sphi 0, %s18
      %s24 = sphi 0, %s19
    $region4: #{custom-call.13} parent=1 // loop_header_branch
      %6 = sbr.rel (%p4) target = $region8
    $region5: #{custom-call.13} parent=1 // loop_body
      %s8 = ssub.s32 %s3, 1
      %s9 = ssub.s32 %s3, 2
      %s25 = sadd.s32 1, %s14
      %p26 = scmp.ge.s32.totalorder %s25, 1
      %s27 = scalar_select %p26, 0, %s25
      %s28 = sadd.s32 1, %s13
      %s29 = scalar_select %p26, %s28, %s13
      %p30 = scmp.ge.s32.totalorder %s29, 1
      %s31 = scalar_select %p30, 0, %s29
      %s32 = sadd.s32 1, %s12
      %s33 = scalar_select %p30, %s32, %s12
      %p34 = scmp.ge.s32.totalorder %s33, 1
      %s35 = scalar_select %p34, 0, %s33
      %s36 = sadd.s32 1, %s11
      %s37 = scalar_select %p34, %s36, %s11
      %p38 = scmp.ge.s32.totalorder %s37, 4
      %s39 = scalar_select %p38, 0, %s37
      %s40 = sadd.s32 1, %s10
      %s41 = scalar_select %p38, %s40, %s10
      %p42 = scmp.ge.s32.totalorder %s41, 3
      %s43 = scalar_select %p42, 0, %s41
      %p44 = scmp.le.s32.totalorder 1, %s3
      %p45 = scmp.lt.s32.totalorder %s3, 13
      %p46 = pnand %p44, %p45
      %p47 = pneg %p46
      // Predicated region
      $region9: #{custom-call.13} parent=5 // pred_check
        _
      $region10: #{custom-call.13} parent=5 // pred_check_branch
        %49 = sbr.rel (%p46) target = $region12
      $region11: #{custom-call.13} parent=5 // pred_region
        %s50 = ssub.s32 %s3, 1
      $region12: #{custom-call.13} parent=5 // pred_fallthru
        _
      %p51 = scmp.lt.s32.totalorder %s3, 12
      // Predicated region
      $region13: #{custom-call.13} parent=5 // pred_check
        %p52 = pneg %p51
      $region14: #{custom-call.13} parent=5 // pred_check_branch
        %54 = sbr.rel (%p52) target = $region16
      $region15: #{custom-call.13} parent=5 // pred_region
        %s55 = sand.u32 %s3, 1
        %s56 = sand.u32 %s3, 1
        %s57 = smul.addr %s56, 4
        %s58 = scalar_lea.vmem [#allocation1], %s57
        %s59 = sadd.s32 %s14, %s13
        %s60 = sadd.s32 %s59, %s12
        %s61 = sadd.s32 %s60, %s11
        %s62 = smul.addr %s10, 4
        %s63 = sadd.s32 %s61, %s62
        %s64 = smul.addr %s63, 4
        %s65 = scalar_lea.vmem %s0, %s64
        // Predicated region
        $region17: #{custom-call.13} parent=15 // pred_check
          _
        $region18: #{custom-call.13} parent=15 // pred_check_branch
          %67 = sbr.rel (0) target = $region20
        $region19: #{custom-call.13} parent=15 // pred_region
          // Predicated region
          $region21: #{custom-call.13} parent=19 // pred_check
            _
          $region22: #{custom-call.13} parent=19 // pred_check_branch
            %69 = sbr.rel target = $region24
          $region23: #{custom-call.13} parent=19 // pred_region
            // Predicated region
            $region36: #{custom-call.13} parent=23 // pred_check
              _
            $region37: #{custom-call.13} parent=23 // pred_check_branch
              %85 = sbr.rel (0) target = $region39
            $region38: #{custom-call.13} parent=23 // pred_region
              %s87 = ssub.s32 16, 1
              loop: start=0, step=1, limit=1
              $region40: #{custom-call.13} parent=38 // loop_pre_header
                _
              $region41: #{custom-call.13} parent=38 // loop_header
                %s89 = sphi 0, %s93
                %p90 = scmp.ge.s32.totalorder %s89, 1
                %s94 = sphi %s65, %s65
                %s95 = sphi %s58, %s58
              $region42: #{custom-call.13} parent=38 // loop_header_branch
                %92 = sbr.rel (%p90) target = $region46
              $region43: #{custom-call.13} parent=38 // loop_body
                %v96 = vld [vmem:[%s94] sm:%s87]
                %97 = vst [vmem:[%s95] sm:%s87] %v96
              $region44: #{custom-call.13} parent=38 // loop_footer
                %s93 = sadd.s32 1, %s89
              $region45: #{custom-call.13} parent=38 // loop_footer_branch
                %88 = sbr.rel target = $region41
              $region46: #{custom-call.13} parent=38 // loop_exit
                _
            $region39: #{custom-call.13} parent=23 // pred_fallthru
              _
          $region24: #{custom-call.13} parent=19 // pred_fallthru
            _
          // Predicated region
          $region25: #{custom-call.13} parent=19 // pred_check
            _
          $region26: #{custom-call.13} parent=19 // pred_check_branch
            %71 = sbr.rel (0) target = $region28
          $region27: #{custom-call.13} parent=19 // pred_region
            %s73 = ssub.s32 16, 1
            loop: start=0, step=1, limit=1
            $region29: #{custom-call.13} parent=27 // loop_pre_header
              _
            $region30: #{custom-call.13} parent=27 // loop_header
              %s75 = sphi 0, %s79
              %p76 = scmp.ge.s32.totalorder %s75, 1
              %s80 = sphi %s65, %s65
              %s81 = sphi %s58, %s58
            $region31: #{custom-call.13} parent=27 // loop_header_branch
              %78 = sbr.rel (%p76) target = $region35
            $region32: #{custom-call.13} parent=27 // loop_body
              %v82 = vld [vmem:[%s80] sm:%s73]
              %83 = vst [vmem:[%s81] sm:%s73] %v82
            $region33: #{custom-call.13} parent=27 // loop_footer
              %s79 = sadd.s32 1, %s75
            $region34: #{custom-call.13} parent=27 // loop_footer_branch
              %74 = sbr.rel target = $region30
            $region35: #{custom-call.13} parent=27 // loop_exit
              _
          $region28: #{custom-call.13} parent=19 // pred_fallthru
            _
        $region20: #{custom-call.13} parent=15 // pred_fallthru
          _
        %98 = vnop
      $region16: #{custom-call.13} parent=5 // pred_fallthru
        _
      %p99 = scmp.le.s32.totalorder 1, %s3
      %p100 = scmp.lt.s32.totalorder %s3, 13
      %p101 = pnand %p99, %p100
      %p102 = pneg %p101
      // Predicated region
      $region47: #{custom-call.13} parent=5 // pred_check
        _
      $region48: #{custom-call.13} parent=5 // pred_check_branch
        %104 = sbr.rel (%p101) target = $region50
      $region49: #{custom-call.13} parent=5 // pred_region
        #allocation4 [shape = 'f32[3,3]{1,0}', space=vmem, size = 0x1000, scoped, tag = 'rescaled input a']
        %s105 = ssub.s32 %s3, 1
        %s106 = sand.u32 %s8, 1
        %s107 = sand.u32 %s8, 1
        %s108 = smul.addr %s107, 4
        %s109 = scalar_lea.vmem [#allocation1], %s108
        %s110 = sand.u32 %s8, 1
        %s111 = sand.u32 %s8, 1
        %s112 = smul.addr %s111, 4
        %s113 = scalar_lea.vmem [#allocation1], %s112
        %s114 = sand.u32 %s8, 1
        %s115 = sand.u32 %s8, 1
        %s116 = smul.addr %s115, 4
        %s117 = scalar_lea.vmem [#allocation3], %s116
        %s119 = sshll.u32 1, 4
        %s120 = ssub.s32 %s119, 1
        %v121 = vld [vmem:[%s113] sm:%s120]
        %122 = vst [vmem:[#allocation0] sm:%s120] %v121
        %v123 = vlaneseq
        %v124 = vand.u32 %v123, 127
        %vm125 = vcmp.lt.s32.totalorder %v124, 3
        %v126 = vlaneseq
        %v127 = vshrl.u32 %v126, 7
        %vm129 = vcmp.eq.s32.totalorder %v127, %v124
        %v130 = vld [vmem:[#allocation0] sm:$0xff]
        %v131 = vsel %vm129, %v130, 0.0
        %132 = vadd.xlane.f32.xlu0 %v131
        %v133 = vpop.xlane.xlu0 %132
        %vm134 = vcmp.ge.s32.totalorder %v127, %v124
        %vm135 = vmand %vm134, %vm125
        %v136 = vsel %vm135, %v130, 0.0
        %v137 = vrcp.pop %v133
        %v138 = vmul.f32 %v136, %v137
        %139 = vst [vmem:[#allocation4] sm:$0xff] %v138
        %v140 = vlaneseq
        %v141 = vand.u32 %v140, 127
        %v142 = vlaneseq
        %v143 = vshrl.u32 %v142, 7
        %vm145 = vcmp.eq.s32.totalorder %v141, %v143
        %v146 = vlaneseq
        %v147 = vand.u32 %v146, 127
        %vm148 = vcmp.eq.s32.totalorder %v147, 0
        %v149 = vsel %vm148, 1.0, -1.0
        %v150 = vsel %vm145, %v149, 0.0
        %s151 = scalar_lea.vmem [#allocation4], 1
        %v152 = vld [vmem:[%s151] ss:$0 sm:$0xff]
        %v153 = vxor.u32 %v152, 2147483648
        %v154 = vlaneseq
        %v155 = vand.u32 %v154, 127
        %vm156 = vcmp.eq.s32.totalorder %v155, 1
        %v157 = vmul.f32 %v153, %v150
        %158 = vadd.xlane.f32.xlu0 %v157
        %v159 = vpop.xlane.xlu0 %158
        %v160 = vsel %vm156, %v159, %v150
        %s161 = scalar_lea.vmem [#allocation4], 2
        %v162 = vld [vmem:[%s161] ss:$0 sm:$0xff]
        %v163 = vxor.u32 %v162, 2147483648
        %v164 = vlaneseq
        %v165 = vand.u32 %v164, 127
        %vm166 = vcmp.eq.s32.totalorder %v165, 2
        %v167 = vmul.f32 %v163, %v160
        %168 = vadd.xlane.f32.xlu0 %v167
        %v169 = vpop.xlane.xlu0 %168
        %v170 = vsel %vm166, %v169, %v160
        %v171 = vrcp.pop %v133
        %v172 = vmul.f32 %v170, %v171
        %vm173 = vweird.f32 %v133
        %v174 = vsel %vm173, %v170, %v172
        %175 = vst [vmem:[#allocation2] sm:$0xff] %v174
        %s177 = sshll.u32 1, 4
        %s178 = ssub.s32 %s177, 1
        %v180 = vld [vmem:[#allocation2] sm:%s178]
        %s181 = sshll.u32 1, 4
        %s182 = ssub.s32 %s181, 1
        %183 = vst [vmem:[%s117] sm:%s182] %v180
        %s184 = sand.u32 %s8, 1
        %s185 = sand.u32 %s8, 1
        %s186 = smul.addr %s185, 4
        %s187 = scalar_lea.vmem [#allocation3], %s186
        %s188 = sadd.s32 %s19, %s18
        %s189 = sadd.s32 %s188, %s17
        %s190 = sadd.s32 %s189, %s16
        %s191 = smul.addr %s15, 4
        %s192 = sadd.s32 %s190, %s191
        %s193 = smul.addr %s192, 4
        %s194 = scalar_lea.vmem %s1, %s193
        // Predicated region
        $region51: #{custom-call.13} parent=49 // pred_check
          _
        $region52: #{custom-call.13} parent=49 // pred_check_branch
          %196 = sbr.rel (0) target = $region54
        $region53: #{custom-call.13} parent=49 // pred_region
          // Predicated region
          $region55: #{custom-call.13} parent=53 // pred_check
            _
          $region56: #{custom-call.13} parent=53 // pred_check_branch
            %198 = sbr.rel target = $region58
          $region57: #{custom-call.13} parent=53 // pred_region
            // Predicated region
            $region70: #{custom-call.13} parent=57 // pred_check
              _
            $region71: #{custom-call.13} parent=57 // pred_check_branch
              %214 = sbr.rel (0) target = $region73
            $region72: #{custom-call.13} parent=57 // pred_region
              %s216 = ssub.s32 16, 1
              loop: start=0, step=1, limit=1
              $region74: #{custom-call.13} parent=72 // loop_pre_header
                _
              $region75: #{custom-call.13} parent=72 // loop_header
                %s218 = sphi 0, %s222
                %p219 = scmp.ge.s32.totalorder %s218, 1
                %s223 = sphi %s187, %s187
                %s224 = sphi %s194, %s194
              $region76: #{custom-call.13} parent=72 // loop_header_branch
                %221 = sbr.rel (%p219) target = $region80
              $region77: #{custom-call.13} parent=72 // loop_body
                %v225 = vld [vmem:[%s223] sm:%s216]
                %226 = vst [vmem:[%s224] sm:%s216] %v225
              $region78: #{custom-call.13} parent=72 // loop_footer
                %s222 = sadd.s32 1, %s218
              $region79: #{custom-call.13} parent=72 // loop_footer_branch
                %217 = sbr.rel target = $region75
              $region80: #{custom-call.13} parent=72 // loop_exit
                _
            $region73: #{custom-call.13} parent=57 // pred_fallthru
              _
          $region58: #{custom-call.13} parent=53 // pred_fallthru
            _
          // Predicated region
          $region59: #{custom-call.13} parent=53 // pred_check
            _
          $region60: #{custom-call.13} parent=53 // pred_check_branch
            %200 = sbr.rel (0) target = $region62
          $region61: #{custom-call.13} parent=53 // pred_region
            %s202 = ssub.s32 16, 1
            loop: start=0, step=1, limit=1
            $region63: #{custom-call.13} parent=61 // loop_pre_header
              _
            $region64: #{custom-call.13} parent=61 // loop_header
              %s204 = sphi 0, %s208
              %p205 = scmp.ge.s32.totalorder %s204, 1
              %s209 = sphi %s187, %s187
              %s210 = sphi %s194, %s194
            $region65: #{custom-call.13} parent=61 // loop_header_branch
              %207 = sbr.rel (%p205) target = $region69
            $region66: #{custom-call.13} parent=61 // loop_body
              %v211 = vld [vmem:[%s209] sm:%s202]
              %212 = vst [vmem:[%s210] sm:%s202] %v211
            $region67: #{custom-call.13} parent=61 // loop_footer
              %s208 = sadd.s32 1, %s204
            $region68: #{custom-call.13} parent=61 // loop_footer_branch
              %203 = sbr.rel target = $region64
            $region69: #{custom-call.13} parent=61 // loop_exit
              _
          $region62: #{custom-call.13} parent=53 // pred_fallthru
            _
        $region54: #{custom-call.13} parent=49 // pred_fallthru
          _
        %227 = vnop
      $region50: #{custom-call.13} parent=5 // pred_fallthru
        _
      %p228 = scmp.le.s32.totalorder 2, %s3
      // Predicated region
      $region81: #{custom-call.13} parent=5 // pred_check
        %p229 = pneg %p228
      $region82: #{custom-call.13} parent=5 // pred_check_branch
        %231 = sbr.rel (%p229) target = $region84
      $region83: #{custom-call.13} parent=5 // pred_region
        %s232 = ssub.s32 %s3, 2
        %s233 = sand.u32 %s9, 1
        %s234 = sand.u32 %s9, 1
        %s235 = smul.addr %s234, 4
        %s236 = scalar_lea.vmem [#allocation3], %s235
      $region84: #{custom-call.13} parent=5 // pred_fallthru
        _
    $region6: #{custom-call.13} parent=1 // loop_footer
      %s7 = sadd.s32 1, %s3
    $region7: #{custom-call.13} parent=1 // loop_footer_branch
      %2 = sbr.rel target = $region3
    $region8: #{custom-call.13} parent=1 // loop_exit
      _

// kernel: custom-call.12
$region0: #{custom-call.12}
  %s0 = inlined_call_operand.vmem [shape: f32[3,4,1,3,3], index: 0, kind: input, shape index: {}]
  %s1 = inlined_call_operand.vmem [shape: f32[3,4,1,3,3], index: 1, kind: output, shape index: {}]
  $region1: #{custom-call.12} parent=0
    #allocation0 [shape = 'u8[4096]{0}', space=vmem, size = 0x1000, scoped, tag = 'operand span for operand 0']
    #allocation1 [shape = 'u8[4096]{0}', space=vmem, size = 0x1000, scoped, tag = 'packed  for operand 0']
    #allocation2 [shape = 'u8[4096]{0}', space=vmem, size = 0x1000, scoped, tag = 'operand span for operand 1']
    #allocation3 [shape = 'u8[4096]{0}', space=vmem, size = 0x1000, scoped, tag = 'packed  for operand 1']
    loop: start=0, step=1, limit=14
    $region2: #{custom-call.12} parent=1 // loop_pre_header
      _
    $region3: #{custom-call.12} parent=1 // loop_header
      %s3 = sphi 0, %s7
      %p4 = scmp.ge.s32.totalorder %s3, 14
      %s10 = sphi 0, %s43
      %s11 = sphi 0, %s39
      %s12 = sphi 0, %s35
      %s13 = sphi 0, %s31
      %s14 = sphi 0, %s27
      %s15 = sphi 0, %s10
      %s16 = sphi 0, %s11
      %s17 = sphi 0, %s12
      %s18 = sphi 0, %s13
      %s19 = sphi 0, %s14
      %s20 = sphi 0, %s15
      %s21 = sphi 0, %s16
      %s22 = sphi 0, %s17
      %s23 = sphi 0, %s18
      %s24 = sphi 0, %s19
    $region4: #{custom-call.12} parent=1 // loop_header_branch
      %6 = sbr.rel (%p4) target = $region8
    $region5: #{custom-call.12} parent=1 // loop_body
      %s8 = ssub.s32 %s3, 1
      %s9 = ssub.s32 %s3, 2
      %s25 = sadd.s32 1, %s14
      %p26 = scmp.ge.s32.totalorder %s25, 1
      %s27 = scalar_select %p26, 0, %s25
      %s28 = sadd.s32 1, %s13
      %s29 = scalar_select %p26, %s28, %s13
      %p30 = scmp.ge.s32.totalorder %s29, 1
      %s31 = scalar_select %p30, 0, %s29
      %s32 = sadd.s32 1, %s12
      %s33 = scalar_select %p30, %s32, %s12
      %p34 = scmp.ge.s32.totalorder %s33, 1
      %s35 = scalar_select %p34, 0, %s33
      %s36 = sadd.s32 1, %s11
      %s37 = scalar_select %p34, %s36, %s11
      %p38 = scmp.ge.s32.totalorder %s37, 4
      %s39 = scalar_select %p38, 0, %s37
      %s40 = sadd.s32 1, %s10
      %s41 = scalar_select %p38, %s40, %s10
      %p42 = scmp.ge.s32.totalorder %s41, 3
      %s43 = scalar_select %p42, 0, %s41
      %p44 = scmp.le.s32.totalorder 1, %s3
      %p45 = scmp.lt.s32.totalorder %s3, 13
      %p46 = pnand %p44, %p45
      %p47 = pneg %p46
      // Predicated region
      $region9: #{custom-call.12} parent=5 // pred_check
        _
      $region10: #{custom-call.12} parent=5 // pred_check_branch
        %49 = sbr.rel (%p46) target = $region12
      $region11: #{custom-call.12} parent=5 // pred_region
        %s50 = ssub.s32 %s3, 1
      $region12: #{custom-call.12} parent=5 // pred_fallthru
        _
      %p51 = scmp.lt.s32.totalorder %s3, 12
      // Predicated region
      $region13: #{custom-call.12} parent=5 // pred_check
        %p52 = pneg %p51
      $region14: #{custom-call.12} parent=5 // pred_check_branch
        %54 = sbr.rel (%p52) target = $region16
      $region15: #{custom-call.12} parent=5 // pred_region
        %s55 = sand.u32 %s3, 1
        %s56 = sand.u32 %s3, 1
        %s57 = smul.addr %s56, 4
        %s58 = scalar_lea.vmem [#allocation1], %s57
        %s59 = sadd.s32 %s14, %s13
        %s60 = sadd.s32 %s59, %s12
        %s61 = sadd.s32 %s60, %s11
        %s62 = smul.addr %s10, 4
        %s63 = sadd.s32 %s61, %s62
        %s64 = smul.addr %s63, 4
        %s65 = scalar_lea.vmem %s0, %s64
        // Predicated region
        $region17: #{custom-call.12} parent=15 // pred_check
          _
        $region18: #{custom-call.12} parent=15 // pred_check_branch
          %67 = sbr.rel (0) target = $region20
        $region19: #{custom-call.12} parent=15 // pred_region
          // Predicated region
          $region21: #{custom-call.12} parent=19 // pred_check
            _
          $region22: #{custom-call.12} parent=19 // pred_check_branch
            %69 = sbr.rel target = $region24
          $region23: #{custom-call.12} parent=19 // pred_region
            // Predicated region
            $region36: #{custom-call.12} parent=23 // pred_check
              _
            $region37: #{custom-call.12} parent=23 // pred_check_branch
              %85 = sbr.rel (0) target = $region39
            $region38: #{custom-call.12} parent=23 // pred_region
              %s87 = ssub.s32 16, 1
              loop: start=0, step=1, limit=1
              $region40: #{custom-call.12} parent=38 // loop_pre_header
                _
              $region41: #{custom-call.12} parent=38 // loop_header
                %s89 = sphi 0, %s93
                %p90 = scmp.ge.s32.totalorder %s89, 1
                %s94 = sphi %s65, %s65
                %s95 = sphi %s58, %s58
              $region42: #{custom-call.12} parent=38 // loop_header_branch
                %92 = sbr.rel (%p90) target = $region46
              $region43: #{custom-call.12} parent=38 // loop_body
                %v96 = vld [vmem:[%s94] sm:%s87]
                %97 = vst [vmem:[%s95] sm:%s87] %v96
              $region44: #{custom-call.12} parent=38 // loop_footer
                %s93 = sadd.s32 1, %s89
              $region45: #{custom-call.12} parent=38 // loop_footer_branch
                %88 = sbr.rel target = $region41
              $region46: #{custom-call.12} parent=38 // loop_exit
                _
            $region39: #{custom-call.12} parent=23 // pred_fallthru
              _
          $region24: #{custom-call.12} parent=19 // pred_fallthru
            _
          // Predicated region
          $region25: #{custom-call.12} parent=19 // pred_check
            _
          $region26: #{custom-call.12} parent=19 // pred_check_branch
            %71 = sbr.rel (0) target = $region28
          $region27: #{custom-call.12} parent=19 // pred_region
            %s73 = ssub.s32 16, 1
            loop: start=0, step=1, limit=1
            $region29: #{custom-call.12} parent=27 // loop_pre_header
              _
            $region30: #{custom-call.12} parent=27 // loop_header
              %s75 = sphi 0, %s79
              %p76 = scmp.ge.s32.totalorder %s75, 1
              %s80 = sphi %s65, %s65
              %s81 = sphi %s58, %s58
            $region31: #{custom-call.12} parent=27 // loop_header_branch
              %78 = sbr.rel (%p76) target = $region35
            $region32: #{custom-call.12} parent=27 // loop_body
              %v82 = vld [vmem:[%s80] sm:%s73]
              %83 = vst [vmem:[%s81] sm:%s73] %v82
            $region33: #{custom-call.12} parent=27 // loop_footer
              %s79 = sadd.s32 1, %s75
            $region34: #{custom-call.12} parent=27 // loop_footer_branch
              %74 = sbr.rel target = $region30
            $region35: #{custom-call.12} parent=27 // loop_exit
              _
          $region28: #{custom-call.12} parent=19 // pred_fallthru
            _
        $region20: #{custom-call.12} parent=15 // pred_fallthru
          _
        %98 = vnop
      $region16: #{custom-call.12} parent=5 // pred_fallthru
        _
      %p99 = scmp.le.s32.totalorder 1, %s3
      %p100 = scmp.lt.s32.totalorder %s3, 13
      %p101 = pnand %p99, %p100
      %p102 = pneg %p101
      // Predicated region
      $region47: #{custom-call.12} parent=5 // pred_check
        _
      $region48: #{custom-call.12} parent=5 // pred_check_branch
        %104 = sbr.rel (%p101) target = $region50
      $region49: #{custom-call.12} parent=5 // pred_region
        #allocation4 [shape = 'f32[3,3]{1,0}', space=vmem, size = 0x1000, scoped, tag = 'rescaled input a']
        %s105 = ssub.s32 %s3, 1
        %s106 = sand.u32 %s8, 1
        %s107 = sand.u32 %s8, 1
        %s108 = smul.addr %s107, 4
        %s109 = scalar_lea.vmem [#allocation1], %s108
        %s110 = sand.u32 %s8, 1
        %s111 = sand.u32 %s8, 1
        %s112 = smul.addr %s111, 4
        %s113 = scalar_lea.vmem [#allocation1], %s112
        %s114 = sand.u32 %s8, 1
        %s115 = sand.u32 %s8, 1
        %s116 = smul.addr %s115, 4
        %s117 = scalar_lea.vmem [#allocation3], %s116
        %s119 = sshll.u32 1, 4
        %s120 = ssub.s32 %s119, 1
        %v121 = vld [vmem:[%s113] sm:%s120]
        %122 = vst [vmem:[#allocation0] sm:%s120] %v121
        %v123 = vlaneseq
        %v124 = vand.u32 %v123, 127
        %vm125 = vcmp.lt.s32.totalorder %v124, 3
        %v126 = vlaneseq
        %v127 = vshrl.u32 %v126, 7
        %vm129 = vcmp.eq.s32.totalorder %v127, %v124
        %v130 = vld [vmem:[#allocation0] sm:$0xff]
        %v131 = vsel %vm129, %v130, 0.0
        %132 = vadd.xlane.f32.xlu0 %v131
        %v133 = vpop.xlane.xlu0 %132
        %vm134 = vcmp.le.s32.totalorder %v127, %v124
        %vm135 = vmand %vm134, %vm125
        %v136 = vsel %vm135, %v130, 0.0
        %v137 = vrcp.pop %v133
        %v138 = vmul.f32 %v136, %v137
        %139 = vst [vmem:[#allocation4] sm:$0xff] %v138
        %v140 = vlaneseq
        %v141 = vand.u32 %v140, 127
        %v142 = vlaneseq
        %v143 = vshrl.u32 %v142, 7
        %vm145 = vcmp.eq.s32.totalorder %v141, %v143
        %v146 = vlaneseq
        %v147 = vand.u32 %v146, 127
        %vm148 = vcmp.eq.s32.totalorder %v147, 2
        %v149 = vsel %vm148, 1.0, -1.0
        %v150 = vsel %vm145, %v149, 0.0
        %s151 = scalar_lea.vmem [#allocation4], 1
        %v152 = vld [vmem:[%s151] ss:$0 sm:$0xff]
        %v153 = vxor.u32 %v152, 2147483648
        %v154 = vlaneseq
        %v155 = vand.u32 %v154, 127
        %vm156 = vcmp.eq.s32.totalorder %v155, 1
        %v157 = vmul.f32 %v153, %v150
        %158 = vadd.xlane.f32.xlu0 %v157
        %v159 = vpop.xlane.xlu0 %158
        %v160 = vsel %vm156, %v159, %v150
        %v161 = vld [vmem:[#allocation4] ss:$0 sm:$0xff]
        %v162 = vxor.u32 %v161, 2147483648
        %v163 = vlaneseq
        %v164 = vand.u32 %v163, 127
        %vm165 = vcmp.eq.s32.totalorder %v164, 0
        %v166 = vmul.f32 %v162, %v160
        %167 = vadd.xlane.f32.xlu0 %v166
        %v168 = vpop.xlane.xlu0 %167
        %v169 = vsel %vm165, %v168, %v160
        %v170 = vrcp.pop %v133
        %v171 = vmul.f32 %v169, %v170
        %vm172 = vweird.f32 %v133
        %v173 = vsel %vm172, %v169, %v171
        %174 = vst [vmem:[#allocation2] sm:$0xff] %v173
        %s176 = sshll.u32 1, 4
        %s177 = ssub.s32 %s176, 1
        %v179 = vld [vmem:[#allocation2] sm:%s177]
        %s180 = sshll.u32 1, 4
        %s181 = ssub.s32 %s180, 1
        %182 = vst [vmem:[%s117] sm:%s181] %v179
        %s183 = sand.u32 %s8, 1
        %s184 = sand.u32 %s8, 1
        %s185 = smul.addr %s184, 4
        %s186 = scalar_lea.vmem [#allocation3], %s185
        %s187 = sadd.s32 %s19, %s18
        %s188 = sadd.s32 %s187, %s17
        %s189 = sadd.s32 %s188, %s16
        %s190 = smul.addr %s15, 4
        %s191 = sadd.s32 %s189, %s190
        %s192 = smul.addr %s191, 4
        %s193 = scalar_lea.vmem %s1, %s192
        // Predicated region
        $region51: #{custom-call.12} parent=49 // pred_check
          _
        $region52: #{custom-call.12} parent=49 // pred_check_branch
          %195 = sbr.rel (0) target = $region54
        $region53: #{custom-call.12} parent=49 // pred_region
          // Predicated region
          $region55: #{custom-call.12} parent=53 // pred_check
            _
          $region56: #{custom-call.12} parent=53 // pred_check_branch
            %197 = sbr.rel target = $region58
          $region57: #{custom-call.12} parent=53 // pred_region
            // Predicated region
            $region70: #{custom-call.12} parent=57 // pred_check
              _
            $region71: #{custom-call.12} parent=57 // pred_check_branch
              %213 = sbr.rel (0) target = $region73
            $region72: #{custom-call.12} parent=57 // pred_region
              %s215 = ssub.s32 16, 1
              loop: start=0, step=1, limit=1
              $region74: #{custom-call.12} parent=72 // loop_pre_header
                _
              $region75: #{custom-call.12} parent=72 // loop_header
                %s217 = sphi 0, %s221
                %p218 = scmp.ge.s32.totalorder %s217, 1
                %s222 = sphi %s186, %s186
                %s223 = sphi %s193, %s193
              $region76: #{custom-call.12} parent=72 // loop_header_branch
                %220 = sbr.rel (%p218) target = $region80
              $region77: #{custom-call.12} parent=72 // loop_body
                %v224 = vld [vmem:[%s222] sm:%s215]
                %225 = vst [vmem:[%s223] sm:%s215] %v224
              $region78: #{custom-call.12} parent=72 // loop_footer
                %s221 = sadd.s32 1, %s217
              $region79: #{custom-call.12} parent=72 // loop_footer_branch
                %216 = sbr.rel target = $region75
              $region80: #{custom-call.12} parent=72 // loop_exit
                _
            $region73: #{custom-call.12} parent=57 // pred_fallthru
              _
          $region58: #{custom-call.12} parent=53 // pred_fallthru
            _
          // Predicated region
          $region59: #{custom-call.12} parent=53 // pred_check
            _
          $region60: #{custom-call.12} parent=53 // pred_check_branch
            %199 = sbr.rel (0) target = $region62
          $region61: #{custom-call.12} parent=53 // pred_region
            %s201 = ssub.s32 16, 1
            loop: start=0, step=1, limit=1
            $region63: #{custom-call.12} parent=61 // loop_pre_header
              _
            $region64: #{custom-call.12} parent=61 // loop_header
              %s203 = sphi 0, %s207
              %p204 = scmp.ge.s32.totalorder %s203, 1
              %s208 = sphi %s186, %s186
              %s209 = sphi %s193, %s193
            $region65: #{custom-call.12} parent=61 // loop_header_branch
              %206 = sbr.rel (%p204) target = $region69
            $region66: #{custom-call.12} parent=61 // loop_body
              %v210 = vld [vmem:[%s208] sm:%s201]
              %211 = vst [vmem:[%s209] sm:%s201] %v210
            $region67: #{custom-call.12} parent=61 // loop_footer
              %s207 = sadd.s32 1, %s203
            $region68: #{custom-call.12} parent=61 // loop_footer_branch
              %202 = sbr.rel target = $region64
            $region69: #{custom-call.12} parent=61 // loop_exit
              _
          $region62: #{custom-call.12} parent=53 // pred_fallthru
            _
        $region54: #{custom-call.12} parent=49 // pred_fallthru
          _
        %226 = vnop
      $region50: #{custom-call.12} parent=5 // pred_fallthru
        _
      %p227 = scmp.le.s32.totalorder 2, %s3
      // Predicated region
      $region81: #{custom-call.12} parent=5 // pred_check
        %p228 = pneg %p227
      $region82: #{custom-call.12} parent=5 // pred_check_branch
        %230 = sbr.rel (%p228) target = $region84
      $region83: #{custom-call.12} parent=5 // pred_region
        %s231 = ssub.s32 %s3, 2
        %s232 = sand.u32 %s9, 1
        %s233 = sand.u32 %s9, 1
        %s234 = smul.addr %s233, 4
        %s235 = scalar_lea.vmem [#allocation3], %s234
      $region84: #{custom-call.12} parent=5 // pred_fallthru
        _
    $region6: #{custom-call.12} parent=1 // loop_footer
      %s7 = sadd.s32 1, %s3
    $region7: #{custom-call.12} parent=1 // loop_footer_branch
      %2 = sbr.rel target = $region3
    $region8: #{custom-call.12} parent=1 // loop_exit
      _

// kernel: run.2
$region0: #{run.2}
  #allocation0 [shape = 'u32[]', space=smem, size = 0x4, offset = 0x4, fixed_abs, tag = 'smem constant byte address 0x4 - core index']
  #allocation1 [shape = 'u32[144,128]{1,0:T(1,128)}', space=vmem, size = 0x12000, scoped, tag = 'internal scratch']
  %s0 = inlined_call_operand.vmem [shape: f32[3,3,64], index: 0, kind: input, shape index: {}]
  %s1 = inlined_call_operand.vmem [shape: f32[12,3], index: 1, kind: input, shape index: {}]
  %s2 = inlined_call_operand.vmem [shape: f32[12,1], index: 2, kind: input, shape index: {}]
  %s3 = inlined_call_operand.vmem [shape: s32[3,4,64,1], index: 3, kind: input, shape index: {}]
  %s4 = inlined_call_operand.vmem [shape: f32[8,768], index: 4, kind: output, shape index: {0}]
  %s5 = inlined_call_operand.vmem [shape: f32[3,32,64], index: 5, kind: output, shape index: {1}]
  %s6 = inlined_call_operand.vmem [shape: f32[3,4,64], index: 6, kind: output, shape index: {2}]
  %7 = xla_tuple %s4, %s5, %s6
  %s8 = sld [smem:[#allocation0]]
  $region65: #{run.2} parent=0
    _
  %s10 = ssub.s32 1, %s8
  %s11 = scalar_select 0, %s10, %s8
  loop: start=0, step=1, limit=5
  $region2: #{run.2} parent=0 // loop_pre_header
    _
  $region3: #{run.2} parent=0 // loop_header
    %s13 = sphi 0, %s17
    %p14 = scmp.ge.s32.totalorder %s13, 5
    %s23 = sphi 0, %s25
    %s26 = sphi 0, %s23
    %s27 = sphi 0, %s26
    %s43 = sphi 0, %s27
    %s47 = sphi 0, %s47
    %s49 = sphi 0, %s47
    %s50 = sphi 0, %s49
    %s64 = sphi 0, %s50
    %s68 = sphi 0, %s68
    %s70 = sphi 0, %s68
    %s71 = sphi 0, %s70
    %s85 = sphi 0, %s71
    %s91 = sphi 0, %s93
    %s94 = sphi 0, %s91
    %s95 = sphi 0, %s94
    %s111 = sphi 0, %s95
    %s117 = sphi 0, %s119
    %s120 = sphi 0, %s117
    %s121 = sphi 0, %s120
    %s137 = sphi 0, %s121
    %s143 = sphi 0, %s145
    %s146 = sphi 0, %s143
    %s147 = sphi 0, %s146
    %s163 = sphi 0, %s147
    %s169 = sphi 0, %s171
    %s172 = sphi 0, %s169
    %s173 = sphi 0, %s172
    %s189 = sphi 0, %s173
  $region4: #{run.2} parent=0 // loop_header_branch
    %16 = sbr.rel (%p14) target = $region8
  $region5: #{run.2} parent=0 // loop_body
    %s18 = ssub.s32 %s13, 1
    %s19 = ssub.s32 %s13, 2
    %s20 = sadd.s32 %s13, 1
    %s21 = ssub.s32 %s13, %s20
    %p22 = scmp.eq.s32.totalorder %s21, 0
    %s24 = sadd.s32 %s23, 1
    %s25 = scalar_select %p22, %s23, %s24
    %p28 = pneg %p22
    %p29 = scmp.eq.s32.totalorder %s13, 2
    %p30 = por %p28, %p29
    %p31 = scmp.ne.s32.totalorder %s23, %s26
    %p32 = scmp.eq.s32.totalorder %s13, 0
    %p33 = por %p31, %p32
    %p34 = scmp.ne.s32.totalorder %s23, %s26
    %p35 = scmp.eq.s32.totalorder %s18, 2
    %p36 = por %p34, %p35
    %p37 = scmp.ne.s32.totalorder %s26, %s27
    %p38 = scmp.eq.s32.totalorder %s18, 0
    %p39 = por %p37, %p38
    %p40 = scmp.ne.s32.totalorder %s26, %s27
    %p41 = scmp.eq.s32.totalorder %s19, 2
    %p42 = por %p40, %p41
    %p44 = scmp.ne.s32.totalorder %s27, %s43
    %p45 = scmp.eq.s32.totalorder %s19, 0
    %p46 = por %p44, %p45
    %s48 = sadd.s32 %s47, 1
    %p51 = scmp.eq.s32.totalorder %s13, 2
    %p52 = scmp.ne.s32.totalorder %s47, %s49
    %p53 = scmp.eq.s32.totalorder %s13, 0
    %p54 = por %p52, %p53
    %p55 = scmp.ne.s32.totalorder %s47, %s49
    %p56 = scmp.eq.s32.totalorder %s18, 2
    %p57 = por %p55, %p56
    %p58 = scmp.ne.s32.totalorder %s49, %s50
    %p59 = scmp.eq.s32.totalorder %s18, 0
    %p60 = por %p58, %p59
    %p61 = scmp.ne.s32.totalorder %s49, %s50
    %p62 = scmp.eq.s32.totalorder %s19, 2
    %p63 = por %p61, %p62
    %p65 = scmp.ne.s32.totalorder %s50, %s64
    %p66 = scmp.eq.s32.totalorder %s19, 0
    %p67 = por %p65, %p66
    %s69 = sadd.s32 %s68, 1
    %p72 = scmp.eq.s32.totalorder %s13, 2
    %p73 = scmp.ne.s32.totalorder %s68, %s70
    %p74 = scmp.eq.s32.totalorder %s13, 0
    %p75 = por %p73, %p74
    %p76 = scmp.ne.s32.totalorder %s68, %s70
    %p77 = scmp.eq.s32.totalorder %s18, 2
    %p78 = por %p76, %p77
    %p79 = scmp.ne.s32.totalorder %s70, %s71
    %p80 = scmp.eq.s32.totalorder %s18, 0
    %p81 = por %p79, %p80
    %p82 = scmp.ne.s32.totalorder %s70, %s71
    %p83 = scmp.eq.s32.totalorder %s19, 2
    %p84 = por %p82, %p83
    %p86 = scmp.ne.s32.totalorder %s71, %s85
    %p87 = scmp.eq.s32.totalorder %s19, 0
    %p88 = por %p86, %p87
    %s89 = ssub.s32 %s13, %s20
    %p90 = scmp.eq.s32.totalorder %s89, 0
    %s92 = sadd.s32 %s91, 1
    %s93 = scalar_select %p90, %s91, %s92
    %p96 = pneg %p90
    %p97 = scmp.eq.s32.totalorder %s13, 2
    %p98 = por %p96, %p97
    %p99 = scmp.ne.s32.totalorder %s91, %s94
    %p100 = scmp.eq.s32.totalorder %s13, 0
    %p101 = por %p99, %p100
    %p102 = scmp.ne.s32.totalorder %s91, %s94
    %p103 = scmp.eq.s32.totalorder %s18, 2
    %p104 = por %p102, %p103
    %p105 = scmp.ne.s32.totalorder %s94, %s95
    %p106 = scmp.eq.s32.totalorder %s18, 0
    %p107 = por %p105, %p106
    %p108 = scmp.ne.s32.totalorder %s94, %s95
    %p109 = scmp.eq.s32.totalorder %s19, 2
    %p110 = por %p108, %p109
    %p112 = scmp.ne.s32.totalorder %s95, %s111
    %p113 = scmp.eq.s32.totalorder %s19, 0
    %p114 = por %p112, %p113
    %s115 = ssub.s32 %s13, %s20
    %p116 = scmp.eq.s32.totalorder %s115, 0
    %s118 = sadd.s32 %s117, 1
    %s119 = scalar_select %p116, %s117, %s118
    %p122 = pneg %p116
    %p123 = scmp.eq.s32.totalorder %s13, 2
    %p124 = por %p122, %p123
    %p125 = scmp.ne.s32.totalorder %s117, %s120
    %p126 = scmp.eq.s32.totalorder %s13, 0
    %p127 = por %p125, %p126
    %p128 = scmp.ne.s32.totalorder %s117, %s120
    %p129 = scmp.eq.s32.totalorder %s18, 2
    %p130 = por %p128, %p129
    %p131 = scmp.ne.s32.totalorder %s120, %s121
    %p132 = scmp.eq.s32.totalorder %s18, 0
    %p133 = por %p131, %p132
    %p134 = scmp.ne.s32.totalorder %s120, %s121
    %p135 = scmp.eq.s32.totalorder %s19, 2
    %p136 = por %p134, %p135
    %p138 = scmp.ne.s32.totalorder %s121, %s137
    %p139 = scmp.eq.s32.totalorder %s19, 0
    %p140 = por %p138, %p139
    %s141 = ssub.s32 %s13, %s20
    %p142 = scmp.eq.s32.totalorder %s141, 0
    %s144 = sadd.s32 %s143, 1
    %s145 = scalar_select %p142, %s143, %s144
    %p148 = pneg %p142
    %p149 = scmp.eq.s32.totalorder %s13, 2
    %p150 = por %p148, %p149
    %p151 = scmp.ne.s32.totalorder %s143, %s146
    %p152 = scmp.eq.s32.totalorder %s13, 0
    %p153 = por %p151, %p152
    %p154 = scmp.ne.s32.totalorder %s143, %s146
    %p155 = scmp.eq.s32.totalorder %s18, 2
    %p156 = por %p154, %p155
    %p157 = scmp.ne.s32.totalorder %s146, %s147
    %p158 = scmp.eq.s32.totalorder %s18, 0
    %p159 = por %p157, %p158
    %p160 = scmp.ne.s32.totalorder %s146, %s147
    %p161 = scmp.eq.s32.totalorder %s19, 2
    %p162 = por %p160, %p161
    %p164 = scmp.ne.s32.totalorder %s147, %s163
    %p165 = scmp.eq.s32.totalorder %s19, 0
    %p166 = por %p164, %p165
    %s167 = ssub.s32 %s13, %s20
    %p168 = scmp.eq.s32.totalorder %s167, 0
    %s170 = sadd.s32 %s169, 1
    %s171 = scalar_select %p168, %s169, %s170
    %p174 = pneg %p168
    %p175 = scmp.eq.s32.totalorder %s13, 2
    %p176 = por %p174, %p175
    %p177 = scmp.ne.s32.totalorder %s169, %s172
    %p178 = scmp.eq.s32.totalorder %s13, 0
    %p179 = por %p177, %p178
    %p180 = scmp.ne.s32.totalorder %s169, %s172
    %p181 = scmp.eq.s32.totalorder %s18, 2
    %p182 = por %p180, %p181
    %p183 = scmp.ne.s32.totalorder %s172, %s173
    %p184 = scmp.eq.s32.totalorder %s18, 0
    %p185 = por %p183, %p184
    %p186 = scmp.ne.s32.totalorder %s172, %s173
    %p187 = scmp.eq.s32.totalorder %s19, 2
    %p188 = por %p186, %p187
    %p190 = scmp.ne.s32.totalorder %s173, %s189
    %p191 = scmp.eq.s32.totalorder %s19, 0
    %p192 = por %p190, %p191
    %p193 = scmp.le.s32.totalorder 1, %s13
    %p194 = scmp.lt.s32.totalorder %s13, 4
    %p195 = pnand %p193, %p194
    %p196 = pneg %p195
    // Predicated region
    $region9: #{run.2} parent=5 // pred_check
      _
    $region10: #{run.2} parent=5 // pred_check_branch
      %198 = sbr.rel (%p195) target = $region12
    $region11: #{run.2} parent=5 // pred_region
      %s199 = ssub.s32 %s13, 1
      // Predicated region
      $region13: #{run.2} parent=11 // pred_check
        %p200 = pneg %p60
      $region14: #{run.2} parent=11 // pred_check_branch
        %202 = sbr.rel (%p200) target = $region16
      $region15: #{run.2} parent=11 // pred_region
        _
      $region16: #{run.2} parent=11 // pred_fallthru
        _
      // Predicated region
      $region17: #{run.2} parent=11 // pred_check
        %p203 = pneg %p81
      $region18: #{run.2} parent=11 // pred_check_branch
        %205 = sbr.rel (%p203) target = $region20
      $region19: #{run.2} parent=11 // pred_region
        _
      $region20: #{run.2} parent=11 // pred_fallthru
        _
    $region12: #{run.2} parent=5 // pred_fallthru
      _
    %p206 = scmp.lt.s32.totalorder %s13, 3
    // Predicated region
    $region21: #{run.2} parent=5 // pred_check
      %p207 = pneg %p206
    $region22: #{run.2} parent=5 // pred_check_branch
      %209 = sbr.rel (%p207) target = $region24
    $region23: #{run.2} parent=5 // pred_region
      // Predicated region
      $region25: #{run.2} parent=23 // pred_check
        %p210 = pneg %p33
      $region26: #{run.2} parent=23 // pred_check_branch
        %212 = sbr.rel (%p210) target = $region28
      $region27: #{run.2} parent=23 // pred_region
        %p213 = scmp.lt.s32.totalorder %s13, 2
        %s214 = scalar_select %p213, %s13, 2
        %s215 = smul.addr %s214, 4
        %s216 = scalar_lea.vmem %s0, %s215
      $region28: #{run.2} parent=23 // pred_fallthru
        _
      // Predicated region
      $region29: #{run.2} parent=23 // pred_check
        %p217 = pneg %p101
      $region30: #{run.2} parent=23 // pred_check_branch
        %219 = sbr.rel (%p217) target = $region32
      $region31: #{run.2} parent=23 // pred_region
        %p220 = scmp.lt.s32.totalorder %s13, 2
        %s221 = scalar_select %p220, %s13, 2
        %s222 = smul.addr %s221, 32
        %s223 = smul.addr %s222, 8
        %s224 = scalar_lea.vmem %s3, %s223
      $region32: #{run.2} parent=23 // pred_fallthru
        _
    $region24: #{run.2} parent=5 // pred_fallthru
      _
    %p225 = scmp.le.s32.totalorder 1, %s13
    %p226 = scmp.lt.s32.totalorder %s13, 4
    %p227 = pnand %p225, %p226
    %p228 = pneg %p227
    // Predicated region
    $region33: #{run.2} parent=5 // pred_check
      _
    $region34: #{run.2} parent=5 // pred_check_branch
      %230 = sbr.rel (%p227) target = $region36
    $region35: #{run.2} parent=5 // pred_region
      %s231 = ssub.s32 %s13, 1
      %p232 = scmp.lt.s32.totalorder %s18, 2
      %s233 = scalar_select %p232, %s18, 2
      %s234 = smul.addr %s233, 4
      %s235 = scalar_lea.vmem %s0, %s234
      %p236 = pneg %p39
      %p237 = pneg %p36
      %p238 = pneg %p60
      %p239 = pneg %p57
      %p240 = pneg %p81
      %p241 = pneg %p78
      %p242 = scmp.lt.s32.totalorder %s18, 2
      %s243 = scalar_select %p242, %s18, 2
      %s244 = smul.addr %s243, 32
      %s245 = smul.addr %s244, 8
      %s246 = scalar_lea.vmem %s3, %s245
      %p247 = pneg %p107
      %p248 = pneg %p104
      %p249 = pneg %p133
      %p250 = pneg %p130
      %s251 = smul.u32 2, %s18
      %p252 = scmp.lt.s32.totalorder %s251, 5
      %s253 = scalar_select %p252, %s251, 5
      %s254 = smul.addr %s253, 8
      %s255 = scalar_lea.vmem %s4, %s254
      %p256 = pneg %p159
      %p257 = pneg %p156
      %p258 = scmp.lt.s32.totalorder %s18, 2
      %s259 = scalar_select %p258, %s18, 2
      %s260 = smul.addr %s259, 4
      %s261 = smul.addr %s260, 8
      %s262 = scalar_lea.vmem %s5, %s261
      %p263 = pneg %p185
      %p264 = pneg %p182
      %p265 = scmp.lt.s32.totalorder %s18, 2
      %s266 = scalar_select %p265, %s18, 2
      %s267 = smul.addr %s266, 4
      %s268 = scalar_lea.vmem %s6, %s267
      %p269 = scmp.lt.s32.totalorder %s18, 2
      %s270 = scalar_select %p269, %s18, 2
      %s271 = smul.addr %s270, 4
      %s272 = scalar_lea.vmem %s0, %s271
      %p273 = scmp.lt.s32.totalorder %s18, 2
      %s274 = scalar_select %p273, %s18, 2
      %s275 = smul.addr %s274, 32
      %s276 = smul.addr %s275, 8
      %s277 = scalar_lea.vmem %s3, %s276
      %s278 = smul.u32 2, %s18
      %p279 = scmp.lt.s32.totalorder %s278, 5
      %s280 = scalar_select %p279, %s278, 5
      %s281 = smul.addr %s280, 8
      %s282 = scalar_lea.vmem %s4, %s281
      %s283 = smul.u32 2, %s18
      %p284 = scmp.lt.s32.totalorder %s18, 2
      %s285 = scalar_select %p284, %s18, 2
      %s286 = smul.addr %s285, 4
      %s287 = smul.addr %s286, 8
      %s288 = scalar_lea.vmem %s5, %s287
      %p289 = scmp.lt.s32.totalorder %s18, 2
      %s290 = scalar_select %p289, %s18, 2
      %s291 = smul.addr %s290, 4
      %s292 = scalar_lea.vmem %s6, %s291
      %v293 = vld [vmem:[%s1] sm:$0xff]
      %v294 = vld [vmem:[%s1 + $0x8] sm:$0xf]
      %v295 = vld [vmem:[%s272] sm:$0x7]
      %v296 = vld [vmem:[%s2] sm:$0xff]
      %v297 = vld [vmem:[%s2 + $0x8] sm:$0xf]
      %299 = vset.pattern.permute.xlu0 0
      %300 = vperm.xlu0 %299, %v296
      %v301 = vpop.permute.xlu0 %300
      %304 = vset.pattern.permute.xlu0 0
      %305 = vperm.xlu0 %304, %v297
      %v306 = vpop.permute.xlu0 %305
      %vm308 = vcmask 23552
      %v310 = vsel %vm308, %v293, 0
      %v313 = vsel %vm308, %v294, 0
      %vm315 = vcmask 1042432
      %v317 = vsel %vm315, %v295, 0
      %319 = vmatprep.subr.mxu0 0.0
      %320 = vmatpush1.msra.mxu0 0.0
      %321 = vmatprep.subr.mxu0 0.0
      %322 = vmatpush1.msra.mxu0 0.0
      %323 = vmatprep.subr.mxu0 0.0
      %324 = vmatpush1.msra.mxu0 0.0
      %325 = vmatprep.subr.mxu0 0.0
      %326 = vmatpush1.msra.mxu0 0.0
      %327 = vmatprep.subr.mxu0 0.0
      %328 = vmatpush1.msra.mxu0 0.0
      %329 = vmatprep.subr.mxu0 0.0
      %330 = vmatpush1.msra.mxu0 0.0
      %331 = vmatprep.subr.mxu0 0.0
      %332 = vmatpush1.msra.mxu0 0.0
      %333 = vmatprep.subr.mxu0 0.0
      %334 = vmatpush1.msra.mxu0 0.0
      %335 = vmatprep.subr.mxu0 0.0
      %336 = vmatpush1.msra.mxu0 0.0
      %337 = vmatprep.subr.mxu0 0.0
      %338 = vmatpush1.msra.mxu0 0.0
      %339 = vmatprep.subr.mxu0 0.0
      %340 = vmatpush1.msra.mxu0 0.0
      %341 = vmatprep.subr.mxu0 0.0
      %342 = vmatpush1.msra.mxu0 0.0
      %343 = vmatprep.subr.mxu0 0.0
      %344 = vmatpush1.msra.mxu0 0.0
      %345 = vmatprep.subr.mxu0 0.0
      %346 = vmatpush1.msra.mxu0 0.0
      %347 = vmatprep.subr.mxu0 0.0
      %348 = vmatpush1.msra.mxu0 0.0
      %349 = vmatprep.subr.mxu0 0.0
      %350 = vmatpush1.msra.mxu0 %v317
      %351 = vmatprep.subr.mxu0 0.0
      %352 = vmatpush2.msra.mxu0 0.0
      %353 = vmatprep.subr.mxu0 0.0
      %354 = vmatpush2.msra.mxu0 0.0
      %355 = vmatprep.subr.mxu0 0.0
      %356 = vmatpush2.msra.mxu0 0.0
      %357 = vmatprep.subr.mxu0 0.0
      %358 = vmatpush2.msra.mxu0 0.0
      %359 = vmatprep.subr.mxu0 0.0
      %360 = vmatpush2.msra.mxu0 0.0
      %361 = vmatprep.subr.mxu0 0.0
      %362 = vmatpush2.msra.mxu0 0.0
      %363 = vmatprep.subr.mxu0 0.0
      %364 = vmatpush2.msra.mxu0 0.0
      %365 = vmatprep.subr.mxu0 0.0
      %366 = vmatpush2.msra.mxu0 0.0
      %367 = vmatprep.subr.mxu0 0.0
      %368 = vmatpush2.msra.mxu0 0.0
      %369 = vmatprep.subr.mxu0 0.0
      %370 = vmatpush2.msra.mxu0 0.0
      %371 = vmatprep.subr.mxu0 0.0
      %372 = vmatpush2.msra.mxu0 0.0
      %373 = vmatprep.subr.mxu0 0.0
      %374 = vmatpush2.msra.mxu0 0.0
      %375 = vmatprep.subr.mxu0 0.0
      %376 = vmatpush2.msra.mxu0 0.0
      %377 = vmatprep.subr.mxu0 0.0
      %378 = vmatpush2.msra.mxu0 0.0
      %379 = vmatprep.subr.mxu0 0.0
      %380 = vmatpush2.msra.mxu0 0.0
      %381 = vmatprep.subr.mxu0 0.0
      %382 = vmatpush2.msra.mxu0 0.0
      %383 = vmatprep.mubr.f32.mxu0 0.0
      %384 = vmatmul.mubr.f32.gmra.mxu0 %v310
      %v385 = vpop.f32.mrf.mxu0
      %v386 = vadd.f32 %v301, %v385
      %v387 = vpop.f32.mrf.mxu0
      %388 = vmatprep.mubr.f32.mxu0 0.0
      %389 = vmatmul.mubr.f32.gmra.mxu0 %v313
      %v390 = vpop.f32.mrf.mxu0
      %v391 = vadd.f32 %v306, %v390
      %v392 = vpop.f32.mrf.mxu0
      %393 = vdwg.mxu0
      %vm394 = vcmask 519168
      %395 = vst.msk [vmem:[%s292] sm:$0xf] %vm394, %v391
      %v396 = vsel %vm394, %v391, -inf
      %v397 = vrot.slane %v396, 4
      %v398 = vmax.f32 %v396, %v397
      %v399 = vrot.slane %v398, 2
      %v400 = vmax.f32 %v398, %v399
      %v401 = vrot.slane %v400, 1
      %v402 = vmax.f32 %v400, %v401
      %v403 = vsub.f32 %v391, %v402
      %v404 = vmul.f32 %v403, 1.442695
      %v405 = vpow.pop %v404
      %v406 = vsel %vm394, %v405, 0.0
      %v407 = vrot.slane %v406, 4
      %v408 = vadd.f32 %v406, %v407
      %v409 = vrot.slane %v408, 2
      %v410 = vadd.f32 %v408, %v409
      %v411 = vrot.slane %v410, 1
      %v412 = vadd.f32 %v410, %v411
      %v413 = vrcp.pop %v412
      %v414 = vmul.f32 %v405, %v413
      %v415 = vlaneseq
      %v416 = vand.u32 %v415, 127
      %v417 = vadd.s32 %v416, 128
      %v418 = vlaneseq
      %v419 = vshrl.u32 %v418, 7
      %v420 = vsub.s32 0, %v419
      %v421 = vrot.slane %v414, %v420
      %v422 = vmul.f32 %v421, %v386
      %vm423 = vcmask 523264
      %424 = vst.msk [vmem:[%s288] sm:$0xff] %vm423, %v422
      %v425 = vld [vmem:[%s277] sm:$0xff]
      %v426 = vld [vmem:[%s277 + $0x8] sm:$0xff]
      %v427 = vld [vmem:[%s277 + $0x10] sm:$0xff]
      %v428 = vld [vmem:[%s277 + $0x18] sm:$0xff]
      %v429 = vld [vmem:[%s277 + $0x20] sm:$0xff]
      %v430 = vld [vmem:[%s277 + $0x28] sm:$0xff]
      %v431 = vld [vmem:[%s277 + $0x30] sm:$0xff]
      %v432 = vld [vmem:[%s277 + $0x38] sm:$0xff]
      %433 = vset.pattern.permute.xlu0 0
      %434 = vperm.xlu0 %433, %v425
      %v435 = vpop.permute.xlu0 %434
      %436 = vset.pattern.permute.xlu0 0
      %437 = vperm.xlu0 %436, %v426
      %v438 = vpop.permute.xlu0 %437
      %439 = vset.pattern.permute.xlu0 0
      %440 = vperm.xlu0 %439, %v427
      %v441 = vpop.permute.xlu0 %440
      %442 = vset.pattern.permute.xlu0 0
      %443 = vperm.xlu0 %442, %v428
      %v444 = vpop.permute.xlu0 %443
      %445 = vset.pattern.permute.xlu0 0
      %446 = vperm.xlu0 %445, %v429
      %v447 = vpop.permute.xlu0 %446
      %448 = vset.pattern.permute.xlu0 0
      %449 = vperm.xlu0 %448, %v430
      %v450 = vpop.permute.xlu0 %449
      %451 = vset.pattern.permute.xlu0 0
      %452 = vperm.xlu0 %451, %v431
      %v453 = vpop.permute.xlu0 %452
      %454 = vset.pattern.permute.xlu0 0
      %455 = vperm.xlu0 %454, %v432
      %v456 = vpop.permute.xlu0 %455
      %vm457 = vcmp.eq.s32.totalorder %v416, %v435
      %vm458 = vcmp.eq.s32.totalorder %v417, %v435
      %vm459 = vcmp.eq.s32.totalorder %v416, %v438
      %vm460 = vcmp.eq.s32.totalorder %v417, %v438
      %vm461 = vcmp.eq.s32.totalorder %v416, %v441
      %vm462 = vcmp.eq.s32.totalorder %v417, %v441
      %vm463 = vcmp.eq.s32.totalorder %v416, %v444
      %vm464 = vcmp.eq.s32.totalorder %v417, %v444
      %vm465 = vcmp.eq.s32.totalorder %v416, %v447
      %vm466 = vcmp.eq.s32.totalorder %v417, %v447
      %vm467 = vcmp.eq.s32.totalorder %v416, %v450
      %vm468 = vcmp.eq.s32.totalorder %v417, %v450
      %vm469 = vcmp.eq.s32.totalorder %v416, %v453
      %vm470 = vcmp.eq.s32.totalorder %v417, %v453
      %vm471 = vcmp.eq.s32.totalorder %v416, %v456
      %vm472 = vcmp.eq.s32.totalorder %v417, %v456
      %v473 = vsel %vm457, 1, 0
      %v474 = vsel %vm458, 1, 0
      %v475 = vsel %vm459, 1, 0
      %v476 = vsel %vm460, 1, 0
      %v477 = vsel %vm461, 1, 0
      %v478 = vsel %vm462, 1, 0
      %v479 = vsel %vm463, 1, 0
      %v480 = vsel %vm464, 1, 0
      %v481 = vsel %vm465, 1, 0
      %v482 = vsel %vm466, 1, 0
      %v483 = vsel %vm467, 1, 0
      %v484 = vsel %vm468, 1, 0
      %v485 = vsel %vm469, 1, 0
      %v486 = vsel %vm470, 1, 0
      %v487 = vsel %vm471, 1, 0
      %v488 = vsel %vm472, 1, 0
      %v489 = vcvt.s32.f32 %v473
      %v490 = vcvt.s32.f32 %v474
      %v491 = vcvt.s32.f32 %v475
      %v492 = vcvt.s32.f32 %v476
      %v493 = vcvt.s32.f32 %v477
      %v494 = vcvt.s32.f32 %v478
      %v495 = vcvt.s32.f32 %v479
      %v496 = vcvt.s32.f32 %v480
      %v497 = vcvt.s32.f32 %v481
      %v498 = vcvt.s32.f32 %v482
      %v499 = vcvt.s32.f32 %v483
      %v500 = vcvt.s32.f32 %v484
      %v501 = vcvt.s32.f32 %v485
      %v502 = vcvt.s32.f32 %v486
      %v503 = vcvt.s32.f32 %v487
      %v504 = vcvt.s32.f32 %v488
      %v505 = vlaneseq
      %v506 = vshrl.u32 %v505, 7
      %v507 = vsub.s32 1, %v506
      %v508 = vrot.slane %v414, %v507
      %v509 = vmul.f32 %v508, %v386
      %510 = vst.msk [vmem:[%s288 + $0x8] sm:$0xff] %vm423, %v509
      %s511 = scalar_lea.vmem %s277, 64
      %v512 = vld [vmem:[%s511] sm:$0xff]
      %v513 = vld [vmem:[%s511 + $0x8] sm:$0xff]
      %v514 = vld [vmem:[%s511 + $0x10] sm:$0xff]
      %v515 = vld [vmem:[%s511 + $0x18] sm:$0xff]
      %v516 = vld [vmem:[%s511 + $0x20] sm:$0xff]
      %v517 = vld [vmem:[%s511 + $0x28] sm:$0xff]
      %v518 = vld [vmem:[%s511 + $0x30] sm:$0xff]
      %v519 = vld [vmem:[%s511 + $0x38] sm:$0xff]
      %520 = vset.pattern.permute.xlu0 0
      %521 = vperm.xlu0 %520, %v512
      %v522 = vpop.permute.xlu0 %521
      %523 = vset.pattern.permute.xlu0 0
      %524 = vperm.xlu0 %523, %v513
      %v525 = vpop.permute.xlu0 %524
      %526 = vset.pattern.permute.xlu0 0
      %527 = vperm.xlu0 %526, %v514
      %v528 = vpop.permute.xlu0 %527
      %529 = vset.pattern.permute.xlu0 0
      %530 = vperm.xlu0 %529, %v515
      %v531 = vpop.permute.xlu0 %530
      %532 = vset.pattern.permute.xlu0 0
      %533 = vperm.xlu0 %532, %v516
      %v534 = vpop.permute.xlu0 %533
      %535 = vset.pattern.permute.xlu0 0
      %536 = vperm.xlu0 %535, %v517
      %v537 = vpop.permute.xlu0 %536
      %538 = vset.pattern.permute.xlu0 0
      %539 = vperm.xlu0 %538, %v518
      %v540 = vpop.permute.xlu0 %539
      %541 = vset.pattern.permute.xlu0 0
      %542 = vperm.xlu0 %541, %v519
      %v543 = vpop.permute.xlu0 %542
      %vm544 = vcmp.eq.s32.totalorder %v416, %v522
      %vm545 = vcmp.eq.s32.totalorder %v417, %v522
      %vm546 = vcmp.eq.s32.totalorder %v416, %v525
      %vm547 = vcmp.eq.s32.totalorder %v417, %v525
      %vm548 = vcmp.eq.s32.totalorder %v416, %v528
      %vm549 = vcmp.eq.s32.totalorder %v417, %v528
      %vm550 = vcmp.eq.s32.totalorder %v416, %v531
      %vm551 = vcmp.eq.s32.totalorder %v417, %v531
      %vm552 = vcmp.eq.s32.totalorder %v416, %v534
      %vm553 = vcmp.eq.s32.totalorder %v417, %v534
      %vm554 = vcmp.eq.s32.totalorder %v416, %v537
      %vm555 = vcmp.eq.s32.totalorder %v417, %v537
      %vm556 = vcmp.eq.s32.totalorder %v416, %v540
      %vm557 = vcmp.eq.s32.totalorder %v417, %v540
      %vm558 = vcmp.eq.s32.totalorder %v416, %v543
      %vm559 = vcmp.eq.s32.totalorder %v417, %v543
      %v560 = vsel %vm544, 1, 0
      %v561 = vsel %vm545, 1, 0
      %v562 = vsel %vm546, 1, 0
      %v563 = vsel %vm547, 1, 0
      %v564 = vsel %vm548, 1, 0
      %v565 = vsel %vm549, 1, 0
      %v566 = vsel %vm550, 1, 0
      %v567 = vsel %vm551, 1, 0
      %v568 = vsel %vm552, 1, 0
      %v569 = vsel %vm553, 1, 0
      %v570 = vsel %vm554, 1, 0
      %v571 = vsel %vm555, 1, 0
      %v572 = vsel %vm556, 1, 0
      %v573 = vsel %vm557, 1, 0
      %v574 = vsel %vm558, 1, 0
      %v575 = vsel %vm559, 1, 0
      %v576 = vcvt.s32.f32 %v560
      %v577 = vcvt.s32.f32 %v561
      %v578 = vcvt.s32.f32 %v562
      %v579 = vcvt.s32.f32 %v563
      %v580 = vcvt.s32.f32 %v564
      %v581 = vcvt.s32.f32 %v565
      %v582 = vcvt.s32.f32 %v566
      %v583 = vcvt.s32.f32 %v567
      %v584 = vcvt.s32.f32 %v568
      %v585 = vcvt.s32.f32 %v569
      %v586 = vcvt.s32.f32 %v570
      %v587 = vcvt.s32.f32 %v571
      %v588 = vcvt.s32.f32 %v572
      %v589 = vcvt.s32.f32 %v573
      %v590 = vcvt.s32.f32 %v574
      %v591 = vcvt.s32.f32 %v575
      %v593 = vsel %vm423, %v509, 0
      %595 = vmatprep.subr.mxu0 0.0
      %596 = vmatpush1.msra.mxu0 0.0
      %597 = vmatprep.subr.mxu0 0.0
      %598 = vmatpush1.msra.mxu0 0.0
      %599 = vmatprep.subr.mxu0 0.0
      %600 = vmatpush1.msra.mxu0 0.0
      %601 = vmatprep.subr.mxu0 0.0
      %602 = vmatpush1.msra.mxu0 0.0
      %603 = vmatprep.subr.mxu0 0.0
      %604 = vmatpush1.msra.mxu0 0.0
      %605 = vmatprep.subr.mxu0 0.0
      %606 = vmatpush1.msra.mxu0 0.0
      %607 = vmatprep.subr.mxu0 0.0
      %608 = vmatpush1.msra.mxu0 0.0
      %609 = vmatprep.subr.mxu0 0.0
      %610 = vmatpush1.msra.mxu0 0.0
      %611 = vmatprep.subr.mxu0 %v591
      %612 = vmatpush1.msra.mxu0 %v590
      %613 = vmatprep.subr.mxu0 %v589
      %614 = vmatpush1.msra.mxu0 %v588
      %615 = vmatprep.subr.mxu0 %v587
      %616 = vmatpush1.msra.mxu0 %v586
      %617 = vmatprep.subr.mxu0 %v585
      %618 = vmatpush1.msra.mxu0 %v584
      %619 = vmatprep.subr.mxu0 %v583
      %620 = vmatpush1.msra.mxu0 %v582
      %621 = vmatprep.subr.mxu0 %v581
      %622 = vmatpush1.msra.mxu0 %v580
      %623 = vmatprep.subr.mxu0 %v579
      %624 = vmatpush1.msra.mxu0 %v578
      %625 = vmatprep.subr.mxu0 %v577
      %626 = vmatpush1.msra.mxu0 %v576
      %627 = vmatprep.subr.mxu0 0.0
      %628 = vmatpush2.msra.mxu0 0.0
      %629 = vmatprep.subr.mxu0 0.0
      %630 = vmatpush2.msra.mxu0 0.0
      %631 = vmatprep.subr.mxu0 0.0
      %632 = vmatpush2.msra.mxu0 0.0
      %633 = vmatprep.subr.mxu0 0.0
      %634 = vmatpush2.msra.mxu0 0.0
      %635 = vmatprep.subr.mxu0 0.0
      %636 = vmatpush2.msra.mxu0 0.0
      %637 = vmatprep.subr.mxu0 0.0
      %638 = vmatpush2.msra.mxu0 0.0
      %639 = vmatprep.subr.mxu0 0.0
      %640 = vmatpush2.msra.mxu0 0.0
      %641 = vmatprep.subr.mxu0 0.0
      %642 = vmatpush2.msra.mxu0 0.0
      %643 = vmatprep.subr.mxu0 0.0
      %644 = vmatpush2.msra.mxu0 0.0
      %645 = vmatprep.subr.mxu0 0.0
      %646 = vmatpush2.msra.mxu0 0.0
      %647 = vmatprep.subr.mxu0 0.0
      %648 = vmatpush2.msra.mxu0 0.0
      %649 = vmatprep.subr.mxu0 0.0
      %650 = vmatpush2.msra.mxu0 0.0
      %651 = vmatprep.subr.mxu0 0.0
      %652 = vmatpush2.msra.mxu0 0.0
      %653 = vmatprep.subr.mxu0 0.0
      %654 = vmatpush2.msra.mxu0 0.0
      %655 = vmatprep.subr.mxu0 0.0
      %656 = vmatpush2.msra.mxu0 0.0
      %657 = vmatprep.subr.mxu0 0.0
      %658 = vmatpush2.msra.mxu0 0.0
      %659 = vmatprep.mubr.f32.mxu0 0.0
      %660 = vmatmul.mubr.f32.gmra.mxu0 %v593
      %v661 = vpop.f32.mrf.mxu0
      %v662 = vadd.f32 0.0, %v661
      %v663 = vpop.f32.mrf.mxu0
      %v664 = vadd.f32 0.0, %v663
      %665 = vdwg.mxu0
      %v667 = vsel %vm423, %v422, 0
      %669 = vmatprep.subr.mxu0 0.0
      %670 = vmatpush1.msra.mxu0 0.0
      %671 = vmatprep.subr.mxu0 0.0
      %672 = vmatpush1.msra.mxu0 0.0
      %673 = vmatprep.subr.mxu0 0.0
      %674 = vmatpush1.msra.mxu0 0.0
      %675 = vmatprep.subr.mxu0 0.0
      %676 = vmatpush1.msra.mxu0 0.0
      %677 = vmatprep.subr.mxu0 0.0
      %678 = vmatpush1.msra.mxu0 0.0
      %679 = vmatprep.subr.mxu0 0.0
      %680 = vmatpush1.msra.mxu0 0.0
      %681 = vmatprep.subr.mxu0 0.0
      %682 = vmatpush1.msra.mxu0 0.0
      %683 = vmatprep.subr.mxu0 0.0
      %684 = vmatpush1.msra.mxu0 0.0
      %685 = vmatprep.subr.mxu0 %v504
      %686 = vmatpush1.msra.mxu0 %v503
      %687 = vmatprep.subr.mxu0 %v502
      %688 = vmatpush1.msra.mxu0 %v501
      %689 = vmatprep.subr.mxu0 %v500
      %690 = vmatpush1.msra.mxu0 %v499
      %691 = vmatprep.subr.mxu0 %v498
      %692 = vmatpush1.msra.mxu0 %v497
      %693 = vmatprep.subr.mxu0 %v496
      %694 = vmatpush1.msra.mxu0 %v495
      %695 = vmatprep.subr.mxu0 %v494
      %696 = vmatpush1.msra.mxu0 %v493
      %697 = vmatprep.subr.mxu0 %v492
      %698 = vmatpush1.msra.mxu0 %v491
      %699 = vmatprep.subr.mxu0 %v490
      %700 = vmatpush1.msra.mxu0 %v489
      %701 = vmatprep.subr.mxu0 0.0
      %702 = vmatpush2.msra.mxu0 0.0
      %703 = vmatprep.subr.mxu0 0.0
      %704 = vmatpush2.msra.mxu0 0.0
      %705 = vmatprep.subr.mxu0 0.0
      %706 = vmatpush2.msra.mxu0 0.0
      %707 = vmatprep.subr.mxu0 0.0
      %708 = vmatpush2.msra.mxu0 0.0
      %709 = vmatprep.subr.mxu0 0.0
      %710 = vmatpush2.msra.mxu0 0.0
      %711 = vmatprep.subr.mxu0 0.0
      %712 = vmatpush2.msra.mxu0 0.0
      %713 = vmatprep.subr.mxu0 0.0
      %714 = vmatpush2.msra.mxu0 0.0
      %715 = vmatprep.subr.mxu0 0.0
      %716 = vmatpush2.msra.mxu0 0.0
      %717 = vmatprep.subr.mxu0 0.0
      %718 = vmatpush2.msra.mxu0 0.0
      %719 = vmatprep.subr.mxu0 0.0
      %720 = vmatpush2.msra.mxu0 0.0
      %721 = vmatprep.subr.mxu0 0.0
      %722 = vmatpush2.msra.mxu0 0.0
      %723 = vmatprep.subr.mxu0 0.0
      %724 = vmatpush2.msra.mxu0 0.0
      %725 = vmatprep.subr.mxu0 0.0
      %726 = vmatpush2.msra.mxu0 0.0
      %727 = vmatprep.subr.mxu0 0.0
      %728 = vmatpush2.msra.mxu0 0.0
      %729 = vmatprep.subr.mxu0 0.0
      %730 = vmatpush2.msra.mxu0 0.0
      %731 = vmatprep.subr.mxu0 0.0
      %732 = vmatpush2.msra.mxu0 0.0
      %733 = vmatprep.mubr.f32.mxu0 0.0
      %734 = vmatmul.mubr.f32.gmra.mxu0 %v667
      %v735 = vpop.f32.mrf.mxu0
      %v736 = vadd.f32 %v662, %v735
      %v737 = vpop.f32.mrf.mxu0
      %v738 = vadd.f32 %v664, %v737
      %739 = vdwg.mxu0
      %v740 = vlaneseq
      %v741 = vshrl.u32 %v740, 7
      %v742 = vsub.s32 2, %v741
      %v743 = vrot.slane %v414, %v742
      %v744 = vmul.f32 %v743, %v386
      %745 = vst.msk [vmem:[%s288 + $0x10] sm:$0xff] %vm423, %v744
      %s746 = scalar_lea.vmem %s277, 128
      %v747 = vld [vmem:[%s746] sm:$0xff]
      %v748 = vld [vmem:[%s746 + $0x8] sm:$0xff]
      %v749 = vld [vmem:[%s746 + $0x10] sm:$0xff]
      %v750 = vld [vmem:[%s746 + $0x18] sm:$0xff]
      %v751 = vld [vmem:[%s746 + $0x20] sm:$0xff]
      %v752 = vld [vmem:[%s746 + $0x28] sm:$0xff]
      %v753 = vld [vmem:[%s746 + $0x30] sm:$0xff]
      %v754 = vld [vmem:[%s746 + $0x38] sm:$0xff]
      %755 = vset.pattern.permute.xlu0 0
      %756 = vperm.xlu0 %755, %v747
      %v757 = vpop.permute.xlu0 %756
      %758 = vset.pattern.permute.xlu0 0
      %759 = vperm.xlu0 %758, %v748
      %v760 = vpop.permute.xlu0 %759
      %761 = vset.pattern.permute.xlu0 0
      %762 = vperm.xlu0 %761, %v749
      %v763 = vpop.permute.xlu0 %762
      %764 = vset.pattern.permute.xlu0 0
      %765 = vperm.xlu0 %764, %v750
      %v766 = vpop.permute.xlu0 %765
      %767 = vset.pattern.permute.xlu0 0
      %768 = vperm.xlu0 %767, %v751
      %v769 = vpop.permute.xlu0 %768
      %770 = vset.pattern.permute.xlu0 0
      %771 = vperm.xlu0 %770, %v752
      %v772 = vpop.permute.xlu0 %771
      %773 = vset.pattern.permute.xlu0 0
      %774 = vperm.xlu0 %773, %v753
      %v775 = vpop.permute.xlu0 %774
      %776 = vset.pattern.permute.xlu0 0
      %777 = vperm.xlu0 %776, %v754
      %v778 = vpop.permute.xlu0 %777
      %vm779 = vcmp.eq.s32.totalorder %v416, %v757
      %vm780 = vcmp.eq.s32.totalorder %v417, %v757
      %vm781 = vcmp.eq.s32.totalorder %v416, %v760
      %vm782 = vcmp.eq.s32.totalorder %v417, %v760
      %vm783 = vcmp.eq.s32.totalorder %v416, %v763
      %vm784 = vcmp.eq.s32.totalorder %v417, %v763
      %vm785 = vcmp.eq.s32.totalorder %v416, %v766
      %vm786 = vcmp.eq.s32.totalorder %v417, %v766
      %vm787 = vcmp.eq.s32.totalorder %v416, %v769
      %vm788 = vcmp.eq.s32.totalorder %v417, %v769
      %vm789 = vcmp.eq.s32.totalorder %v416, %v772
      %vm790 = vcmp.eq.s32.totalorder %v417, %v772
      %vm791 = vcmp.eq.s32.totalorder %v416, %v775
      %vm792 = vcmp.eq.s32.totalorder %v417, %v775
      %vm793 = vcmp.eq.s32.totalorder %v416, %v778
      %vm794 = vcmp.eq.s32.totalorder %v417, %v778
      %v795 = vsel %vm779, 1, 0
      %v796 = vsel %vm780, 1, 0
      %v797 = vsel %vm781, 1, 0
      %v798 = vsel %vm782, 1, 0
      %v799 = vsel %vm783, 1, 0
      %v800 = vsel %vm784, 1, 0
      %v801 = vsel %vm785, 1, 0
      %v802 = vsel %vm786, 1, 0
      %v803 = vsel %vm787, 1, 0
      %v804 = vsel %vm788, 1, 0
      %v805 = vsel %vm789, 1, 0
      %v806 = vsel %vm790, 1, 0
      %v807 = vsel %vm791, 1, 0
      %v808 = vsel %vm792, 1, 0
      %v809 = vsel %vm793, 1, 0
      %v810 = vsel %vm794, 1, 0
      %v811 = vcvt.s32.f32 %v795
      %v812 = vcvt.s32.f32 %v796
      %v813 = vcvt.s32.f32 %v797
      %v814 = vcvt.s32.f32 %v798
      %v815 = vcvt.s32.f32 %v799
      %v816 = vcvt.s32.f32 %v800
      %v817 = vcvt.s32.f32 %v801
      %v818 = vcvt.s32.f32 %v802
      %v819 = vcvt.s32.f32 %v803
      %v820 = vcvt.s32.f32 %v804
      %v821 = vcvt.s32.f32 %v805
      %v822 = vcvt.s32.f32 %v806
      %v823 = vcvt.s32.f32 %v807
      %v824 = vcvt.s32.f32 %v808
      %v825 = vcvt.s32.f32 %v809
      %v826 = vcvt.s32.f32 %v810
      %v828 = vsel %vm423, %v744, 0
      %830 = vmatprep.subr.mxu0 0.0
      %831 = vmatpush1.msra.mxu0 0.0
      %832 = vmatprep.subr.mxu0 0.0
      %833 = vmatpush1.msra.mxu0 0.0
      %834 = vmatprep.subr.mxu0 0.0
      %835 = vmatpush1.msra.mxu0 0.0
      %836 = vmatprep.subr.mxu0 0.0
      %837 = vmatpush1.msra.mxu0 0.0
      %838 = vmatprep.subr.mxu0 0.0
      %839 = vmatpush1.msra.mxu0 0.0
      %840 = vmatprep.subr.mxu0 0.0
      %841 = vmatpush1.msra.mxu0 0.0
      %842 = vmatprep.subr.mxu0 0.0
      %843 = vmatpush1.msra.mxu0 0.0
      %844 = vmatprep.subr.mxu0 0.0
      %845 = vmatpush1.msra.mxu0 0.0
      %846 = vmatprep.subr.mxu0 %v826
      %847 = vmatpush1.msra.mxu0 %v825
      %848 = vmatprep.subr.mxu0 %v824
      %849 = vmatpush1.msra.mxu0 %v823
      %850 = vmatprep.subr.mxu0 %v822
      %851 = vmatpush1.msra.mxu0 %v821
      %852 = vmatprep.subr.mxu0 %v820
      %853 = vmatpush1.msra.mxu0 %v819
      %854 = vmatprep.subr.mxu0 %v818
      %855 = vmatpush1.msra.mxu0 %v817
      %856 = vmatprep.subr.mxu0 %v816
      %857 = vmatpush1.msra.mxu0 %v815
      %858 = vmatprep.subr.mxu0 %v814
      %859 = vmatpush1.msra.mxu0 %v813
      %860 = vmatprep.subr.mxu0 %v812
      %861 = vmatpush1.msra.mxu0 %v811
      %862 = vmatprep.subr.mxu0 0.0
      %863 = vmatpush2.msra.mxu0 0.0
      %864 = vmatprep.subr.mxu0 0.0
      %865 = vmatpush2.msra.mxu0 0.0
      %866 = vmatprep.subr.mxu0 0.0
      %867 = vmatpush2.msra.mxu0 0.0
      %868 = vmatprep.subr.mxu0 0.0
      %869 = vmatpush2.msra.mxu0 0.0
      %870 = vmatprep.subr.mxu0 0.0
      %871 = vmatpush2.msra.mxu0 0.0
      %872 = vmatprep.subr.mxu0 0.0
      %873 = vmatpush2.msra.mxu0 0.0
      %874 = vmatprep.subr.mxu0 0.0
      %875 = vmatpush2.msra.mxu0 0.0
      %876 = vmatprep.subr.mxu0 0.0
      %877 = vmatpush2.msra.mxu0 0.0
      %878 = vmatprep.subr.mxu0 0.0
      %879 = vmatpush2.msra.mxu0 0.0
      %880 = vmatprep.subr.mxu0 0.0
      %881 = vmatpush2.msra.mxu0 0.0
      %882 = vmatprep.subr.mxu0 0.0
      %883 = vmatpush2.msra.mxu0 0.0
      %884 = vmatprep.subr.mxu0 0.0
      %885 = vmatpush2.msra.mxu0 0.0
      %886 = vmatprep.subr.mxu0 0.0
      %887 = vmatpush2.msra.mxu0 0.0
      %888 = vmatprep.subr.mxu0 0.0
      %889 = vmatpush2.msra.mxu0 0.0
      %890 = vmatprep.subr.mxu0 0.0
      %891 = vmatpush2.msra.mxu0 0.0
      %892 = vmatprep.subr.mxu0 0.0
      %893 = vmatpush2.msra.mxu0 0.0
      %894 = vmatprep.mubr.f32.mxu0 0.0
      %895 = vmatmul.mubr.f32.gmra.mxu0 %v828
      %v896 = vpop.f32.mrf.mxu0
      %v897 = vadd.f32 0.0, %v896
      %v898 = vpop.f32.mrf.mxu0
      %v899 = vadd.f32 0.0, %v898
      %900 = vdwg.mxu0
      %v901 = vadd.f32 %v736, %v897
      %v902 = vadd.f32 %v738, %v899
      %v903 = vlaneseq
      %v904 = vshrl.u32 %v903, 7
      %v905 = vsub.s32 3, %v904
      %v906 = vrot.slane %v414, %v905
      %v907 = vmul.f32 %v906, %v386
      %908 = vst.msk [vmem:[%s288 + $0x18] sm:$0xff] %vm423, %v907
      %s909 = scalar_lea.vmem %s277, 192
      %v910 = vld [vmem:[%s909] sm:$0xff]
      %v911 = vld [vmem:[%s909 + $0x8] sm:$0xff]
      %v912 = vld [vmem:[%s909 + $0x10] sm:$0xff]
      %v913 = vld [vmem:[%s909 + $0x18] sm:$0xff]
      %v914 = vld [vmem:[%s909 + $0x20] sm:$0xff]
      %v915 = vld [vmem:[%s909 + $0x28] sm:$0xff]
      %v916 = vld [vmem:[%s909 + $0x30] sm:$0xff]
      %v917 = vld [vmem:[%s909 + $0x38] sm:$0xff]
      %918 = vset.pattern.permute.xlu0 0
      %919 = vperm.xlu0 %918, %v910
      %v920 = vpop.permute.xlu0 %919
      %921 = vset.pattern.permute.xlu0 0
      %922 = vperm.xlu0 %921, %v911
      %v923 = vpop.permute.xlu0 %922
      %924 = vset.pattern.permute.xlu0 0
      %925 = vperm.xlu0 %924, %v912
      %v926 = vpop.permute.xlu0 %925
      %927 = vset.pattern.permute.xlu0 0
      %928 = vperm.xlu0 %927, %v913
      %v929 = vpop.permute.xlu0 %928
      %930 = vset.pattern.permute.xlu0 0
      %931 = vperm.xlu0 %930, %v914
      %v932 = vpop.permute.xlu0 %931
      %933 = vset.pattern.permute.xlu0 0
      %934 = vperm.xlu0 %933, %v915
      %v935 = vpop.permute.xlu0 %934
      %936 = vset.pattern.permute.xlu0 0
      %937 = vperm.xlu0 %936, %v916
      %v938 = vpop.permute.xlu0 %937
      %939 = vset.pattern.permute.xlu0 0
      %940 = vperm.xlu0 %939, %v917
      %v941 = vpop.permute.xlu0 %940
      %vm942 = vcmp.eq.s32.totalorder %v416, %v920
      %vm943 = vcmp.eq.s32.totalorder %v417, %v920
      %vm944 = vcmp.eq.s32.totalorder %v416, %v923
      %vm945 = vcmp.eq.s32.totalorder %v417, %v923
      %vm946 = vcmp.eq.s32.totalorder %v416, %v926
      %vm947 = vcmp.eq.s32.totalorder %v417, %v926
      %vm948 = vcmp.eq.s32.totalorder %v416, %v929
      %vm949 = vcmp.eq.s32.totalorder %v417, %v929
      %vm950 = vcmp.eq.s32.totalorder %v416, %v932
      %vm951 = vcmp.eq.s32.totalorder %v417, %v932
      %vm952 = vcmp.eq.s32.totalorder %v416, %v935
      %vm953 = vcmp.eq.s32.totalorder %v417, %v935
      %vm954 = vcmp.eq.s32.totalorder %v416, %v938
      %vm955 = vcmp.eq.s32.totalorder %v417, %v938
      %vm956 = vcmp.eq.s32.totalorder %v416, %v941
      %vm957 = vcmp.eq.s32.totalorder %v417, %v941
      %v958 = vsel %vm942, 1, 0
      %v959 = vsel %vm943, 1, 0
      %v960 = vsel %vm944, 1, 0
      %v961 = vsel %vm945, 1, 0
      %v962 = vsel %vm946, 1, 0
      %v963 = vsel %vm947, 1, 0
      %v964 = vsel %vm948, 1, 0
      %v965 = vsel %vm949, 1, 0
      %v966 = vsel %vm950, 1, 0
      %v967 = vsel %vm951, 1, 0
      %v968 = vsel %vm952, 1, 0
      %v969 = vsel %vm953, 1, 0
      %v970 = vsel %vm954, 1, 0
      %v971 = vsel %vm955, 1, 0
      %v972 = vsel %vm956, 1, 0
      %v973 = vsel %vm957, 1, 0
      %v974 = vcvt.s32.f32 %v958
      %v975 = vcvt.s32.f32 %v959
      %v976 = vcvt.s32.f32 %v960
      %v977 = vcvt.s32.f32 %v961
      %v978 = vcvt.s32.f32 %v962
      %v979 = vcvt.s32.f32 %v963
      %v980 = vcvt.s32.f32 %v964
      %v981 = vcvt.s32.f32 %v965
      %v982 = vcvt.s32.f32 %v966
      %v983 = vcvt.s32.f32 %v967
      %v984 = vcvt.s32.f32 %v968
      %v985 = vcvt.s32.f32 %v969
      %v986 = vcvt.s32.f32 %v970
      %v987 = vcvt.s32.f32 %v971
      %v988 = vcvt.s32.f32 %v972
      %v989 = vcvt.s32.f32 %v973
      %v991 = vsel %vm423, %v907, 0
      %993 = vmatprep.subr.mxu0 0.0
      %994 = vmatpush1.msra.mxu0 0.0
      %995 = vmatprep.subr.mxu0 0.0
      %996 = vmatpush1.msra.mxu0 0.0
      %997 = vmatprep.subr.mxu0 0.0
      %998 = vmatpush1.msra.mxu0 0.0
      %999 = vmatprep.subr.mxu0 0.0
      %1000 = vmatpush1.msra.mxu0 0.0
      %1001 = vmatprep.subr.mxu0 0.0
      %1002 = vmatpush1.msra.mxu0 0.0
      %1003 = vmatprep.subr.mxu0 0.0
      %1004 = vmatpush1.msra.mxu0 0.0
      %1005 = vmatprep.subr.mxu0 0.0
      %1006 = vmatpush1.msra.mxu0 0.0
      %1007 = vmatprep.subr.mxu0 0.0
      %1008 = vmatpush1.msra.mxu0 0.0
      %1009 = vmatprep.subr.mxu0 %v989
      %1010 = vmatpush1.msra.mxu0 %v988
      %1011 = vmatprep.subr.mxu0 %v987
      %1012 = vmatpush1.msra.mxu0 %v986
      %1013 = vmatprep.subr.mxu0 %v985
      %1014 = vmatpush1.msra.mxu0 %v984
      %1015 = vmatprep.subr.mxu0 %v983
      %1016 = vmatpush1.msra.mxu0 %v982
      %1017 = vmatprep.subr.mxu0 %v981
      %1018 = vmatpush1.msra.mxu0 %v980
      %1019 = vmatprep.subr.mxu0 %v979
      %1020 = vmatpush1.msra.mxu0 %v978
      %1021 = vmatprep.subr.mxu0 %v977
      %1022 = vmatpush1.msra.mxu0 %v976
      %1023 = vmatprep.subr.mxu0 %v975
      %1024 = vmatpush1.msra.mxu0 %v974
      %1025 = vmatprep.subr.mxu0 0.0
      %1026 = vmatpush2.msra.mxu0 0.0
      %1027 = vmatprep.subr.mxu0 0.0
      %1028 = vmatpush2.msra.mxu0 0.0
      %1029 = vmatprep.subr.mxu0 0.0
      %1030 = vmatpush2.msra.mxu0 0.0
      %1031 = vmatprep.subr.mxu0 0.0
      %1032 = vmatpush2.msra.mxu0 0.0
      %1033 = vmatprep.subr.mxu0 0.0
      %1034 = vmatpush2.msra.mxu0 0.0
      %1035 = vmatprep.subr.mxu0 0.0
      %1036 = vmatpush2.msra.mxu0 0.0
      %1037 = vmatprep.subr.mxu0 0.0
      %1038 = vmatpush2.msra.mxu0 0.0
      %1039 = vmatprep.subr.mxu0 0.0
      %1040 = vmatpush2.msra.mxu0 0.0
      %1041 = vmatprep.subr.mxu0 0.0
      %1042 = vmatpush2.msra.mxu0 0.0
      %1043 = vmatprep.subr.mxu0 0.0
      %1044 = vmatpush2.msra.mxu0 0.0
      %1045 = vmatprep.subr.mxu0 0.0
      %1046 = vmatpush2.msra.mxu0 0.0
      %1047 = vmatprep.subr.mxu0 0.0
      %1048 = vmatpush2.msra.mxu0 0.0
      %1049 = vmatprep.subr.mxu0 0.0
      %1050 = vmatpush2.msra.mxu0 0.0
      %1051 = vmatprep.subr.mxu0 0.0
      %1052 = vmatpush2.msra.mxu0 0.0
      %1053 = vmatprep.subr.mxu0 0.0
      %1054 = vmatpush2.msra.mxu0 0.0
      %1055 = vmatprep.subr.mxu0 0.0
      %1056 = vmatpush2.msra.mxu0 0.0
      %1057 = vmatprep.mubr.f32.mxu0 0.0
      %1058 = vmatmul.mubr.f32.gmra.mxu0 %v991
      %v1059 = vpop.f32.mrf.mxu0
      %v1060 = vadd.f32 0.0, %v1059
      %v1061 = vpop.f32.mrf.mxu0
      %v1062 = vadd.f32 0.0, %v1061
      %1063 = vdwg.mxu0
      %v1064 = vadd.f32 %v901, %v1060
      %v1065 = vadd.f32 %v902, %v1062
      %1066 = vst [vmem:[%s282] sm:$0xff] %v1064
      %1067 = vst [vmem:[%s282 + $0x8] sm:$0xff] %v1065
      %s1068 = smul.u32 2, %s18
      %p1069 = scmp.lt.s32.totalorder %s1068, 5
      %s1070 = scalar_select %p1069, %s1068, 5
      %s1071 = smul.addr %s1070, 8
      %s1072 = scalar_lea.vmem %s4, %s1071
      %p1073 = scmp.lt.s32.totalorder %s18, 2
      %s1074 = scalar_select %p1073, %s18, 2
      %s1075 = smul.addr %s1074, 4
      %s1076 = smul.addr %s1075, 8
      %s1077 = scalar_lea.vmem %s5, %s1076
      %p1078 = scmp.lt.s32.totalorder %s18, 2
      %s1079 = scalar_select %p1078, %s18, 2
      %s1080 = smul.addr %s1079, 4
      %s1081 = scalar_lea.vmem %s6, %s1080
      // Predicated region
      $region37: #{run.2} parent=35 // pred_check
        %p1082 = pneg %p130
      $region38: #{run.2} parent=35 // pred_check_branch
        %1084 = sbr.rel (%p1082) target = $region40
      $region39: #{run.2} parent=35 // pred_region
        %s1085 = smul.u32 2, %s18
      $region40: #{run.2} parent=35 // pred_fallthru
        _
      // Predicated region
      $region41: #{run.2} parent=35 // pred_check
        %p1086 = pneg %p156
      $region42: #{run.2} parent=35 // pred_check_branch
        %1088 = sbr.rel (%p1086) target = $region44
      $region43: #{run.2} parent=35 // pred_region
        _
      $region44: #{run.2} parent=35 // pred_fallthru
        _
      // Predicated region
      $region45: #{run.2} parent=35 // pred_check
        %p1089 = pneg %p182
      $region46: #{run.2} parent=35 // pred_check_branch
        %1091 = sbr.rel (%p1089) target = $region48
      $region47: #{run.2} parent=35 // pred_region
        _
      $region48: #{run.2} parent=35 // pred_fallthru
        _
    $region36: #{run.2} parent=5 // pred_fallthru
      _
    %p1092 = scmp.le.s32.totalorder 2, %s13
    // Predicated region
    $region49: #{run.2} parent=5 // pred_check
      %p1093 = pneg %p1092
    $region50: #{run.2} parent=5 // pred_check_branch
      %1095 = sbr.rel (%p1093) target = $region52
    $region51: #{run.2} parent=5 // pred_region
      %s1096 = ssub.s32 %s13, 2
      // Predicated region
      $region53: #{run.2} parent=51 // pred_check
        %p1097 = pneg %p136
      $region54: #{run.2} parent=51 // pred_check_branch
        %1099 = sbr.rel (%p1097) target = $region56
      $region55: #{run.2} parent=51 // pred_region
        %s1100 = smul.u32 2, %s19
        %p1101 = scmp.lt.s32.totalorder %s1100, 5
        %s1102 = scalar_select %p1101, %s1100, 5
        %s1103 = smul.addr %s1102, 8
        %s1104 = scalar_lea.vmem %s4, %s1103
      $region56: #{run.2} parent=51 // pred_fallthru
        _
      // Predicated region
      $region57: #{run.2} parent=51 // pred_check
        %p1105 = pneg %p162
      $region58: #{run.2} parent=51 // pred_check_branch
        %1107 = sbr.rel (%p1105) target = $region60
      $region59: #{run.2} parent=51 // pred_region
        %p1108 = scmp.lt.s32.totalorder %s19, 2
        %s1109 = scalar_select %p1108, %s19, 2
        %s1110 = smul.addr %s1109, 4
        %s1111 = smul.addr %s1110, 8
        %s1112 = scalar_lea.vmem %s5, %s1111
      $region60: #{run.2} parent=51 // pred_fallthru
        _
      // Predicated region
      $region61: #{run.2} parent=51 // pred_check
        %p1113 = pneg %p188
      $region62: #{run.2} parent=51 // pred_check_branch
        %1115 = sbr.rel (%p1113) target = $region64
      $region63: #{run.2} parent=51 // pred_region
        %p1116 = scmp.lt.s32.totalorder %s19, 2
        %s1117 = scalar_select %p1116, %s19, 2
        %s1118 = smul.addr %s1117, 4
        %s1119 = scalar_lea.vmem %s6, %s1118
      $region64: #{run.2} parent=51 // pred_fallthru
        _
    $region52: #{run.2} parent=5 // pred_fallthru
      _
  $region6: #{run.2} parent=0 // loop_footer
    %s17 = sadd.s32 1, %s13
  $region7: #{run.2} parent=0 // loop_footer_branch
    %12 = sbr.rel target = $region3
  $region8: #{run.2} parent=0 // loop_exit
    _

// kernel: run.3
$region0: #{run.3}
  #allocation0 [shape = 'u32[]', space=smem, size = 0x4, offset = 0x4, fixed_abs, tag = 'smem constant byte address 0x4 - core index']
  #allocation1 [shape = 'u32[144,128]{1,0:T(1,128)}', space=vmem, size = 0x12000, scoped, tag = 'internal scratch']
  %s0 = inlined_call_operand.vmem [shape: f32[8,768], index: 0, kind: input, shape index: {}]
  %s1 = inlined_call_operand.vmem [shape: f32[768,768], index: 1, kind: input, shape index: {}]
  %s2 = inlined_call_operand.vmem [shape: f32[2,8], index: 2, kind: input, shape index: {}]
  %s3 = inlined_call_operand.vmem [shape: f32[2,1], index: 3, kind: input, shape index: {}]
  %s4 = inlined_call_operand.vmem [shape: f32[32,128], index: 4, kind: input, shape index: {}]
  %s5 = inlined_call_operand.vmem [shape: f32[2,32], index: 5, kind: input, shape index: {}]
  %s6 = inlined_call_operand.vmem [shape: f32[2,1], index: 6, kind: input, shape index: {}]
  %s7 = inlined_call_operand.vmem [shape: f32[2,768], index: 7, kind: output, shape index: {0}]
  %s8 = inlined_call_operand.vmem [shape: f32[2,128], index: 8, kind: output, shape index: {1}]
  %9 = xla_tuple %s7, %s8
  %s10 = sld [smem:[#allocation0]]
  $region46: #{run.3} parent=0
    _
  %s12 = ssub.s32 1, %s10
  %s13 = scalar_select 0, %s12, %s10
  // Predicated region
  $region2: #{run.3} parent=0 // pred_check
    _
  $region3: #{run.3} parent=0 // pred_check_branch
    %15 = sbr.rel (0) target = $region5
  $region4: #{run.3} parent=0 // pred_region
    _
  $region5: #{run.3} parent=0 // pred_fallthru
    _
  // Predicated region
  $region6: #{run.3} parent=0 // pred_check
    _
  $region7: #{run.3} parent=0 // pred_check_branch
    %17 = sbr.rel (0) target = $region9
  $region8: #{run.3} parent=0 // pred_region
    _
  $region9: #{run.3} parent=0 // pred_fallthru
    _
  // Predicated region
  $region10: #{run.3} parent=0 // pred_check
    _
  $region11: #{run.3} parent=0 // pred_check_branch
    %19 = sbr.rel (0) target = $region13
  $region12: #{run.3} parent=0 // pred_region
    _
  $region13: #{run.3} parent=0 // pred_fallthru
    _
  // Predicated region
  $region14: #{run.3} parent=0 // pred_check
    _
  $region15: #{run.3} parent=0 // pred_check_branch
    %21 = sbr.rel (0) target = $region17
  $region16: #{run.3} parent=0 // pred_region
    _
  $region17: #{run.3} parent=0 // pred_fallthru
    _
  // Predicated region
  $region18: #{run.3} parent=0 // pred_check
    _
  $region19: #{run.3} parent=0 // pred_check_branch
    %23 = sbr.rel (0) target = $region21
  $region20: #{run.3} parent=0 // pred_region
    _
  $region21: #{run.3} parent=0 // pred_fallthru
    _
  // Predicated region
  $region22: #{run.3} parent=0 // pred_check
    _
  $region23: #{run.3} parent=0 // pred_check_branch
    %25 = sbr.rel (0) target = $region25
  $region24: #{run.3} parent=0 // pred_region
    _
  $region25: #{run.3} parent=0 // pred_fallthru
    _
  // Predicated region
  $region26: #{run.3} parent=0 // pred_check
    _
  $region27: #{run.3} parent=0 // pred_check_branch
    %27 = sbr.rel (0) target = $region29
  $region28: #{run.3} parent=0 // pred_region
    _
  $region29: #{run.3} parent=0 // pred_fallthru
    _
  %v28 = vld [vmem:[%s0] sm:$0xff]
  %v29 = vld [vmem:[%s0 + $0x8] sm:$0xff]
  %v30 = vld [vmem:[%s0 + $0x10] sm:$0xff]
  %v31 = vld [vmem:[%s0 + $0x18] sm:$0xff]
  %v32 = vld [vmem:[%s0 + $0x20] sm:$0xff]
  %v33 = vld [vmem:[%s0 + $0x28] sm:$0xff]
  %v34 = vld [vmem:[%s1] sm:$0xff]
  %v35 = vld [vmem:[%s1 + $0x8] sm:$0xff]
  %v36 = vld [vmem:[%s1 + $0x10] sm:$0xff]
  %v37 = vld [vmem:[%s1 + $0x18] sm:$0xff]
  %v38 = vld [vmem:[%s1 + $0x20] sm:$0xff]
  %v39 = vld [vmem:[%s1 + $0x28] sm:$0xff]
  %v40 = vld [vmem:[%s1 + $0x30] sm:$0xff]
  %v41 = vld [vmem:[%s1 + $0x38] sm:$0xff]
  %v42 = vld [vmem:[%s1 + $0x40] sm:$0xff]
  %v43 = vld [vmem:[%s1 + $0x48] sm:$0xff]
  %v44 = vld [vmem:[%s1 + $0x50] sm:$0xff]
  %v45 = vld [vmem:[%s1 + $0x58] sm:$0xff]
  %v46 = vld [vmem:[%s1 + $0x60] sm:$0xff]
  %v47 = vld [vmem:[%s1 + $0x68] sm:$0xff]
  %v48 = vld [vmem:[%s1 + $0x70] sm:$0xff]
  %v49 = vld [vmem:[%s1 + $0x78] sm:$0xff]
  %v50 = vld [vmem:[%s1 + $0x80] sm:$0xff]
  %v51 = vld [vmem:[%s1 + $0x88] sm:$0xff]
  %v52 = vld [vmem:[%s1 + $0x90] sm:$0xff]
  %v53 = vld [vmem:[%s1 + $0x98] sm:$0xff]
  %v54 = vld [vmem:[%s1 + $0xa0] sm:$0xff]
  %v55 = vld [vmem:[%s1 + $0xa8] sm:$0xff]
  %v56 = vld [vmem:[%s1 + $0xb0] sm:$0xff]
  %v57 = vld [vmem:[%s1 + $0xb8] sm:$0xff]
  %v58 = vld [vmem:[%s1 + $0xc0] sm:$0xff]
  %v59 = vld [vmem:[%s1 + $0xc8] sm:$0xff]
  %v60 = vld [vmem:[%s1 + $0xd0] sm:$0xff]
  %v61 = vld [vmem:[%s1 + $0xd8] sm:$0xff]
  %v62 = vld [vmem:[%s1 + $0xe0] sm:$0xff]
  %v63 = vld [vmem:[%s1 + $0xe8] sm:$0xff]
  %v64 = vld [vmem:[%s1 + $0xf0] sm:$0xff]
  %v65 = vld [vmem:[%s1 + $0xf8] sm:$0xff]
  %v66 = vld [vmem:[%s1 + $0x100] sm:$0xff]
  %v67 = vld [vmem:[%s1 + $0x108] sm:$0xff]
  %v68 = vld [vmem:[%s1 + $0x110] sm:$0xff]
  %v69 = vld [vmem:[%s1 + $0x118] sm:$0xff]
  %v70 = vld [vmem:[%s1 + $0x120] sm:$0xff]
  %v71 = vld [vmem:[%s1 + $0x128] sm:$0xff]
  %v72 = vld [vmem:[%s1 + $0x130] sm:$0xff]
  %v73 = vld [vmem:[%s1 + $0x138] sm:$0xff]
  %v74 = vld [vmem:[%s1 + $0x140] sm:$0xff]
  %v75 = vld [vmem:[%s1 + $0x148] sm:$0xff]
  %v76 = vld [vmem:[%s1 + $0x150] sm:$0xff]
  %v77 = vld [vmem:[%s1 + $0x158] sm:$0xff]
  %v78 = vld [vmem:[%s1 + $0x160] sm:$0xff]
  %v79 = vld [vmem:[%s1 + $0x168] sm:$0xff]
  %v80 = vld [vmem:[%s1 + $0x170] sm:$0xff]
  %v81 = vld [vmem:[%s1 + $0x178] sm:$0xff]
  %v82 = vld [vmem:[%s1 + $0x180] sm:$0xff]
  %v83 = vld [vmem:[%s1 + $0x188] sm:$0xff]
  %v84 = vld [vmem:[%s1 + $0x190] sm:$0xff]
  %v85 = vld [vmem:[%s1 + $0x198] sm:$0xff]
  %v86 = vld [vmem:[%s1 + $0x1a0] sm:$0xff]
  %v87 = vld [vmem:[%s1 + $0x1a8] sm:$0xff]
  %v88 = vld [vmem:[%s1 + $0x1b0] sm:$0xff]
  %v89 = vld [vmem:[%s1 + $0x1b8] sm:$0xff]
  %v90 = vld [vmem:[%s1 + $0x1c0] sm:$0xff]
  %v91 = vld [vmem:[%s1 + $0x1c8] sm:$0xff]
  %v92 = vld [vmem:[%s1 + $0x1d0] sm:$0xff]
  %v93 = vld [vmem:[%s1 + $0x1d8] sm:$0xff]
  %v94 = vld [vmem:[%s1 + $0x1e0] sm:$0xff]
  %v95 = vld [vmem:[%s1 + $0x1e8] sm:$0xff]
  %v96 = vld [vmem:[%s1 + $0x1f0] sm:$0xff]
  %v97 = vld [vmem:[%s1 + $0x1f8] sm:$0xff]
  %v98 = vld [vmem:[%s1 + $0x200] sm:$0xff]
  %v99 = vld [vmem:[%s1 + $0x208] sm:$0xff]
  %v100 = vld [vmem:[%s1 + $0x210] sm:$0xff]
  %v101 = vld [vmem:[%s1 + $0x218] sm:$0xff]
  %v102 = vld [vmem:[%s1 + $0x220] sm:$0xff]
  %v103 = vld [vmem:[%s1 + $0x228] sm:$0xff]
  %v104 = vld [vmem:[%s1 + $0x230] sm:$0xff]
  %v105 = vld [vmem:[%s1 + $0x238] sm:$0xff]
  %v106 = vld [vmem:[%s1 + $0x240] sm:$0xff]
  %v107 = vld [vmem:[%s1 + $0x248] sm:$0xff]
  %v108 = vld [vmem:[%s1 + $0x250] sm:$0xff]
  %v109 = vld [vmem:[%s1 + $0x258] sm:$0xff]
  %v110 = vld [vmem:[%s1 + $0x260] sm:$0xff]
  %v111 = vld [vmem:[%s1 + $0x268] sm:$0xff]
  %v112 = vld [vmem:[%s1 + $0x270] sm:$0xff]
  %v113 = vld [vmem:[%s1 + $0x278] sm:$0xff]
  %v114 = vld [vmem:[%s1 + $0x280] sm:$0xff]
  %v115 = vld [vmem:[%s1 + $0x288] sm:$0xff]
  %v116 = vld [vmem:[%s1 + $0x290] sm:$0xff]
  %v117 = vld [vmem:[%s1 + $0x298] sm:$0xff]
  %v118 = vld [vmem:[%s1 + $0x2a0] sm:$0xff]
  %v119 = vld [vmem:[%s1 + $0x2a8] sm:$0xff]
  %v120 = vld [vmem:[%s1 + $0x2b0] sm:$0xff]
  %v121 = vld [vmem:[%s1 + $0x2b8] sm:$0xff]
  %v122 = vld [vmem:[%s1 + $0x2c0] sm:$0xff]
  %v123 = vld [vmem:[%s1 + $0x2c8] sm:$0xff]
  %v124 = vld [vmem:[%s1 + $0x2d0] sm:$0xff]
  %v125 = vld [vmem:[%s1 + $0x2d8] sm:$0xff]
  %v126 = vld [vmem:[%s1 + $0x2e0] sm:$0xff]
  %v127 = vld [vmem:[%s1 + $0x2e8] sm:$0xff]
  %v128 = vld [vmem:[%s1 + $0x2f0] sm:$0xff]
  %v129 = vld [vmem:[%s1 + $0x2f8] sm:$0xff]
  %v130 = vld [vmem:[%s1 + $0x300] sm:$0xff]
  %v131 = vld [vmem:[%s1 + $0x308] sm:$0xff]
  %v132 = vld [vmem:[%s1 + $0x310] sm:$0xff]
  %v133 = vld [vmem:[%s1 + $0x318] sm:$0xff]
  %v134 = vld [vmem:[%s1 + $0x320] sm:$0xff]
  %v135 = vld [vmem:[%s1 + $0x328] sm:$0xff]
  %v136 = vld [vmem:[%s1 + $0x330] sm:$0xff]
  %v137 = vld [vmem:[%s1 + $0x338] sm:$0xff]
  %v138 = vld [vmem:[%s1 + $0x340] sm:$0xff]
  %v139 = vld [vmem:[%s1 + $0x348] sm:$0xff]
  %v140 = vld [vmem:[%s1 + $0x350] sm:$0xff]
  %v141 = vld [vmem:[%s1 + $0x358] sm:$0xff]
  %v142 = vld [vmem:[%s1 + $0x360] sm:$0xff]
  %v143 = vld [vmem:[%s1 + $0x368] sm:$0xff]
  %v144 = vld [vmem:[%s1 + $0x370] sm:$0xff]
  %v145 = vld [vmem:[%s1 + $0x378] sm:$0xff]
  %v146 = vld [vmem:[%s1 + $0x380] sm:$0xff]
  %v147 = vld [vmem:[%s1 + $0x388] sm:$0xff]
  %v148 = vld [vmem:[%s1 + $0x390] sm:$0xff]
  %v149 = vld [vmem:[%s1 + $0x398] sm:$0xff]
  %v150 = vld [vmem:[%s1 + $0x3a0] sm:$0xff]
  %v151 = vld [vmem:[%s1 + $0x3a8] sm:$0xff]
  %v152 = vld [vmem:[%s1 + $0x3b0] sm:$0xff]
  %v153 = vld [vmem:[%s1 + $0x3b8] sm:$0xff]
  %v154 = vld [vmem:[%s1 + $0x3c0] sm:$0xff]
  %v155 = vld [vmem:[%s1 + $0x3c8] sm:$0xff]
  %v156 = vld [vmem:[%s1 + $0x3d0] sm:$0xff]
  %v157 = vld [vmem:[%s1 + $0x3d8] sm:$0xff]
  %v158 = vld [vmem:[%s1 + $0x3e0] sm:$0xff]
  %v159 = vld [vmem:[%s1 + $0x3e8] sm:$0xff]
  %v160 = vld [vmem:[%s1 + $0x3f0] sm:$0xff]
  %v161 = vld [vmem:[%s1 + $0x3f8] sm:$0xff]
  %v162 = vld [vmem:[%s1 + $0x400] sm:$0xff]
  %v163 = vld [vmem:[%s1 + $0x408] sm:$0xff]
  %v164 = vld [vmem:[%s1 + $0x410] sm:$0xff]
  %v165 = vld [vmem:[%s1 + $0x418] sm:$0xff]
  %v166 = vld [vmem:[%s1 + $0x420] sm:$0xff]
  %v167 = vld [vmem:[%s1 + $0x428] sm:$0xff]
  %v168 = vld [vmem:[%s1 + $0x430] sm:$0xff]
  %v169 = vld [vmem:[%s1 + $0x438] sm:$0xff]
  %v170 = vld [vmem:[%s1 + $0x440] sm:$0xff]
  %v171 = vld [vmem:[%s1 + $0x448] sm:$0xff]
  %v172 = vld [vmem:[%s1 + $0x450] sm:$0xff]
  %v173 = vld [vmem:[%s1 + $0x458] sm:$0xff]
  %v174 = vld [vmem:[%s1 + $0x460] sm:$0xff]
  %v175 = vld [vmem:[%s1 + $0x468] sm:$0xff]
  %v176 = vld [vmem:[%s1 + $0x470] sm:$0xff]
  %v177 = vld [vmem:[%s1 + $0x478] sm:$0xff]
  %v178 = vld [vmem:[%s1 + $0x480] sm:$0xff]
  %v179 = vld [vmem:[%s1 + $0x488] sm:$0xff]
  %v180 = vld [vmem:[%s1 + $0x490] sm:$0xff]
  %v181 = vld [vmem:[%s1 + $0x498] sm:$0xff]
  %v182 = vld [vmem:[%s1 + $0x4a0] sm:$0xff]
  %v183 = vld [vmem:[%s1 + $0x4a8] sm:$0xff]
  %v184 = vld [vmem:[%s1 + $0x4b0] sm:$0xff]
  %v185 = vld [vmem:[%s1 + $0x4b8] sm:$0xff]
  %v186 = vld [vmem:[%s1 + $0x4c0] sm:$0xff]
  %v187 = vld [vmem:[%s1 + $0x4c8] sm:$0xff]
  %v188 = vld [vmem:[%s1 + $0x4d0] sm:$0xff]
  %v189 = vld [vmem:[%s1 + $0x4d8] sm:$0xff]
  %v190 = vld [vmem:[%s1 + $0x4e0] sm:$0xff]
  %v191 = vld [vmem:[%s1 + $0x4e8] sm:$0xff]
  %v192 = vld [vmem:[%s1 + $0x4f0] sm:$0xff]
  %v193 = vld [vmem:[%s1 + $0x4f8] sm:$0xff]
  %v194 = vld [vmem:[%s1 + $0x500] sm:$0xff]
  %v195 = vld [vmem:[%s1 + $0x508] sm:$0xff]
  %v196 = vld [vmem:[%s1 + $0x510] sm:$0xff]
  %v197 = vld [vmem:[%s1 + $0x518] sm:$0xff]
  %v198 = vld [vmem:[%s1 + $0x520] sm:$0xff]
  %v199 = vld [vmem:[%s1 + $0x528] sm:$0xff]
  %v200 = vld [vmem:[%s1 + $0x530] sm:$0xff]
  %v201 = vld [vmem:[%s1 + $0x538] sm:$0xff]
  %v202 = vld [vmem:[%s1 + $0x540] sm:$0xff]
  %v203 = vld [vmem:[%s1 + $0x548] sm:$0xff]
  %v204 = vld [vmem:[%s1 + $0x550] sm:$0xff]
  %v205 = vld [vmem:[%s1 + $0x558] sm:$0xff]
  %v206 = vld [vmem:[%s1 + $0x560] sm:$0xff]
  %v207 = vld [vmem:[%s1 + $0x568] sm:$0xff]
  %v208 = vld [vmem:[%s1 + $0x570] sm:$0xff]
  %v209 = vld [vmem:[%s1 + $0x578] sm:$0xff]
  %v210 = vld [vmem:[%s1 + $0x580] sm:$0xff]
  %v211 = vld [vmem:[%s1 + $0x588] sm:$0xff]
  %v212 = vld [vmem:[%s1 + $0x590] sm:$0xff]
  %v213 = vld [vmem:[%s1 + $0x598] sm:$0xff]
  %v214 = vld [vmem:[%s1 + $0x5a0] sm:$0xff]
  %v215 = vld [vmem:[%s1 + $0x5a8] sm:$0xff]
  %v216 = vld [vmem:[%s1 + $0x5b0] sm:$0xff]
  %v217 = vld [vmem:[%s1 + $0x5b8] sm:$0xff]
  %v218 = vld [vmem:[%s1 + $0x5c0] sm:$0xff]
  %v219 = vld [vmem:[%s1 + $0x5c8] sm:$0xff]
  %v220 = vld [vmem:[%s1 + $0x5d0] sm:$0xff]
  %v221 = vld [vmem:[%s1 + $0x5d8] sm:$0xff]
  %v222 = vld [vmem:[%s1 + $0x5e0] sm:$0xff]
  %v223 = vld [vmem:[%s1 + $0x5e8] sm:$0xff]
  %v224 = vld [vmem:[%s1 + $0x5f0] sm:$0xff]
  %v225 = vld [vmem:[%s1 + $0x5f8] sm:$0xff]
  %v226 = vld [vmem:[%s1 + $0x600] sm:$0xff]
  %v227 = vld [vmem:[%s1 + $0x608] sm:$0xff]
  %v228 = vld [vmem:[%s1 + $0x610] sm:$0xff]
  %v229 = vld [vmem:[%s1 + $0x618] sm:$0xff]
  %v230 = vld [vmem:[%s1 + $0x620] sm:$0xff]
  %v231 = vld [vmem:[%s1 + $0x628] sm:$0xff]
  %v232 = vld [vmem:[%s1 + $0x630] sm:$0xff]
  %v233 = vld [vmem:[%s1 + $0x638] sm:$0xff]
  %v234 = vld [vmem:[%s1 + $0x640] sm:$0xff]
  %v235 = vld [vmem:[%s1 + $0x648] sm:$0xff]
  %v236 = vld [vmem:[%s1 + $0x650] sm:$0xff]
  %v237 = vld [vmem:[%s1 + $0x658] sm:$0xff]
  %v238 = vld [vmem:[%s1 + $0x660] sm:$0xff]
  %v239 = vld [vmem:[%s1 + $0x668] sm:$0xff]
  %v240 = vld [vmem:[%s1 + $0x670] sm:$0xff]
  %v241 = vld [vmem:[%s1 + $0x678] sm:$0xff]
  %v242 = vld [vmem:[%s1 + $0x680] sm:$0xff]
  %v243 = vld [vmem:[%s1 + $0x688] sm:$0xff]
  %v244 = vld [vmem:[%s1 + $0x690] sm:$0xff]
  %v245 = vld [vmem:[%s1 + $0x698] sm:$0xff]
  %v246 = vld [vmem:[%s1 + $0x6a0] sm:$0xff]
  %v247 = vld [vmem:[%s1 + $0x6a8] sm:$0xff]
  %v248 = vld [vmem:[%s1 + $0x6b0] sm:$0xff]
  %v249 = vld [vmem:[%s1 + $0x6b8] sm:$0xff]
  %v250 = vld [vmem:[%s1 + $0x6c0] sm:$0xff]
  %v251 = vld [vmem:[%s1 + $0x6c8] sm:$0xff]
  %v252 = vld [vmem:[%s1 + $0x6d0] sm:$0xff]
  %v253 = vld [vmem:[%s1 + $0x6d8] sm:$0xff]
  %v254 = vld [vmem:[%s1 + $0x6e0] sm:$0xff]
  %v255 = vld [vmem:[%s1 + $0x6e8] sm:$0xff]
  %v256 = vld [vmem:[%s1 + $0x6f0] sm:$0xff]
  %v257 = vld [vmem:[%s1 + $0x6f8] sm:$0xff]
  %v258 = vld [vmem:[%s1 + $0x700] sm:$0xff]
  %v259 = vld [vmem:[%s1 + $0x708] sm:$0xff]
  %v260 = vld [vmem:[%s1 + $0x710] sm:$0xff]
  %v261 = vld [vmem:[%s1 + $0x718] sm:$0xff]
  %v262 = vld [vmem:[%s1 + $0x720] sm:$0xff]
  %v263 = vld [vmem:[%s1 + $0x728] sm:$0xff]
  %v264 = vld [vmem:[%s1 + $0x730] sm:$0xff]
  %v265 = vld [vmem:[%s1 + $0x738] sm:$0xff]
  %v266 = vld [vmem:[%s1 + $0x740] sm:$0xff]
  %v267 = vld [vmem:[%s1 + $0x748] sm:$0xff]
  %v268 = vld [vmem:[%s1 + $0x750] sm:$0xff]
  %v269 = vld [vmem:[%s1 + $0x758] sm:$0xff]
  %v270 = vld [vmem:[%s1 + $0x760] sm:$0xff]
  %v271 = vld [vmem:[%s1 + $0x768] sm:$0xff]
  %v272 = vld [vmem:[%s1 + $0x770] sm:$0xff]
  %v273 = vld [vmem:[%s1 + $0x778] sm:$0xff]
  %v274 = vld [vmem:[%s1 + $0x780] sm:$0xff]
  %v275 = vld [vmem:[%s1 + $0x788] sm:$0xff]
  %v276 = vld [vmem:[%s1 + $0x790] sm:$0xff]
  %v277 = vld [vmem:[%s1 + $0x798] sm:$0xff]
  %v278 = vld [vmem:[%s1 + $0x7a0] sm:$0xff]
  %v279 = vld [vmem:[%s1 + $0x7a8] sm:$0xff]
  %v280 = vld [vmem:[%s1 + $0x7b0] sm:$0xff]
  %v281 = vld [vmem:[%s1 + $0x7b8] sm:$0xff]
  %v282 = vld [vmem:[%s1 + $0x7c0] sm:$0xff]
  %v283 = vld [vmem:[%s1 + $0x7c8] sm:$0xff]
  %v284 = vld [vmem:[%s1 + $0x7d0] sm:$0xff]
  %v285 = vld [vmem:[%s1 + $0x7d8] sm:$0xff]
  %v286 = vld [vmem:[%s1 + $0x7e0] sm:$0xff]
  %v287 = vld [vmem:[%s1 + $0x7e8] sm:$0xff]
  %v288 = vld [vmem:[%s1 + $0x7f0] sm:$0xff]
  %v289 = vld [vmem:[%s1 + $0x7f8] sm:$0xff]
  %v290 = vld [vmem:[%s1 + $0x800] sm:$0xff]
  %v291 = vld [vmem:[%s1 + $0x808] sm:$0xff]
  %v292 = vld [vmem:[%s1 + $0x810] sm:$0xff]
  %v293 = vld [vmem:[%s1 + $0x818] sm:$0xff]
  %v294 = vld [vmem:[%s1 + $0x820] sm:$0xff]
  %v295 = vld [vmem:[%s1 + $0x828] sm:$0xff]
  %v296 = vld [vmem:[%s1 + $0x830] sm:$0xff]
  %v297 = vld [vmem:[%s1 + $0x838] sm:$0xff]
  %v298 = vld [vmem:[%s1 + $0x840] sm:$0xff]
  %v299 = vld [vmem:[%s1 + $0x848] sm:$0xff]
  %v300 = vld [vmem:[%s1 + $0x850] sm:$0xff]
  %v301 = vld [vmem:[%s1 + $0x858] sm:$0xff]
  %v302 = vld [vmem:[%s1 + $0x860] sm:$0xff]
  %v303 = vld [vmem:[%s1 + $0x868] sm:$0xff]
  %v304 = vld [vmem:[%s1 + $0x870] sm:$0xff]
  %v305 = vld [vmem:[%s1 + $0x878] sm:$0xff]
  %v306 = vld [vmem:[%s1 + $0x880] sm:$0xff]
  %v307 = vld [vmem:[%s1 + $0x888] sm:$0xff]
  %v308 = vld [vmem:[%s1 + $0x890] sm:$0xff]
  %v309 = vld [vmem:[%s1 + $0x898] sm:$0xff]
  %v310 = vld [vmem:[%s1 + $0x8a0] sm:$0xff]
  %v311 = vld [vmem:[%s1 + $0x8a8] sm:$0xff]
  %v312 = vld [vmem:[%s1 + $0x8b0] sm:$0xff]
  %v313 = vld [vmem:[%s1 + $0x8b8] sm:$0xff]
  %v314 = vld [vmem:[%s1 + $0x8c0] sm:$0xff]
  %v315 = vld [vmem:[%s1 + $0x8c8] sm:$0xff]
  %v316 = vld [vmem:[%s1 + $0x8d0] sm:$0xff]
  %v317 = vld [vmem:[%s1 + $0x8d8] sm:$0xff]
  %v318 = vld [vmem:[%s1 + $0x8e0] sm:$0xff]
  %v319 = vld [vmem:[%s1 + $0x8e8] sm:$0xff]
  %v320 = vld [vmem:[%s1 + $0x8f0] sm:$0xff]
  %v321 = vld [vmem:[%s1 + $0x8f8] sm:$0xff]
  %v322 = vld [vmem:[%s1 + $0x900] sm:$0xff]
  %v323 = vld [vmem:[%s1 + $0x908] sm:$0xff]
  %v324 = vld [vmem:[%s1 + $0x910] sm:$0xff]
  %v325 = vld [vmem:[%s1 + $0x918] sm:$0xff]
  %v326 = vld [vmem:[%s1 + $0x920] sm:$0xff]
  %v327 = vld [vmem:[%s1 + $0x928] sm:$0xff]
  %v328 = vld [vmem:[%s1 + $0x930] sm:$0xff]
  %v329 = vld [vmem:[%s1 + $0x938] sm:$0xff]
  %v330 = vld [vmem:[%s1 + $0x940] sm:$0xff]
  %v331 = vld [vmem:[%s1 + $0x948] sm:$0xff]
  %v332 = vld [vmem:[%s1 + $0x950] sm:$0xff]
  %v333 = vld [vmem:[%s1 + $0x958] sm:$0xff]
  %v334 = vld [vmem:[%s1 + $0x960] sm:$0xff]
  %v335 = vld [vmem:[%s1 + $0x968] sm:$0xff]
  %v336 = vld [vmem:[%s1 + $0x970] sm:$0xff]
  %v337 = vld [vmem:[%s1 + $0x978] sm:$0xff]
  %v338 = vld [vmem:[%s1 + $0x980] sm:$0xff]
  %v339 = vld [vmem:[%s1 + $0x988] sm:$0xff]
  %v340 = vld [vmem:[%s1 + $0x990] sm:$0xff]
  %v341 = vld [vmem:[%s1 + $0x998] sm:$0xff]
  %v342 = vld [vmem:[%s1 + $0x9a0] sm:$0xff]
  %v343 = vld [vmem:[%s1 + $0x9a8] sm:$0xff]
  %v344 = vld [vmem:[%s1 + $0x9b0] sm:$0xff]
  %v345 = vld [vmem:[%s1 + $0x9b8] sm:$0xff]
  %v346 = vld [vmem:[%s1 + $0x9c0] sm:$0xff]
  %v347 = vld [vmem:[%s1 + $0x9c8] sm:$0xff]
  %v348 = vld [vmem:[%s1 + $0x9d0] sm:$0xff]
  %v349 = vld [vmem:[%s1 + $0x9d8] sm:$0xff]
  %v350 = vld [vmem:[%s1 + $0x9e0] sm:$0xff]
  %v351 = vld [vmem:[%s1 + $0x9e8] sm:$0xff]
  %v352 = vld [vmem:[%s1 + $0x9f0] sm:$0xff]
  %v353 = vld [vmem:[%s1 + $0x9f8] sm:$0xff]
  %v354 = vld [vmem:[%s1 + $0xa00] sm:$0xff]
  %v355 = vld [vmem:[%s1 + $0xa08] sm:$0xff]
  %v356 = vld [vmem:[%s1 + $0xa10] sm:$0xff]
  %v357 = vld [vmem:[%s1 + $0xa18] sm:$0xff]
  %v358 = vld [vmem:[%s1 + $0xa20] sm:$0xff]
  %v359 = vld [vmem:[%s1 + $0xa28] sm:$0xff]
  %v360 = vld [vmem:[%s1 + $0xa30] sm:$0xff]
  %v361 = vld [vmem:[%s1 + $0xa38] sm:$0xff]
  %v362 = vld [vmem:[%s1 + $0xa40] sm:$0xff]
  %v363 = vld [vmem:[%s1 + $0xa48] sm:$0xff]
  %v364 = vld [vmem:[%s1 + $0xa50] sm:$0xff]
  %v365 = vld [vmem:[%s1 + $0xa58] sm:$0xff]
  %v366 = vld [vmem:[%s1 + $0xa60] sm:$0xff]
  %v367 = vld [vmem:[%s1 + $0xa68] sm:$0xff]
  %v368 = vld [vmem:[%s1 + $0xa70] sm:$0xff]
  %v369 = vld [vmem:[%s1 + $0xa78] sm:$0xff]
  %v370 = vld [vmem:[%s1 + $0xa80] sm:$0xff]
  %v371 = vld [vmem:[%s1 + $0xa88] sm:$0xff]
  %v372 = vld [vmem:[%s1 + $0xa90] sm:$0xff]
  %v373 = vld [vmem:[%s1 + $0xa98] sm:$0xff]
  %v374 = vld [vmem:[%s1 + $0xaa0] sm:$0xff]
  %v375 = vld [vmem:[%s1 + $0xaa8] sm:$0xff]
  %v376 = vld [vmem:[%s1 + $0xab0] sm:$0xff]
  %v377 = vld [vmem:[%s1 + $0xab8] sm:$0xff]
  %v378 = vld [vmem:[%s1 + $0xac0] sm:$0xff]
  %v379 = vld [vmem:[%s1 + $0xac8] sm:$0xff]
  %v380 = vld [vmem:[%s1 + $0xad0] sm:$0xff]
  %v381 = vld [vmem:[%s1 + $0xad8] sm:$0xff]
  %v382 = vld [vmem:[%s1 + $0xae0] sm:$0xff]
  %v383 = vld [vmem:[%s1 + $0xae8] sm:$0xff]
  %v384 = vld [vmem:[%s1 + $0xaf0] sm:$0xff]
  %v385 = vld [vmem:[%s1 + $0xaf8] sm:$0xff]
  %v386 = vld [vmem:[%s1 + $0xb00] sm:$0xff]
  %v387 = vld [vmem:[%s1 + $0xb08] sm:$0xff]
  %v388 = vld [vmem:[%s1 + $0xb10] sm:$0xff]
  %v389 = vld [vmem:[%s1 + $0xb18] sm:$0xff]
  %v390 = vld [vmem:[%s1 + $0xb20] sm:$0xff]
  %v391 = vld [vmem:[%s1 + $0xb28] sm:$0xff]
  %v392 = vld [vmem:[%s1 + $0xb30] sm:$0xff]
  %v393 = vld [vmem:[%s1 + $0xb38] sm:$0xff]
  %v394 = vld [vmem:[%s1 + $0xb40] sm:$0xff]
  %v395 = vld [vmem:[%s1 + $0xb48] sm:$0xff]
  %v396 = vld [vmem:[%s1 + $0xb50] sm:$0xff]
  %v397 = vld [vmem:[%s1 + $0xb58] sm:$0xff]
  %v398 = vld [vmem:[%s1 + $0xb60] sm:$0xff]
  %v399 = vld [vmem:[%s1 + $0xb68] sm:$0xff]
  %v400 = vld [vmem:[%s1 + $0xb70] sm:$0xff]
  %v401 = vld [vmem:[%s1 + $0xb78] sm:$0xff]
  %v402 = vld [vmem:[%s1 + $0xb80] sm:$0xff]
  %v403 = vld [vmem:[%s1 + $0xb88] sm:$0xff]
  %v404 = vld [vmem:[%s1 + $0xb90] sm:$0xff]
  %v405 = vld [vmem:[%s1 + $0xb98] sm:$0xff]
  %v406 = vld [vmem:[%s1 + $0xba0] sm:$0xff]
  %v407 = vld [vmem:[%s1 + $0xba8] sm:$0xff]
  %v408 = vld [vmem:[%s1 + $0xbb0] sm:$0xff]
  %v409 = vld [vmem:[%s1 + $0xbb8] sm:$0xff]
  %v410 = vld [vmem:[%s1 + $0xbc0] sm:$0xff]
  %v411 = vld [vmem:[%s1 + $0xbc8] sm:$0xff]
  %v412 = vld [vmem:[%s1 + $0xbd0] sm:$0xff]
  %v413 = vld [vmem:[%s1 + $0xbd8] sm:$0xff]
  %v414 = vld [vmem:[%s1 + $0xbe0] sm:$0xff]
  %v415 = vld [vmem:[%s1 + $0xbe8] sm:$0xff]
  %v416 = vld [vmem:[%s1 + $0xbf0] sm:$0xff]
  %v417 = vld [vmem:[%s1 + $0xbf8] sm:$0xff]
  %v418 = vld [vmem:[%s1 + $0xc00] sm:$0xff]
  %v419 = vld [vmem:[%s1 + $0xc08] sm:$0xff]
  %v420 = vld [vmem:[%s1 + $0xc10] sm:$0xff]
  %v421 = vld [vmem:[%s1 + $0xc18] sm:$0xff]
  %v422 = vld [vmem:[%s1 + $0xc20] sm:$0xff]
  %v423 = vld [vmem:[%s1 + $0xc28] sm:$0xff]
  %v424 = vld [vmem:[%s1 + $0xc30] sm:$0xff]
  %v425 = vld [vmem:[%s1 + $0xc38] sm:$0xff]
  %v426 = vld [vmem:[%s1 + $0xc40] sm:$0xff]
  %v427 = vld [vmem:[%s1 + $0xc48] sm:$0xff]
  %v428 = vld [vmem:[%s1 + $0xc50] sm:$0xff]
  %v429 = vld [vmem:[%s1 + $0xc58] sm:$0xff]
  %v430 = vld [vmem:[%s1 + $0xc60] sm:$0xff]
  %v431 = vld [vmem:[%s1 + $0xc68] sm:$0xff]
  %v432 = vld [vmem:[%s1 + $0xc70] sm:$0xff]
  %v433 = vld [vmem:[%s1 + $0xc78] sm:$0xff]
  %v434 = vld [vmem:[%s1 + $0xc80] sm:$0xff]
  %v435 = vld [vmem:[%s1 + $0xc88] sm:$0xff]
  %v436 = vld [vmem:[%s1 + $0xc90] sm:$0xff]
  %v437 = vld [vmem:[%s1 + $0xc98] sm:$0xff]
  %v438 = vld [vmem:[%s1 + $0xca0] sm:$0xff]
  %v439 = vld [vmem:[%s1 + $0xca8] sm:$0xff]
  %v440 = vld [vmem:[%s1 + $0xcb0] sm:$0xff]
  %v441 = vld [vmem:[%s1 + $0xcb8] sm:$0xff]
  %v442 = vld [vmem:[%s1 + $0xcc0] sm:$0xff]
  %v443 = vld [vmem:[%s1 + $0xcc8] sm:$0xff]
  %v444 = vld [vmem:[%s1 + $0xcd0] sm:$0xff]
  %v445 = vld [vmem:[%s1 + $0xcd8] sm:$0xff]
  %v446 = vld [vmem:[%s1 + $0xce0] sm:$0xff]
  %v447 = vld [vmem:[%s1 + $0xce8] sm:$0xff]
  %v448 = vld [vmem:[%s1 + $0xcf0] sm:$0xff]
  %v449 = vld [vmem:[%s1 + $0xcf8] sm:$0xff]
  %v450 = vld [vmem:[%s1 + $0xd00] sm:$0xff]
  %v451 = vld [vmem:[%s1 + $0xd08] sm:$0xff]
  %v452 = vld [vmem:[%s1 + $0xd10] sm:$0xff]
  %v453 = vld [vmem:[%s1 + $0xd18] sm:$0xff]
  %v454 = vld [vmem:[%s1 + $0xd20] sm:$0xff]
  %v455 = vld [vmem:[%s1 + $0xd28] sm:$0xff]
  %v456 = vld [vmem:[%s1 + $0xd30] sm:$0xff]
  %v457 = vld [vmem:[%s1 + $0xd38] sm:$0xff]
  %v458 = vld [vmem:[%s1 + $0xd40] sm:$0xff]
  %v459 = vld [vmem:[%s1 + $0xd48] sm:$0xff]
  %v460 = vld [vmem:[%s1 + $0xd50] sm:$0xff]
  %v461 = vld [vmem:[%s1 + $0xd58] sm:$0xff]
  %v462 = vld [vmem:[%s1 + $0xd60] sm:$0xff]
  %v463 = vld [vmem:[%s1 + $0xd68] sm:$0xff]
  %v464 = vld [vmem:[%s1 + $0xd70] sm:$0xff]
  %v465 = vld [vmem:[%s1 + $0xd78] sm:$0xff]
  %v466 = vld [vmem:[%s1 + $0xd80] sm:$0xff]
  %v467 = vld [vmem:[%s1 + $0xd88] sm:$0xff]
  %v468 = vld [vmem:[%s1 + $0xd90] sm:$0xff]
  %v469 = vld [vmem:[%s1 + $0xd98] sm:$0xff]
  %v470 = vld [vmem:[%s1 + $0xda0] sm:$0xff]
  %v471 = vld [vmem:[%s1 + $0xda8] sm:$0xff]
  %v472 = vld [vmem:[%s1 + $0xdb0] sm:$0xff]
  %v473 = vld [vmem:[%s1 + $0xdb8] sm:$0xff]
  %v474 = vld [vmem:[%s1 + $0xdc0] sm:$0xff]
  %v475 = vld [vmem:[%s1 + $0xdc8] sm:$0xff]
  %v476 = vld [vmem:[%s1 + $0xdd0] sm:$0xff]
  %v477 = vld [vmem:[%s1 + $0xdd8] sm:$0xff]
  %v478 = vld [vmem:[%s1 + $0xde0] sm:$0xff]
  %v479 = vld [vmem:[%s1 + $0xde8] sm:$0xff]
  %v480 = vld [vmem:[%s1 + $0xdf0] sm:$0xff]
  %v481 = vld [vmem:[%s1 + $0xdf8] sm:$0xff]
  %v482 = vld [vmem:[%s1 + $0xe00] sm:$0xff]
  %v483 = vld [vmem:[%s1 + $0xe08] sm:$0xff]
  %v484 = vld [vmem:[%s1 + $0xe10] sm:$0xff]
  %v485 = vld [vmem:[%s1 + $0xe18] sm:$0xff]
  %v486 = vld [vmem:[%s1 + $0xe20] sm:$0xff]
  %v487 = vld [vmem:[%s1 + $0xe28] sm:$0xff]
  %v488 = vld [vmem:[%s1 + $0xe30] sm:$0xff]
  %v489 = vld [vmem:[%s1 + $0xe38] sm:$0xff]
  %v490 = vld [vmem:[%s1 + $0xe40] sm:$0xff]
  %v491 = vld [vmem:[%s1 + $0xe48] sm:$0xff]
  %v492 = vld [vmem:[%s1 + $0xe50] sm:$0xff]
  %v493 = vld [vmem:[%s1 + $0xe58] sm:$0xff]
  %v494 = vld [vmem:[%s1 + $0xe60] sm:$0xff]
  %v495 = vld [vmem:[%s1 + $0xe68] sm:$0xff]
  %v496 = vld [vmem:[%s1 + $0xe70] sm:$0xff]
  %v497 = vld [vmem:[%s1 + $0xe78] sm:$0xff]
  %v498 = vld [vmem:[%s1 + $0xe80] sm:$0xff]
  %v499 = vld [vmem:[%s1 + $0xe88] sm:$0xff]
  %v500 = vld [vmem:[%s1 + $0xe90] sm:$0xff]
  %v501 = vld [vmem:[%s1 + $0xe98] sm:$0xff]
  %v502 = vld [vmem:[%s1 + $0xea0] sm:$0xff]
  %v503 = vld [vmem:[%s1 + $0xea8] sm:$0xff]
  %v504 = vld [vmem:[%s1 + $0xeb0] sm:$0xff]
  %v505 = vld [vmem:[%s1 + $0xeb8] sm:$0xff]
  %v506 = vld [vmem:[%s1 + $0xec0] sm:$0xff]
  %v507 = vld [vmem:[%s1 + $0xec8] sm:$0xff]
  %v508 = vld [vmem:[%s1 + $0xed0] sm:$0xff]
  %v509 = vld [vmem:[%s1 + $0xed8] sm:$0xff]
  %v510 = vld [vmem:[%s1 + $0xee0] sm:$0xff]
  %v511 = vld [vmem:[%s1 + $0xee8] sm:$0xff]
  %v512 = vld [vmem:[%s1 + $0xef0] sm:$0xff]
  %v513 = vld [vmem:[%s1 + $0xef8] sm:$0xff]
  %v514 = vld [vmem:[%s1 + $0xf00] sm:$0xff]
  %v515 = vld [vmem:[%s1 + $0xf08] sm:$0xff]
  %v516 = vld [vmem:[%s1 + $0xf10] sm:$0xff]
  %v517 = vld [vmem:[%s1 + $0xf18] sm:$0xff]
  %v518 = vld [vmem:[%s1 + $0xf20] sm:$0xff]
  %v519 = vld [vmem:[%s1 + $0xf28] sm:$0xff]
  %v520 = vld [vmem:[%s1 + $0xf30] sm:$0xff]
  %v521 = vld [vmem:[%s1 + $0xf38] sm:$0xff]
  %v522 = vld [vmem:[%s1 + $0xf40] sm:$0xff]
  %v523 = vld [vmem:[%s1 + $0xf48] sm:$0xff]
  %v524 = vld [vmem:[%s1 + $0xf50] sm:$0xff]
  %v525 = vld [vmem:[%s1 + $0xf58] sm:$0xff]
  %v526 = vld [vmem:[%s1 + $0xf60] sm:$0xff]
  %v527 = vld [vmem:[%s1 + $0xf68] sm:$0xff]
  %v528 = vld [vmem:[%s1 + $0xf70] sm:$0xff]
  %v529 = vld [vmem:[%s1 + $0xf78] sm:$0xff]
  %v530 = vld [vmem:[%s1 + $0xf80] sm:$0xff]
  %v531 = vld [vmem:[%s1 + $0xf88] sm:$0xff]
  %v532 = vld [vmem:[%s1 + $0xf90] sm:$0xff]
  %v533 = vld [vmem:[%s1 + $0xf98] sm:$0xff]
  %v534 = vld [vmem:[%s1 + $0xfa0] sm:$0xff]
  %v535 = vld [vmem:[%s1 + $0xfa8] sm:$0xff]
  %v536 = vld [vmem:[%s1 + $0xfb0] sm:$0xff]
  %v537 = vld [vmem:[%s1 + $0xfb8] sm:$0xff]
  %v538 = vld [vmem:[%s1 + $0xfc0] sm:$0xff]
  %v539 = vld [vmem:[%s1 + $0xfc8] sm:$0xff]
  %v540 = vld [vmem:[%s1 + $0xfd0] sm:$0xff]
  %v541 = vld [vmem:[%s1 + $0xfd8] sm:$0xff]
  %v542 = vld [vmem:[%s1 + $0xfe0] sm:$0xff]
  %v543 = vld [vmem:[%s1 + $0xfe8] sm:$0xff]
  %v544 = vld [vmem:[%s1 + $0xff0] sm:$0xff]
  %v545 = vld [vmem:[%s1 + $0xff8] sm:$0xff]
  %v546 = vld [vmem:[%s1 + $0x1000] sm:$0xff]
  %v547 = vld [vmem:[%s1 + $0x1008] sm:$0xff]
  %v548 = vld [vmem:[%s1 + $0x1010] sm:$0xff]
  %v549 = vld [vmem:[%s1 + $0x1018] sm:$0xff]
  %v550 = vld [vmem:[%s1 + $0x1020] sm:$0xff]
  %v551 = vld [vmem:[%s1 + $0x1028] sm:$0xff]
  %v552 = vld [vmem:[%s1 + $0x1030] sm:$0xff]
  %v553 = vld [vmem:[%s1 + $0x1038] sm:$0xff]
  %v554 = vld [vmem:[%s1 + $0x1040] sm:$0xff]
  %v555 = vld [vmem:[%s1 + $0x1048] sm:$0xff]
  %v556 = vld [vmem:[%s1 + $0x1050] sm:$0xff]
  %v557 = vld [vmem:[%s1 + $0x1058] sm:$0xff]
  %v558 = vld [vmem:[%s1 + $0x1060] sm:$0xff]
  %v559 = vld [vmem:[%s1 + $0x1068] sm:$0xff]
  %v560 = vld [vmem:[%s1 + $0x1070] sm:$0xff]
  %v561 = vld [vmem:[%s1 + $0x1078] sm:$0xff]
  %v562 = vld [vmem:[%s1 + $0x1080] sm:$0xff]
  %v563 = vld [vmem:[%s1 + $0x1088] sm:$0xff]
  %v564 = vld [vmem:[%s1 + $0x1090] sm:$0xff]
  %v565 = vld [vmem:[%s1 + $0x1098] sm:$0xff]
  %v566 = vld [vmem:[%s1 + $0x10a0] sm:$0xff]
  %v567 = vld [vmem:[%s1 + $0x10a8] sm:$0xff]
  %v568 = vld [vmem:[%s1 + $0x10b0] sm:$0xff]
  %v569 = vld [vmem:[%s1 + $0x10b8] sm:$0xff]
  %v570 = vld [vmem:[%s1 + $0x10c0] sm:$0xff]
  %v571 = vld [vmem:[%s1 + $0x10c8] sm:$0xff]
  %v572 = vld [vmem:[%s1 + $0x10d0] sm:$0xff]
  %v573 = vld [vmem:[%s1 + $0x10d8] sm:$0xff]
  %v574 = vld [vmem:[%s1 + $0x10e0] sm:$0xff]
  %v575 = vld [vmem:[%s1 + $0x10e8] sm:$0xff]
  %v576 = vld [vmem:[%s1 + $0x10f0] sm:$0xff]
  %v577 = vld [vmem:[%s1 + $0x10f8] sm:$0xff]
  %v578 = vld [vmem:[%s1 + $0x1100] sm:$0xff]
  %v579 = vld [vmem:[%s1 + $0x1108] sm:$0xff]
  %v580 = vld [vmem:[%s1 + $0x1110] sm:$0xff]
  %v581 = vld [vmem:[%s1 + $0x1118] sm:$0xff]
  %v582 = vld [vmem:[%s1 + $0x1120] sm:$0xff]
  %v583 = vld [vmem:[%s1 + $0x1128] sm:$0xff]
  %v584 = vld [vmem:[%s1 + $0x1130] sm:$0xff]
  %v585 = vld [vmem:[%s1 + $0x1138] sm:$0xff]
  %v586 = vld [vmem:[%s1 + $0x1140] sm:$0xff]
  %v587 = vld [vmem:[%s1 + $0x1148] sm:$0xff]
  %v588 = vld [vmem:[%s1 + $0x1150] sm:$0xff]
  %v589 = vld [vmem:[%s1 + $0x1158] sm:$0xff]
  %v590 = vld [vmem:[%s1 + $0x1160] sm:$0xff]
  %v591 = vld [vmem:[%s1 + $0x1168] sm:$0xff]
  %v592 = vld [vmem:[%s1 + $0x1170] sm:$0xff]
  %v593 = vld [vmem:[%s1 + $0x1178] sm:$0xff]
  %v594 = vld [vmem:[%s1 + $0x1180] sm:$0xff]
  %v595 = vld [vmem:[%s1 + $0x1188] sm:$0xff]
  %v596 = vld [vmem:[%s1 + $0x1190] sm:$0xff]
  %v597 = vld [vmem:[%s1 + $0x1198] sm:$0xff]
  %v598 = vld [vmem:[%s1 + $0x11a0] sm:$0xff]
  %v599 = vld [vmem:[%s1 + $0x11a8] sm:$0xff]
  %v600 = vld [vmem:[%s1 + $0x11b0] sm:$0xff]
  %v601 = vld [vmem:[%s1 + $0x11b8] sm:$0xff]
  %v602 = vld [vmem:[%s1 + $0x11c0] sm:$0xff]
  %v603 = vld [vmem:[%s1 + $0x11c8] sm:$0xff]
  %v604 = vld [vmem:[%s1 + $0x11d0] sm:$0xff]
  %v605 = vld [vmem:[%s1 + $0x11d8] sm:$0xff]
  %v606 = vld [vmem:[%s1 + $0x11e0] sm:$0xff]
  %v607 = vld [vmem:[%s1 + $0x11e8] sm:$0xff]
  %v608 = vld [vmem:[%s1 + $0x11f0] sm:$0xff]
  %v609 = vld [vmem:[%s1 + $0x11f8] sm:$0xff]
  %610 = vmatprep.subr.mxu0 %v125
  %611 = vmatpush1.msra.mxu0 %v124
  %612 = vmatprep.subr.mxu0 %v119
  %613 = vmatpush1.msra.mxu0 %v118
  %614 = vmatprep.subr.mxu0 %v113
  %615 = vmatpush1.msra.mxu0 %v112
  %616 = vmatprep.subr.mxu0 %v107
  %617 = vmatpush1.msra.mxu0 %v106
  %618 = vmatprep.subr.mxu0 %v101
  %619 = vmatpush1.msra.mxu0 %v100
  %620 = vmatprep.subr.mxu0 %v95
  %621 = vmatpush1.msra.mxu0 %v94
  %622 = vmatprep.subr.mxu0 %v89
  %623 = vmatpush1.msra.mxu0 %v88
  %624 = vmatprep.subr.mxu0 %v83
  %625 = vmatpush1.msra.mxu0 %v82
  %626 = vmatprep.subr.mxu0 %v77
  %627 = vmatpush1.msra.mxu0 %v76
  %628 = vmatprep.subr.mxu0 %v71
  %629 = vmatpush1.msra.mxu0 %v70
  %630 = vmatprep.subr.mxu0 %v65
  %631 = vmatpush1.msra.mxu0 %v64
  %632 = vmatprep.subr.mxu0 %v59
  %633 = vmatpush1.msra.mxu0 %v58
  %634 = vmatprep.subr.mxu0 %v53
  %635 = vmatpush1.msra.mxu0 %v52
  %636 = vmatprep.subr.mxu0 %v47
  %637 = vmatpush1.msra.mxu0 %v46
  %638 = vmatprep.subr.mxu0 %v41
  %639 = vmatpush1.msra.mxu0 %v40
  %640 = vmatprep.subr.mxu0 %v35
  %641 = vmatpush1.msra.mxu0 %v34
  %642 = vmatprep.subr.mxu0 %v221
  %643 = vmatpush2.msra.mxu0 %v220
  %644 = vmatprep.subr.mxu0 %v215
  %645 = vmatpush2.msra.mxu0 %v214
  %646 = vmatprep.subr.mxu0 %v209
  %647 = vmatpush2.msra.mxu0 %v208
  %648 = vmatprep.subr.mxu0 %v203
  %649 = vmatpush2.msra.mxu0 %v202
  %650 = vmatprep.subr.mxu0 %v197
  %651 = vmatpush2.msra.mxu0 %v196
  %652 = vmatprep.subr.mxu0 %v191
  %653 = vmatpush2.msra.mxu0 %v190
  %654 = vmatprep.subr.mxu0 %v185
  %655 = vmatpush2.msra.mxu0 %v184
  %656 = vmatprep.subr.mxu0 %v179
  %657 = vmatpush2.msra.mxu0 %v178
  %658 = vmatprep.subr.mxu0 %v173
  %659 = vmatpush2.msra.mxu0 %v172
  %660 = vmatprep.subr.mxu0 %v167
  %661 = vmatpush2.msra.mxu0 %v166
  %662 = vmatprep.subr.mxu0 %v161
  %663 = vmatpush2.msra.mxu0 %v160
  %664 = vmatprep.subr.mxu0 %v155
  %665 = vmatpush2.msra.mxu0 %v154
  %666 = vmatprep.subr.mxu0 %v149
  %667 = vmatpush2.msra.mxu0 %v148
  %668 = vmatprep.subr.mxu0 %v143
  %669 = vmatpush2.msra.mxu0 %v142
  %670 = vmatprep.subr.mxu0 %v137
  %671 = vmatpush2.msra.mxu0 %v136
  %672 = vmatprep.subr.mxu0 %v131
  %673 = vmatpush2.msra.mxu0 %v130
  %674 = vmatprep.mubr.f32.mxu0 %v29
  %675 = vmatmul.mubr.f32.gmra.mxu0 %v28
  %v676 = vpop.f32.mrf.mxu0
  %v677 = vadd.f32 0.0, %v676
  %v678 = vpop.f32.mrf.mxu0
  %v679 = vadd.f32 0.0, %v678
  %680 = vdwg.mxu0
  %681 = vmatprep.subr.mxu0 %v317
  %682 = vmatpush1.msra.mxu0 %v316
  %683 = vmatprep.subr.mxu0 %v311
  %684 = vmatpush1.msra.mxu0 %v310
  %685 = vmatprep.subr.mxu0 %v305
  %686 = vmatpush1.msra.mxu0 %v304
  %687 = vmatprep.subr.mxu0 %v299
  %688 = vmatpush1.msra.mxu0 %v298
  %689 = vmatprep.subr.mxu0 %v293
  %690 = vmatpush1.msra.mxu0 %v292
  %691 = vmatprep.subr.mxu0 %v287
  %692 = vmatpush1.msra.mxu0 %v286
  %693 = vmatprep.subr.mxu0 %v281
  %694 = vmatpush1.msra.mxu0 %v280
  %695 = vmatprep.subr.mxu0 %v275
  %696 = vmatpush1.msra.mxu0 %v274
  %697 = vmatprep.subr.mxu0 %v269
  %698 = vmatpush1.msra.mxu0 %v268
  %699 = vmatprep.subr.mxu0 %v263
  %700 = vmatpush1.msra.mxu0 %v262
  %701 = vmatprep.subr.mxu0 %v257
  %702 = vmatpush1.msra.mxu0 %v256
  %703 = vmatprep.subr.mxu0 %v251
  %704 = vmatpush1.msra.mxu0 %v250
  %705 = vmatprep.subr.mxu0 %v245
  %706 = vmatpush1.msra.mxu0 %v244
  %707 = vmatprep.subr.mxu0 %v239
  %708 = vmatpush1.msra.mxu0 %v238
  %709 = vmatprep.subr.mxu0 %v233
  %710 = vmatpush1.msra.mxu0 %v232
  %711 = vmatprep.subr.mxu0 %v227
  %712 = vmatpush1.msra.mxu0 %v226
  %713 = vmatprep.subr.mxu0 %v413
  %714 = vmatpush2.msra.mxu0 %v412
  %715 = vmatprep.subr.mxu0 %v407
  %716 = vmatpush2.msra.mxu0 %v406
  %717 = vmatprep.subr.mxu0 %v401
  %718 = vmatpush2.msra.mxu0 %v400
  %719 = vmatprep.subr.mxu0 %v395
  %720 = vmatpush2.msra.mxu0 %v394
  %721 = vmatprep.subr.mxu0 %v389
  %722 = vmatpush2.msra.mxu0 %v388
  %723 = vmatprep.subr.mxu0 %v383
  %724 = vmatpush2.msra.mxu0 %v382
  %725 = vmatprep.subr.mxu0 %v377
  %726 = vmatpush2.msra.mxu0 %v376
  %727 = vmatprep.subr.mxu0 %v371
  %728 = vmatpush2.msra.mxu0 %v370
  %729 = vmatprep.subr.mxu0 %v365
  %730 = vmatpush2.msra.mxu0 %v364
  %731 = vmatprep.subr.mxu0 %v359
  %732 = vmatpush2.msra.mxu0 %v358
  %733 = vmatprep.subr.mxu0 %v353
  %734 = vmatpush2.msra.mxu0 %v352
  %735 = vmatprep.subr.mxu0 %v347
  %736 = vmatpush2.msra.mxu0 %v346
  %737 = vmatprep.subr.mxu0 %v341
  %738 = vmatpush2.msra.mxu0 %v340
  %739 = vmatprep.subr.mxu0 %v335
  %740 = vmatpush2.msra.mxu0 %v334
  %741 = vmatprep.subr.mxu0 %v329
  %742 = vmatpush2.msra.mxu0 %v328
  %743 = vmatprep.subr.mxu0 %v323
  %744 = vmatpush2.msra.mxu0 %v322
  %745 = vmatprep.mubr.f32.mxu0 %v31
  %746 = vmatmul.mubr.f32.gmra.mxu0 %v30
  %v747 = vpop.f32.mrf.mxu0
  %v748 = vadd.f32 %v677, %v747
  %v749 = vpop.f32.mrf.mxu0
  %v750 = vadd.f32 %v679, %v749
  %751 = vdwg.mxu0
  %752 = vmatprep.subr.mxu0 %v509
  %753 = vmatpush1.msra.mxu0 %v508
  %754 = vmatprep.subr.mxu0 %v503
  %755 = vmatpush1.msra.mxu0 %v502
  %756 = vmatprep.subr.mxu0 %v497
  %757 = vmatpush1.msra.mxu0 %v496
  %758 = vmatprep.subr.mxu0 %v491
  %759 = vmatpush1.msra.mxu0 %v490
  %760 = vmatprep.subr.mxu0 %v485
  %761 = vmatpush1.msra.mxu0 %v484
  %762 = vmatprep.subr.mxu0 %v479
  %763 = vmatpush1.msra.mxu0 %v478
  %764 = vmatprep.subr.mxu0 %v473
  %765 = vmatpush1.msra.mxu0 %v472
  %766 = vmatprep.subr.mxu0 %v467
  %767 = vmatpush1.msra.mxu0 %v466
  %768 = vmatprep.subr.mxu0 %v461
  %769 = vmatpush1.msra.mxu0 %v460
  %770 = vmatprep.subr.mxu0 %v455
  %771 = vmatpush1.msra.mxu0 %v454
  %772 = vmatprep.subr.mxu0 %v449
  %773 = vmatpush1.msra.mxu0 %v448
  %774 = vmatprep.subr.mxu0 %v443
  %775 = vmatpush1.msra.mxu0 %v442
  %776 = vmatprep.subr.mxu0 %v437
  %777 = vmatpush1.msra.mxu0 %v436
  %778 = vmatprep.subr.mxu0 %v431
  %779 = vmatpush1.msra.mxu0 %v430
  %780 = vmatprep.subr.mxu0 %v425
  %781 = vmatpush1.msra.mxu0 %v424
  %782 = vmatprep.subr.mxu0 %v419
  %783 = vmatpush1.msra.mxu0 %v418
  %784 = vmatprep.subr.mxu0 %v605
  %785 = vmatpush2.msra.mxu0 %v604
  %786 = vmatprep.subr.mxu0 %v599
  %787 = vmatpush2.msra.mxu0 %v598
  %788 = vmatprep.subr.mxu0 %v593
  %789 = vmatpush2.msra.mxu0 %v592
  %790 = vmatprep.subr.mxu0 %v587
  %791 = vmatpush2.msra.mxu0 %v586
  %792 = vmatprep.subr.mxu0 %v581
  %793 = vmatpush2.msra.mxu0 %v580
  %794 = vmatprep.subr.mxu0 %v575
  %795 = vmatpush2.msra.mxu0 %v574
  %796 = vmatprep.subr.mxu0 %v569
  %797 = vmatpush2.msra.mxu0 %v568
  %798 = vmatprep.subr.mxu0 %v563
  %799 = vmatpush2.msra.mxu0 %v562
  %800 = vmatprep.subr.mxu0 %v557
  %801 = vmatpush2.msra.mxu0 %v556
  %802 = vmatprep.subr.mxu0 %v551
  %803 = vmatpush2.msra.mxu0 %v550
  %804 = vmatprep.subr.mxu0 %v545
  %805 = vmatpush2.msra.mxu0 %v544
  %806 = vmatprep.subr.mxu0 %v539
  %807 = vmatpush2.msra.mxu0 %v538
  %808 = vmatprep.subr.mxu0 %v533
  %809 = vmatpush2.msra.mxu0 %v532
  %810 = vmatprep.subr.mxu0 %v527
  %811 = vmatpush2.msra.mxu0 %v526
  %812 = vmatprep.subr.mxu0 %v521
  %813 = vmatpush2.msra.mxu0 %v520
  %814 = vmatprep.subr.mxu0 %v515
  %815 = vmatpush2.msra.mxu0 %v514
  %816 = vmatprep.mubr.f32.mxu0 %v33
  %817 = vmatmul.mubr.f32.gmra.mxu0 %v32
  %v818 = vpop.f32.mrf.mxu0
  %v819 = vadd.f32 %v748, %v818
  %v820 = vpop.f32.mrf.mxu0
  %v821 = vadd.f32 %v750, %v820
  %822 = vdwg.mxu0
  %823 = vmatprep.subr.mxu0 %v127
  %824 = vmatpush1.msra.mxu0 %v126
  %825 = vmatprep.subr.mxu0 %v121
  %826 = vmatpush1.msra.mxu0 %v120
  %827 = vmatprep.subr.mxu0 %v115
  %828 = vmatpush1.msra.mxu0 %v114
  %829 = vmatprep.subr.mxu0 %v109
  %830 = vmatpush1.msra.mxu0 %v108
  %831 = vmatprep.subr.mxu0 %v103
  %832 = vmatpush1.msra.mxu0 %v102
  %833 = vmatprep.subr.mxu0 %v97
  %834 = vmatpush1.msra.mxu0 %v96
  %835 = vmatprep.subr.mxu0 %v91
  %836 = vmatpush1.msra.mxu0 %v90
  %837 = vmatprep.subr.mxu0 %v85
  %838 = vmatpush1.msra.mxu0 %v84
  %839 = vmatprep.subr.mxu0 %v79
  %840 = vmatpush1.msra.mxu0 %v78
  %841 = vmatprep.subr.mxu0 %v73
  %842 = vmatpush1.msra.mxu0 %v72
  %843 = vmatprep.subr.mxu0 %v67
  %844 = vmatpush1.msra.mxu0 %v66
  %845 = vmatprep.subr.mxu0 %v61
  %846 = vmatpush1.msra.mxu0 %v60
  %847 = vmatprep.subr.mxu0 %v55
  %848 = vmatpush1.msra.mxu0 %v54
  %849 = vmatprep.subr.mxu0 %v49
  %850 = vmatpush1.msra.mxu0 %v48
  %851 = vmatprep.subr.mxu0 %v43
  %852 = vmatpush1.msra.mxu0 %v42
  %853 = vmatprep.subr.mxu0 %v37
  %854 = vmatpush1.msra.mxu0 %v36
  %855 = vmatprep.subr.mxu0 %v223
  %856 = vmatpush2.msra.mxu0 %v222
  %857 = vmatprep.subr.mxu0 %v217
  %858 = vmatpush2.msra.mxu0 %v216
  %859 = vmatprep.subr.mxu0 %v211
  %860 = vmatpush2.msra.mxu0 %v210
  %861 = vmatprep.subr.mxu0 %v205
  %862 = vmatpush2.msra.mxu0 %v204
  %863 = vmatprep.subr.mxu0 %v199
  %864 = vmatpush2.msra.mxu0 %v198
  %865 = vmatprep.subr.mxu0 %v193
  %866 = vmatpush2.msra.mxu0 %v192
  %867 = vmatprep.subr.mxu0 %v187
  %868 = vmatpush2.msra.mxu0 %v186
  %869 = vmatprep.subr.mxu0 %v181
  %870 = vmatpush2.msra.mxu0 %v180
  %871 = vmatprep.subr.mxu0 %v175
  %872 = vmatpush2.msra.mxu0 %v174
  %873 = vmatprep.subr.mxu0 %v169
  %874 = vmatpush2.msra.mxu0 %v168
  %875 = vmatprep.subr.mxu0 %v163
  %876 = vmatpush2.msra.mxu0 %v162
  %877 = vmatprep.subr.mxu0 %v157
  %878 = vmatpush2.msra.mxu0 %v156
  %879 = vmatprep.subr.mxu0 %v151
  %880 = vmatpush2.msra.mxu0 %v150
  %881 = vmatprep.subr.mxu0 %v145
  %882 = vmatpush2.msra.mxu0 %v144
  %883 = vmatprep.subr.mxu0 %v139
  %884 = vmatpush2.msra.mxu0 %v138
  %885 = vmatprep.subr.mxu0 %v133
  %886 = vmatpush2.msra.mxu0 %v132
  %887 = vmatprep.mubr.f32.mxu0 %v29
  %888 = vmatmul.mubr.f32.gmra.mxu0 %v28
  %v889 = vpop.f32.mrf.mxu0
  %v890 = vadd.f32 0.0, %v889
  %v891 = vpop.f32.mrf.mxu0
  %v892 = vadd.f32 0.0, %v891
  %893 = vdwg.mxu0
  %894 = vmatprep.subr.mxu0 %v319
  %895 = vmatpush1.msra.mxu0 %v318
  %896 = vmatprep.subr.mxu0 %v313
  %897 = vmatpush1.msra.mxu0 %v312
  %898 = vmatprep.subr.mxu0 %v307
  %899 = vmatpush1.msra.mxu0 %v306
  %900 = vmatprep.subr.mxu0 %v301
  %901 = vmatpush1.msra.mxu0 %v300
  %902 = vmatprep.subr.mxu0 %v295
  %903 = vmatpush1.msra.mxu0 %v294
  %904 = vmatprep.subr.mxu0 %v289
  %905 = vmatpush1.msra.mxu0 %v288
  %906 = vmatprep.subr.mxu0 %v283
  %907 = vmatpush1.msra.mxu0 %v282
  %908 = vmatprep.subr.mxu0 %v277
  %909 = vmatpush1.msra.mxu0 %v276
  %910 = vmatprep.subr.mxu0 %v271
  %911 = vmatpush1.msra.mxu0 %v270
  %912 = vmatprep.subr.mxu0 %v265
  %913 = vmatpush1.msra.mxu0 %v264
  %914 = vmatprep.subr.mxu0 %v259
  %915 = vmatpush1.msra.mxu0 %v258
  %916 = vmatprep.subr.mxu0 %v253
  %917 = vmatpush1.msra.mxu0 %v252
  %918 = vmatprep.subr.mxu0 %v247
  %919 = vmatpush1.msra.mxu0 %v246
  %920 = vmatprep.subr.mxu0 %v241
  %921 = vmatpush1.msra.mxu0 %v240
  %922 = vmatprep.subr.mxu0 %v235
  %923 = vmatpush1.msra.mxu0 %v234
  %924 = vmatprep.subr.mxu0 %v229
  %925 = vmatpush1.msra.mxu0 %v228
  %926 = vmatprep.subr.mxu0 %v415
  %927 = vmatpush2.msra.mxu0 %v414
  %928 = vmatprep.subr.mxu0 %v409
  %929 = vmatpush2.msra.mxu0 %v408
  %930 = vmatprep.subr.mxu0 %v403
  %931 = vmatpush2.msra.mxu0 %v402
  %932 = vmatprep.subr.mxu0 %v397
  %933 = vmatpush2.msra.mxu0 %v396
  %934 = vmatprep.subr.mxu0 %v391
  %935 = vmatpush2.msra.mxu0 %v390
  %936 = vmatprep.subr.mxu0 %v385
  %937 = vmatpush2.msra.mxu0 %v384
  %938 = vmatprep.subr.mxu0 %v379
  %939 = vmatpush2.msra.mxu0 %v378
  %940 = vmatprep.subr.mxu0 %v373
  %941 = vmatpush2.msra.mxu0 %v372
  %942 = vmatprep.subr.mxu0 %v367
  %943 = vmatpush2.msra.mxu0 %v366
  %944 = vmatprep.subr.mxu0 %v361
  %945 = vmatpush2.msra.mxu0 %v360
  %946 = vmatprep.subr.mxu0 %v355
  %947 = vmatpush2.msra.mxu0 %v354
  %948 = vmatprep.subr.mxu0 %v349
  %949 = vmatpush2.msra.mxu0 %v348
  %950 = vmatprep.subr.mxu0 %v343
  %951 = vmatpush2.msra.mxu0 %v342
  %952 = vmatprep.subr.mxu0 %v337
  %953 = vmatpush2.msra.mxu0 %v336
  %954 = vmatprep.subr.mxu0 %v331
  %955 = vmatpush2.msra.mxu0 %v330
  %956 = vmatprep.subr.mxu0 %v325
  %957 = vmatpush2.msra.mxu0 %v324
  %958 = vmatprep.mubr.f32.mxu0 %v31
  %959 = vmatmul.mubr.f32.gmra.mxu0 %v30
  %v960 = vpop.f32.mrf.mxu0
  %v961 = vadd.f32 %v890, %v960
  %v962 = vpop.f32.mrf.mxu0
  %v963 = vadd.f32 %v892, %v962
  %964 = vdwg.mxu0
  %965 = vmatprep.subr.mxu0 %v511
  %966 = vmatpush1.msra.mxu0 %v510
  %967 = vmatprep.subr.mxu0 %v505
  %968 = vmatpush1.msra.mxu0 %v504
  %969 = vmatprep.subr.mxu0 %v499
  %970 = vmatpush1.msra.mxu0 %v498
  %971 = vmatprep.subr.mxu0 %v493
  %972 = vmatpush1.msra.mxu0 %v492
  %973 = vmatprep.subr.mxu0 %v487
  %974 = vmatpush1.msra.mxu0 %v486
  %975 = vmatprep.subr.mxu0 %v481
  %976 = vmatpush1.msra.mxu0 %v480
  %977 = vmatprep.subr.mxu0 %v475
  %978 = vmatpush1.msra.mxu0 %v474
  %979 = vmatprep.subr.mxu0 %v469
  %980 = vmatpush1.msra.mxu0 %v468
  %981 = vmatprep.subr.mxu0 %v463
  %982 = vmatpush1.msra.mxu0 %v462
  %983 = vmatprep.subr.mxu0 %v457
  %984 = vmatpush1.msra.mxu0 %v456
  %985 = vmatprep.subr.mxu0 %v451
  %986 = vmatpush1.msra.mxu0 %v450
  %987 = vmatprep.subr.mxu0 %v445
  %988 = vmatpush1.msra.mxu0 %v444
  %989 = vmatprep.subr.mxu0 %v439
  %990 = vmatpush1.msra.mxu0 %v438
  %991 = vmatprep.subr.mxu0 %v433
  %992 = vmatpush1.msra.mxu0 %v432
  %993 = vmatprep.subr.mxu0 %v427
  %994 = vmatpush1.msra.mxu0 %v426
  %995 = vmatprep.subr.mxu0 %v421
  %996 = vmatpush1.msra.mxu0 %v420
  %997 = vmatprep.subr.mxu0 %v607
  %998 = vmatpush2.msra.mxu0 %v606
  %999 = vmatprep.subr.mxu0 %v601
  %1000 = vmatpush2.msra.mxu0 %v600
  %1001 = vmatprep.subr.mxu0 %v595
  %1002 = vmatpush2.msra.mxu0 %v594
  %1003 = vmatprep.subr.mxu0 %v589
  %1004 = vmatpush2.msra.mxu0 %v588
  %1005 = vmatprep.subr.mxu0 %v583
  %1006 = vmatpush2.msra.mxu0 %v582
  %1007 = vmatprep.subr.mxu0 %v577
  %1008 = vmatpush2.msra.mxu0 %v576
  %1009 = vmatprep.subr.mxu0 %v571
  %1010 = vmatpush2.msra.mxu0 %v570
  %1011 = vmatprep.subr.mxu0 %v565
  %1012 = vmatpush2.msra.mxu0 %v564
  %1013 = vmatprep.subr.mxu0 %v559
  %1014 = vmatpush2.msra.mxu0 %v558
  %1015 = vmatprep.subr.mxu0 %v553
  %1016 = vmatpush2.msra.mxu0 %v552
  %1017 = vmatprep.subr.mxu0 %v547
  %1018 = vmatpush2.msra.mxu0 %v546
  %1019 = vmatprep.subr.mxu0 %v541
  %1020 = vmatpush2.msra.mxu0 %v540
  %1021 = vmatprep.subr.mxu0 %v535
  %1022 = vmatpush2.msra.mxu0 %v534
  %1023 = vmatprep.subr.mxu0 %v529
  %1024 = vmatpush2.msra.mxu0 %v528
  %1025 = vmatprep.subr.mxu0 %v523
  %1026 = vmatpush2.msra.mxu0 %v522
  %1027 = vmatprep.subr.mxu0 %v517
  %1028 = vmatpush2.msra.mxu0 %v516
  %1029 = vmatprep.mubr.f32.mxu0 %v33
  %1030 = vmatmul.mubr.f32.gmra.mxu0 %v32
  %v1031 = vpop.f32.mrf.mxu0
  %v1032 = vadd.f32 %v961, %v1031
  %v1033 = vpop.f32.mrf.mxu0
  %v1034 = vadd.f32 %v963, %v1033
  %1035 = vdwg.mxu0
  %1036 = vmatprep.subr.mxu0 %v129
  %1037 = vmatpush1.msra.mxu0 %v128
  %1038 = vmatprep.subr.mxu0 %v123
  %1039 = vmatpush1.msra.mxu0 %v122
  %1040 = vmatprep.subr.mxu0 %v117
  %1041 = vmatpush1.msra.mxu0 %v116
  %1042 = vmatprep.subr.mxu0 %v111
  %1043 = vmatpush1.msra.mxu0 %v110
  %1044 = vmatprep.subr.mxu0 %v105
  %1045 = vmatpush1.msra.mxu0 %v104
  %1046 = vmatprep.subr.mxu0 %v99
  %1047 = vmatpush1.msra.mxu0 %v98
  %1048 = vmatprep.subr.mxu0 %v93
  %1049 = vmatpush1.msra.mxu0 %v92
  %1050 = vmatprep.subr.mxu0 %v87
  %1051 = vmatpush1.msra.mxu0 %v86
  %1052 = vmatprep.subr.mxu0 %v81
  %1053 = vmatpush1.msra.mxu0 %v80
  %1054 = vmatprep.subr.mxu0 %v75
  %1055 = vmatpush1.msra.mxu0 %v74
  %1056 = vmatprep.subr.mxu0 %v69
  %1057 = vmatpush1.msra.mxu0 %v68
  %1058 = vmatprep.subr.mxu0 %v63
  %1059 = vmatpush1.msra.mxu0 %v62
  %1060 = vmatprep.subr.mxu0 %v57
  %1061 = vmatpush1.msra.mxu0 %v56
  %1062 = vmatprep.subr.mxu0 %v51
  %1063 = vmatpush1.msra.mxu0 %v50
  %1064 = vmatprep.subr.mxu0 %v45
  %1065 = vmatpush1.msra.mxu0 %v44
  %1066 = vmatprep.subr.mxu0 %v39
  %1067 = vmatpush1.msra.mxu0 %v38
  %1068 = vmatprep.subr.mxu0 %v225
  %1069 = vmatpush2.msra.mxu0 %v224
  %1070 = vmatprep.subr.mxu0 %v219
  %1071 = vmatpush2.msra.mxu0 %v218
  %1072 = vmatprep.subr.mxu0 %v213
  %1073 = vmatpush2.msra.mxu0 %v212
  %1074 = vmatprep.subr.mxu0 %v207
  %1075 = vmatpush2.msra.mxu0 %v206
  %1076 = vmatprep.subr.mxu0 %v201
  %1077 = vmatpush2.msra.mxu0 %v200
  %1078 = vmatprep.subr.mxu0 %v195
  %1079 = vmatpush2.msra.mxu0 %v194
  %1080 = vmatprep.subr.mxu0 %v189
  %1081 = vmatpush2.msra.mxu0 %v188
  %1082 = vmatprep.subr.mxu0 %v183
  %1083 = vmatpush2.msra.mxu0 %v182
  %1084 = vmatprep.subr.mxu0 %v177
  %1085 = vmatpush2.msra.mxu0 %v176
  %1086 = vmatprep.subr.mxu0 %v171
  %1087 = vmatpush2.msra.mxu0 %v170
  %1088 = vmatprep.subr.mxu0 %v165
  %1089 = vmatpush2.msra.mxu0 %v164
  %1090 = vmatprep.subr.mxu0 %v159
  %1091 = vmatpush2.msra.mxu0 %v158
  %1092 = vmatprep.subr.mxu0 %v153
  %1093 = vmatpush2.msra.mxu0 %v152
  %1094 = vmatprep.subr.mxu0 %v147
  %1095 = vmatpush2.msra.mxu0 %v146
  %1096 = vmatprep.subr.mxu0 %v141
  %1097 = vmatpush2.msra.mxu0 %v140
  %1098 = vmatprep.subr.mxu0 %v135
  %1099 = vmatpush2.msra.mxu0 %v134
  %1100 = vmatprep.mubr.f32.mxu0 %v29
  %1101 = vmatmul.mubr.f32.gmra.mxu0 %v28
  %v1102 = vpop.f32.mrf.mxu0
  %v1103 = vadd.f32 0.0, %v1102
  %v1104 = vpop.f32.mrf.mxu0
  %v1105 = vadd.f32 0.0, %v1104
  %1106 = vdwg.mxu0
  %1107 = vmatprep.subr.mxu0 %v321
  %1108 = vmatpush1.msra.mxu0 %v320
  %1109 = vmatprep.subr.mxu0 %v315
  %1110 = vmatpush1.msra.mxu0 %v314
  %1111 = vmatprep.subr.mxu0 %v309
  %1112 = vmatpush1.msra.mxu0 %v308
  %1113 = vmatprep.subr.mxu0 %v303
  %1114 = vmatpush1.msra.mxu0 %v302
  %1115 = vmatprep.subr.mxu0 %v297
  %1116 = vmatpush1.msra.mxu0 %v296
  %1117 = vmatprep.subr.mxu0 %v291
  %1118 = vmatpush1.msra.mxu0 %v290
  %1119 = vmatprep.subr.mxu0 %v285
  %1120 = vmatpush1.msra.mxu0 %v284
  %1121 = vmatprep.subr.mxu0 %v279
  %1122 = vmatpush1.msra.mxu0 %v278
  %1123 = vmatprep.subr.mxu0 %v273
  %1124 = vmatpush1.msra.mxu0 %v272
  %1125 = vmatprep.subr.mxu0 %v267
  %1126 = vmatpush1.msra.mxu0 %v266
  %1127 = vmatprep.subr.mxu0 %v261
  %1128 = vmatpush1.msra.mxu0 %v260
  %1129 = vmatprep.subr.mxu0 %v255
  %1130 = vmatpush1.msra.mxu0 %v254
  %1131 = vmatprep.subr.mxu0 %v249
  %1132 = vmatpush1.msra.mxu0 %v248
  %1133 = vmatprep.subr.mxu0 %v243
  %1134 = vmatpush1.msra.mxu0 %v242
  %1135 = vmatprep.subr.mxu0 %v237
  %1136 = vmatpush1.msra.mxu0 %v236
  %1137 = vmatprep.subr.mxu0 %v231
  %1138 = vmatpush1.msra.mxu0 %v230
  %1139 = vmatprep.subr.mxu0 %v417
  %1140 = vmatpush2.msra.mxu0 %v416
  %1141 = vmatprep.subr.mxu0 %v411
  %1142 = vmatpush2.msra.mxu0 %v410
  %1143 = vmatprep.subr.mxu0 %v405
  %1144 = vmatpush2.msra.mxu0 %v404
  %1145 = vmatprep.subr.mxu0 %v399
  %1146 = vmatpush2.msra.mxu0 %v398
  %1147 = vmatprep.subr.mxu0 %v393
  %1148 = vmatpush2.msra.mxu0 %v392
  %1149 = vmatprep.subr.mxu0 %v387
  %1150 = vmatpush2.msra.mxu0 %v386
  %1151 = vmatprep.subr.mxu0 %v381
  %1152 = vmatpush2.msra.mxu0 %v380
  %1153 = vmatprep.subr.mxu0 %v375
  %1154 = vmatpush2.msra.mxu0 %v374
  %1155 = vmatprep.subr.mxu0 %v369
  %1156 = vmatpush2.msra.mxu0 %v368
  %1157 = vmatprep.subr.mxu0 %v363
  %1158 = vmatpush2.msra.mxu0 %v362
  %1159 = vmatprep.subr.mxu0 %v357
  %1160 = vmatpush2.msra.mxu0 %v356
  %1161 = vmatprep.subr.mxu0 %v351
  %1162 = vmatpush2.msra.mxu0 %v350
  %1163 = vmatprep.subr.mxu0 %v345
  %1164 = vmatpush2.msra.mxu0 %v344
  %1165 = vmatprep.subr.mxu0 %v339
  %1166 = vmatpush2.msra.mxu0 %v338
  %1167 = vmatprep.subr.mxu0 %v333
  %1168 = vmatpush2.msra.mxu0 %v332
  %1169 = vmatprep.subr.mxu0 %v327
  %1170 = vmatpush2.msra.mxu0 %v326
  %1171 = vmatprep.mubr.f32.mxu0 %v31
  %1172 = vmatmul.mubr.f32.gmra.mxu0 %v30
  %v1173 = vpop.f32.mrf.mxu0
  %v1174 = vadd.f32 %v1103, %v1173
  %v1175 = vpop.f32.mrf.mxu0
  %v1176 = vadd.f32 %v1105, %v1175
  %1177 = vdwg.mxu0
  %1178 = vmatprep.subr.mxu0 %v513
  %1179 = vmatpush1.msra.mxu0 %v512
  %1180 = vmatprep.subr.mxu0 %v507
  %1181 = vmatpush1.msra.mxu0 %v506
  %1182 = vmatprep.subr.mxu0 %v501
  %1183 = vmatpush1.msra.mxu0 %v500
  %1184 = vmatprep.subr.mxu0 %v495
  %1185 = vmatpush1.msra.mxu0 %v494
  %1186 = vmatprep.subr.mxu0 %v489
  %1187 = vmatpush1.msra.mxu0 %v488
  %1188 = vmatprep.subr.mxu0 %v483
  %1189 = vmatpush1.msra.mxu0 %v482
  %1190 = vmatprep.subr.mxu0 %v477
  %1191 = vmatpush1.msra.mxu0 %v476
  %1192 = vmatprep.subr.mxu0 %v471
  %1193 = vmatpush1.msra.mxu0 %v470
  %1194 = vmatprep.subr.mxu0 %v465
  %1195 = vmatpush1.msra.mxu0 %v464
  %1196 = vmatprep.subr.mxu0 %v459
  %1197 = vmatpush1.msra.mxu0 %v458
  %1198 = vmatprep.subr.mxu0 %v453
  %1199 = vmatpush1.msra.mxu0 %v452
  %1200 = vmatprep.subr.mxu0 %v447
  %1201 = vmatpush1.msra.mxu0 %v446
  %1202 = vmatprep.subr.mxu0 %v441
  %1203 = vmatpush1.msra.mxu0 %v440
  %1204 = vmatprep.subr.mxu0 %v435
  %1205 = vmatpush1.msra.mxu0 %v434
  %1206 = vmatprep.subr.mxu0 %v429
  %1207 = vmatpush1.msra.mxu0 %v428
  %1208 = vmatprep.subr.mxu0 %v423
  %1209 = vmatpush1.msra.mxu0 %v422
  %1210 = vmatprep.subr.mxu0 %v609
  %1211 = vmatpush2.msra.mxu0 %v608
  %1212 = vmatprep.subr.mxu0 %v603
  %1213 = vmatpush2.msra.mxu0 %v602
  %1214 = vmatprep.subr.mxu0 %v597
  %1215 = vmatpush2.msra.mxu0 %v596
  %1216 = vmatprep.subr.mxu0 %v591
  %1217 = vmatpush2.msra.mxu0 %v590
  %1218 = vmatprep.subr.mxu0 %v585
  %1219 = vmatpush2.msra.mxu0 %v584
  %1220 = vmatprep.subr.mxu0 %v579
  %1221 = vmatpush2.msra.mxu0 %v578
  %1222 = vmatprep.subr.mxu0 %v573
  %1223 = vmatpush2.msra.mxu0 %v572
  %1224 = vmatprep.subr.mxu0 %v567
  %1225 = vmatpush2.msra.mxu0 %v566
  %1226 = vmatprep.subr.mxu0 %v561
  %1227 = vmatpush2.msra.mxu0 %v560
  %1228 = vmatprep.subr.mxu0 %v555
  %1229 = vmatpush2.msra.mxu0 %v554
  %1230 = vmatprep.subr.mxu0 %v549
  %1231 = vmatpush2.msra.mxu0 %v548
  %1232 = vmatprep.subr.mxu0 %v543
  %1233 = vmatpush2.msra.mxu0 %v542
  %1234 = vmatprep.subr.mxu0 %v537
  %1235 = vmatpush2.msra.mxu0 %v536
  %1236 = vmatprep.subr.mxu0 %v531
  %1237 = vmatpush2.msra.mxu0 %v530
  %1238 = vmatprep.subr.mxu0 %v525
  %1239 = vmatpush2.msra.mxu0 %v524
  %1240 = vmatprep.subr.mxu0 %v519
  %1241 = vmatpush2.msra.mxu0 %v518
  %1242 = vmatprep.mubr.f32.mxu0 %v33
  %1243 = vmatmul.mubr.f32.gmra.mxu0 %v32
  %v1244 = vpop.f32.mrf.mxu0
  %v1245 = vadd.f32 %v1174, %v1244
  %v1246 = vpop.f32.mrf.mxu0
  %v1247 = vadd.f32 %v1176, %v1246
  %1248 = vdwg.mxu0
  %v1249 = vld [vmem:[%s2] sm:$0x3]
  %v1250 = vld [vmem:[%s3] sm:$0x3]
  %1252 = vset.pattern.permute.xlu0 0
  %1253 = vperm.xlu0 %1252, %v1250
  %v1254 = vpop.permute.xlu0 %1253
  %vm1256 = vcmask 64512
  %v1258 = vsel %vm1256, %v1249, 0
  %1260 = vmatprep.subr.mxu0 0.0
  %1261 = vmatpush1.msra.mxu0 0.0
  %1262 = vmatprep.subr.mxu0 0.0
  %1263 = vmatpush1.msra.mxu0 0.0
  %1264 = vmatprep.subr.mxu0 0.0
  %1265 = vmatpush1.msra.mxu0 0.0
  %1266 = vmatprep.subr.mxu0 0.0
  %1267 = vmatpush1.msra.mxu0 0.0
  %1268 = vmatprep.subr.mxu0 0.0
  %1269 = vmatpush1.msra.mxu0 0.0
  %1270 = vmatprep.subr.mxu0 0.0
  %1271 = vmatpush1.msra.mxu0 0.0
  %1272 = vmatprep.subr.mxu0 0.0
  %1273 = vmatpush1.msra.mxu0 0.0
  %1274 = vmatprep.subr.mxu0 0.0
  %1275 = vmatpush1.msra.mxu0 0.0
  %1276 = vmatprep.subr.mxu0 0.0
  %1277 = vmatpush1.msra.mxu0 0.0
  %1278 = vmatprep.subr.mxu0 0.0
  %1279 = vmatpush1.msra.mxu0 0.0
  %1280 = vmatprep.subr.mxu0 0.0
  %1281 = vmatpush1.msra.mxu0 0.0
  %1282 = vmatprep.subr.mxu0 0.0
  %1283 = vmatpush1.msra.mxu0 0.0
  %1284 = vmatprep.subr.mxu0 0.0
  %1285 = vmatpush1.msra.mxu0 0.0
  %1286 = vmatprep.subr.mxu0 0.0
  %1287 = vmatpush1.msra.mxu0 0.0
  %1288 = vmatprep.subr.mxu0 0.0
  %1289 = vmatpush1.msra.mxu0 0.0
  %1290 = vmatprep.subr.mxu0 %v821
  %1291 = vmatpush1.msra.mxu0 %v819
  %1292 = vmatprep.subr.mxu0 0.0
  %1293 = vmatpush2.msra.mxu0 0.0
  %1294 = vmatprep.subr.mxu0 0.0
  %1295 = vmatpush2.msra.mxu0 0.0
  %1296 = vmatprep.subr.mxu0 0.0
  %1297 = vmatpush2.msra.mxu0 0.0
  %1298 = vmatprep.subr.mxu0 0.0
  %1299 = vmatpush2.msra.mxu0 0.0
  %1300 = vmatprep.subr.mxu0 0.0
  %1301 = vmatpush2.msra.mxu0 0.0
  %1302 = vmatprep.subr.mxu0 0.0
  %1303 = vmatpush2.msra.mxu0 0.0
  %1304 = vmatprep.subr.mxu0 0.0
  %1305 = vmatpush2.msra.mxu0 0.0
  %1306 = vmatprep.subr.mxu0 0.0
  %1307 = vmatpush2.msra.mxu0 0.0
  %1308 = vmatprep.subr.mxu0 0.0
  %1309 = vmatpush2.msra.mxu0 0.0
  %1310 = vmatprep.subr.mxu0 0.0
  %1311 = vmatpush2.msra.mxu0 0.0
  %1312 = vmatprep.subr.mxu0 0.0
  %1313 = vmatpush2.msra.mxu0 0.0
  %1314 = vmatprep.subr.mxu0 0.0
  %1315 = vmatpush2.msra.mxu0 0.0
  %1316 = vmatprep.subr.mxu0 0.0
  %1317 = vmatpush2.msra.mxu0 0.0
  %1318 = vmatprep.subr.mxu0 0.0
  %1319 = vmatpush2.msra.mxu0 0.0
  %1320 = vmatprep.subr.mxu0 0.0
  %1321 = vmatpush2.msra.mxu0 0.0
  %1322 = vmatprep.subr.mxu0 0.0
  %1323 = vmatpush2.msra.mxu0 0.0
  %1324 = vmatprep.mubr.f32.mxu0 0.0
  %1325 = vmatmul.mubr.f32.gmra.mxu0 %v1258
  %v1326 = vpop.f32.mrf.mxu0
  %v1327 = vadd.f32 %v1254, %v1326
  %v1328 = vpop.f32.mrf.mxu0
  %v1329 = vadd.f32 %v1254, %v1328
  %1330 = vdwg.mxu0
  %1331 = vmatprep.subr.mxu0 0.0
  %1332 = vmatpush1.msra.mxu0 0.0
  %1333 = vmatprep.subr.mxu0 0.0
  %1334 = vmatpush1.msra.mxu0 0.0
  %1335 = vmatprep.subr.mxu0 0.0
  %1336 = vmatpush1.msra.mxu0 0.0
  %1337 = vmatprep.subr.mxu0 0.0
  %1338 = vmatpush1.msra.mxu0 0.0
  %1339 = vmatprep.subr.mxu0 0.0
  %1340 = vmatpush1.msra.mxu0 0.0
  %1341 = vmatprep.subr.mxu0 0.0
  %1342 = vmatpush1.msra.mxu0 0.0
  %1343 = vmatprep.subr.mxu0 0.0
  %1344 = vmatpush1.msra.mxu0 0.0
  %1345 = vmatprep.subr.mxu0 0.0
  %1346 = vmatpush1.msra.mxu0 0.0
  %1347 = vmatprep.subr.mxu0 0.0
  %1348 = vmatpush1.msra.mxu0 0.0
  %1349 = vmatprep.subr.mxu0 0.0
  %1350 = vmatpush1.msra.mxu0 0.0
  %1351 = vmatprep.subr.mxu0 0.0
  %1352 = vmatpush1.msra.mxu0 0.0
  %1353 = vmatprep.subr.mxu0 0.0
  %1354 = vmatpush1.msra.mxu0 0.0
  %1355 = vmatprep.subr.mxu0 0.0
  %1356 = vmatpush1.msra.mxu0 0.0
  %1357 = vmatprep.subr.mxu0 0.0
  %1358 = vmatpush1.msra.mxu0 0.0
  %1359 = vmatprep.subr.mxu0 0.0
  %1360 = vmatpush1.msra.mxu0 0.0
  %1361 = vmatprep.subr.mxu0 %v1034
  %1362 = vmatpush1.msra.mxu0 %v1032
  %1363 = vmatprep.subr.mxu0 0.0
  %1364 = vmatpush2.msra.mxu0 0.0
  %1365 = vmatprep.subr.mxu0 0.0
  %1366 = vmatpush2.msra.mxu0 0.0
  %1367 = vmatprep.subr.mxu0 0.0
  %1368 = vmatpush2.msra.mxu0 0.0
  %1369 = vmatprep.subr.mxu0 0.0
  %1370 = vmatpush2.msra.mxu0 0.0
  %1371 = vmatprep.subr.mxu0 0.0
  %1372 = vmatpush2.msra.mxu0 0.0
  %1373 = vmatprep.subr.mxu0 0.0
  %1374 = vmatpush2.msra.mxu0 0.0
  %1375 = vmatprep.subr.mxu0 0.0
  %1376 = vmatpush2.msra.mxu0 0.0
  %1377 = vmatprep.subr.mxu0 0.0
  %1378 = vmatpush2.msra.mxu0 0.0
  %1379 = vmatprep.subr.mxu0 0.0
  %1380 = vmatpush2.msra.mxu0 0.0
  %1381 = vmatprep.subr.mxu0 0.0
  %1382 = vmatpush2.msra.mxu0 0.0
  %1383 = vmatprep.subr.mxu0 0.0
  %1384 = vmatpush2.msra.mxu0 0.0
  %1385 = vmatprep.subr.mxu0 0.0
  %1386 = vmatpush2.msra.mxu0 0.0
  %1387 = vmatprep.subr.mxu0 0.0
  %1388 = vmatpush2.msra.mxu0 0.0
  %1389 = vmatprep.subr.mxu0 0.0
  %1390 = vmatpush2.msra.mxu0 0.0
  %1391 = vmatprep.subr.mxu0 0.0
  %1392 = vmatpush2.msra.mxu0 0.0
  %1393 = vmatprep.subr.mxu0 0.0
  %1394 = vmatpush2.msra.mxu0 0.0
  %1395 = vmatprep.mubr.f32.mxu0 0.0
  %1396 = vmatmul.mubr.f32.gmra.mxu0 %v1258
  %v1397 = vpop.f32.mrf.mxu0
  %v1398 = vadd.f32 %v1254, %v1397
  %v1399 = vpop.f32.mrf.mxu0
  %v1400 = vadd.f32 %v1254, %v1399
  %1401 = vdwg.mxu0
  %1402 = vmatprep.subr.mxu0 0.0
  %1403 = vmatpush1.msra.mxu0 0.0
  %1404 = vmatprep.subr.mxu0 0.0
  %1405 = vmatpush1.msra.mxu0 0.0
  %1406 = vmatprep.subr.mxu0 0.0
  %1407 = vmatpush1.msra.mxu0 0.0
  %1408 = vmatprep.subr.mxu0 0.0
  %1409 = vmatpush1.msra.mxu0 0.0
  %1410 = vmatprep.subr.mxu0 0.0
  %1411 = vmatpush1.msra.mxu0 0.0
  %1412 = vmatprep.subr.mxu0 0.0
  %1413 = vmatpush1.msra.mxu0 0.0
  %1414 = vmatprep.subr.mxu0 0.0
  %1415 = vmatpush1.msra.mxu0 0.0
  %1416 = vmatprep.subr.mxu0 0.0
  %1417 = vmatpush1.msra.mxu0 0.0
  %1418 = vmatprep.subr.mxu0 0.0
  %1419 = vmatpush1.msra.mxu0 0.0
  %1420 = vmatprep.subr.mxu0 0.0
  %1421 = vmatpush1.msra.mxu0 0.0
  %1422 = vmatprep.subr.mxu0 0.0
  %1423 = vmatpush1.msra.mxu0 0.0
  %1424 = vmatprep.subr.mxu0 0.0
  %1425 = vmatpush1.msra.mxu0 0.0
  %1426 = vmatprep.subr.mxu0 0.0
  %1427 = vmatpush1.msra.mxu0 0.0
  %1428 = vmatprep.subr.mxu0 0.0
  %1429 = vmatpush1.msra.mxu0 0.0
  %1430 = vmatprep.subr.mxu0 0.0
  %1431 = vmatpush1.msra.mxu0 0.0
  %1432 = vmatprep.subr.mxu0 %v1247
  %1433 = vmatpush1.msra.mxu0 %v1245
  %1434 = vmatprep.subr.mxu0 0.0
  %1435 = vmatpush2.msra.mxu0 0.0
  %1436 = vmatprep.subr.mxu0 0.0
  %1437 = vmatpush2.msra.mxu0 0.0
  %1438 = vmatprep.subr.mxu0 0.0
  %1439 = vmatpush2.msra.mxu0 0.0
  %1440 = vmatprep.subr.mxu0 0.0
  %1441 = vmatpush2.msra.mxu0 0.0
  %1442 = vmatprep.subr.mxu0 0.0
  %1443 = vmatpush2.msra.mxu0 0.0
  %1444 = vmatprep.subr.mxu0 0.0
  %1445 = vmatpush2.msra.mxu0 0.0
  %1446 = vmatprep.subr.mxu0 0.0
  %1447 = vmatpush2.msra.mxu0 0.0
  %1448 = vmatprep.subr.mxu0 0.0
  %1449 = vmatpush2.msra.mxu0 0.0
  %1450 = vmatprep.subr.mxu0 0.0
  %1451 = vmatpush2.msra.mxu0 0.0
  %1452 = vmatprep.subr.mxu0 0.0
  %1453 = vmatpush2.msra.mxu0 0.0
  %1454 = vmatprep.subr.mxu0 0.0
  %1455 = vmatpush2.msra.mxu0 0.0
  %1456 = vmatprep.subr.mxu0 0.0
  %1457 = vmatpush2.msra.mxu0 0.0
  %1458 = vmatprep.subr.mxu0 0.0
  %1459 = vmatpush2.msra.mxu0 0.0
  %1460 = vmatprep.subr.mxu0 0.0
  %1461 = vmatpush2.msra.mxu0 0.0
  %1462 = vmatprep.subr.mxu0 0.0
  %1463 = vmatpush2.msra.mxu0 0.0
  %1464 = vmatprep.subr.mxu0 0.0
  %1465 = vmatpush2.msra.mxu0 0.0
  %1466 = vmatprep.mubr.f32.mxu0 0.0
  %1467 = vmatmul.mubr.f32.gmra.mxu0 %v1258
  %v1468 = vpop.f32.mrf.mxu0
  %v1469 = vadd.f32 %v1254, %v1468
  %v1470 = vpop.f32.mrf.mxu0
  %v1471 = vadd.f32 %v1254, %v1470
  %1472 = vdwg.mxu0
  %v1479 = vcombine.low %v1327, %v1329
  %v1480 = vcombine.low %v1398, %v1400
  %v1482 = vunpack.c.l.s4 1983009808
  %v1483 = vunpack.c.0.s8 %v1482
  %v1484 = vlaneseq
  %v1485 = vshrl.u32 %v1484, 7
  %v1486 = vsub.s32 %v1483, %v1485
  %v1487 = vrot.slane %v1479, %v1486
  %v1489 = vunpack.c.l.s4 1983009808
  %v1490 = vunpack.c.0.s8 %v1489
  %v1491 = vlaneseq
  %v1492 = vshrl.u32 %v1491, 7
  %v1493 = vsub.s32 %v1490, %v1492
  %v1494 = vrot.slane %v1480, %v1493
  %v1495 = vcombine.low %v1487, %v1494
  %v1496 = vcombine.low %v1469, %v1471
  %v1498 = vunpack.c.l.s4 1983009808
  %v1499 = vunpack.c.0.s8 %v1498
  %v1500 = vlaneseq
  %v1501 = vshrl.u32 %v1500, 7
  %v1502 = vsub.s32 %v1499, %v1501
  %v1503 = vrot.slane %v1496, %v1502
  %1506 = vst [vmem:[%s7] sm:$0xff] %v1495
  %1507 = vst [vmem:[%s7 + $0x8] sm:$0xf] %v1503
  %v1508 = vld [vmem:[%s5] sm:$0x3]
  %v1509 = vld [vmem:[%s4] sm:$0xff]
  %v1510 = vld [vmem:[%s4 + $0x8] sm:$0xff]
  %v1511 = vld [vmem:[%s4 + $0x10] sm:$0xff]
  %v1512 = vld [vmem:[%s4 + $0x18] sm:$0xff]
  %v1513 = vld [vmem:[%s6] sm:$0x3]
  %1515 = vset.pattern.permute.xlu0 0
  %1516 = vperm.xlu0 %1515, %v1513
  %v1517 = vpop.permute.xlu0 %1516
  %vm1519 = vcmask 261120
  %v1521 = vsel %vm1519, %v1508, 0
  %1523 = vmatprep.subr.mxu0 0.0
  %1524 = vmatpush1.msra.mxu0 0.0
  %1525 = vmatprep.subr.mxu0 0.0
  %1526 = vmatpush1.msra.mxu0 0.0
  %1527 = vmatprep.subr.mxu0 0.0
  %1528 = vmatpush1.msra.mxu0 0.0
  %1529 = vmatprep.subr.mxu0 0.0
  %1530 = vmatpush1.msra.mxu0 0.0
  %1531 = vmatprep.subr.mxu0 0.0
  %1532 = vmatpush1.msra.mxu0 0.0
  %1533 = vmatprep.subr.mxu0 0.0
  %1534 = vmatpush1.msra.mxu0 0.0
  %1535 = vmatprep.subr.mxu0 0.0
  %1536 = vmatpush1.msra.mxu0 0.0
  %1537 = vmatprep.subr.mxu0 0.0
  %1538 = vmatpush1.msra.mxu0 0.0
  %1539 = vmatprep.subr.mxu0 0.0
  %1540 = vmatpush1.msra.mxu0 0.0
  %1541 = vmatprep.subr.mxu0 0.0
  %1542 = vmatpush1.msra.mxu0 0.0
  %1543 = vmatprep.subr.mxu0 0.0
  %1544 = vmatpush1.msra.mxu0 0.0
  %1545 = vmatprep.subr.mxu0 0.0
  %1546 = vmatpush1.msra.mxu0 0.0
  %1547 = vmatprep.subr.mxu0 0.0
  %1548 = vmatpush1.msra.mxu0 %v1512
  %1549 = vmatprep.subr.mxu0 0.0
  %1550 = vmatpush1.msra.mxu0 %v1511
  %1551 = vmatprep.subr.mxu0 0.0
  %1552 = vmatpush1.msra.mxu0 %v1510
  %1553 = vmatprep.subr.mxu0 0.0
  %1554 = vmatpush1.msra.mxu0 %v1509
  %1555 = vmatprep.subr.mxu0 0.0
  %1556 = vmatpush2.msra.mxu0 0.0
  %1557 = vmatprep.subr.mxu0 0.0
  %1558 = vmatpush2.msra.mxu0 0.0
  %1559 = vmatprep.subr.mxu0 0.0
  %1560 = vmatpush2.msra.mxu0 0.0
  %1561 = vmatprep.subr.mxu0 0.0
  %1562 = vmatpush2.msra.mxu0 0.0
  %1563 = vmatprep.subr.mxu0 0.0
  %1564 = vmatpush2.msra.mxu0 0.0
  %1565 = vmatprep.subr.mxu0 0.0
  %1566 = vmatpush2.msra.mxu0 0.0
  %1567 = vmatprep.subr.mxu0 0.0
  %1568 = vmatpush2.msra.mxu0 0.0
  %1569 = vmatprep.subr.mxu0 0.0
  %1570 = vmatpush2.msra.mxu0 0.0
  %1571 = vmatprep.subr.mxu0 0.0
  %1572 = vmatpush2.msra.mxu0 0.0
  %1573 = vmatprep.subr.mxu0 0.0
  %1574 = vmatpush2.msra.mxu0 0.0
  %1575 = vmatprep.subr.mxu0 0.0
  %1576 = vmatpush2.msra.mxu0 0.0
  %1577 = vmatprep.subr.mxu0 0.0
  %1578 = vmatpush2.msra.mxu0 0.0
  %1579 = vmatprep.subr.mxu0 0.0
  %1580 = vmatpush2.msra.mxu0 0.0
  %1581 = vmatprep.subr.mxu0 0.0
  %1582 = vmatpush2.msra.mxu0 0.0
  %1583 = vmatprep.subr.mxu0 0.0
  %1584 = vmatpush2.msra.mxu0 0.0
  %1585 = vmatprep.subr.mxu0 0.0
  %1586 = vmatpush2.msra.mxu0 0.0
  %1587 = vmatprep.mubr.f32.mxu0 0.0
  %1588 = vmatmul.mubr.f32.gmra.mxu0 %v1521
  %v1589 = vpop.f32.mrf.mxu0
  %v1590 = vadd.f32 %v1517, %v1589
  %v1591 = vpop.f32.mrf.mxu0
  %1592 = vdwg.mxu0
  %1593 = vst [vmem:[%s8] sm:$0x3] %v1590
  // Predicated region
  $region30: #{run.3} parent=0 // pred_check
    _
  $region31: #{run.3} parent=0 // pred_check_branch
    %1595 = sbr.rel (0) target = $region33
  $region32: #{run.3} parent=0 // pred_region
    _
  $region33: #{run.3} parent=0 // pred_fallthru
    _
  // Predicated region
  $region34: #{run.3} parent=0 // pred_check
    _
  $region35: #{run.3} parent=0 // pred_check_branch
    %1597 = sbr.rel (0) target = $region37
  $region36: #{run.3} parent=0 // pred_region
    _
  $region37: #{run.3} parent=0 // pred_fallthru
    _
  // Predicated region
  $region38: #{run.3} parent=0 // pred_check
    _
  $region39: #{run.3} parent=0 // pred_check_branch
    %1599 = sbr.rel (0) target = $region41
  $region40: #{run.3} parent=0 // pred_region
    _
  $region41: #{run.3} parent=0 // pred_fallthru
    _
  // Predicated region
  $region42: #{run.3} parent=0 // pred_check
    _
  $region43: #{run.3} parent=0 // pred_check_branch
    %1601 = sbr.rel (0) target = $region45
  $region44: #{run.3} parent=0 // pred_region
    _
  $region45: #{run.3} parent=0 // pred_fallthru
    _

</llo_original>
